<compile_context>
chip_gen: v7x
topology: tpu7x:2x2x1
jax: 0.10.0
libtpu: 0.0.40
codegen_flags: <defaults>
</compile_context>

<pallas_src>
import functools
import math

import jax
import jax.numpy as jnp
from jax.experimental import pallas as pl
from jax.experimental.pallas import tpu as pltpu


# ----------------------------- tiled matmul kernel --------------------------


def _pick_tile(dim, candidates):
    for c in candidates:
        if dim % c == 0:
            return c
    return dim  # full extent (always legal as a block dim)


def _mm_kernel(a_ref, b_ref, o_ref, acc_ref, *, relu):
    @pl.when(pl.program_id(2) == 0)
    def _init():
        acc_ref[...] = jnp.zeros_like(acc_ref)

    acc_ref[...] += jnp.dot(a_ref[...], b_ref[...],
                            preferred_element_type=jnp.float32)

    @pl.when(pl.program_id(2) == pl.num_programs(2) - 1)
    def _finalize():
        out = acc_ref[...]
        if relu:
            out = jnp.maximum(out, 0.0)
        o_ref[...] = out.astype(o_ref.dtype)


def pallas_matmul(a, b, relu=False):
    """(M,K) @ (K,N) -> (M,N) f32, bf16 MXU inputs, tiled + pipelined."""
    M, K = a.shape
    K2, N = b.shape
    assert K == K2
    a = a.astype(jnp.bfloat16)
    b = b.astype(jnp.bfloat16)
    tm = _pick_tile(M, (256, 128))
    tn = _pick_tile(N, (512, 256, 128))
    tk = _pick_tile(K, (512, 256, 128))
    grid = (M // tm, N // tn, K // tk)
    return pl.pallas_call(
        functools.partial(_mm_kernel, relu=relu),
        grid=grid,
        in_specs=[
            pl.BlockSpec((tm, tk), lambda i, j, k: (i, k)),
            pl.BlockSpec((tk, tn), lambda i, j, k: (k, j)),
        ],
        out_specs=pl.BlockSpec((tm, tn), lambda i, j, k: (i, j)),
        out_shape=jax.ShapeDtypeStruct((M, N), jnp.float32),
        scratch_shapes=[pltpu.VMEM((tm, tn), jnp.float32)],
        compiler_params=pltpu.CompilerParams(
            dimension_semantics=("parallel", "parallel", "arbitrary"),
            vmem_limit_bytes=32 * 1024 * 1024,
        ),
    )(a, b)


# -------------------- fused attention (all heads) + out-proj ----------------


def _attn_fused_kernel(q_ref, k_ref, v_ref, x4_ref, wo_ref,
                       fexp_ref, attn_ref, *, scale):
    # q/k/v: (heads, HW, DH) bf16; x4: (HW, C) f32; wo: (C, C) bf16.
    heads = q_ref.shape[0]
    dh = q_ref.shape[2]
    HW = q_ref.shape[1]

    attn_sum = jnp.zeros((HW, HW), jnp.float32)
    # residual + accumulated output projection: x4 + concat_h(ctx_h) @ w_o
    #   = x4 + sum_h ctx_h @ w_o[h*dh:(h+1)*dh, :]
    acc = x4_ref[...].astype(jnp.float32)

    for h in range(heads):                       # static unroll over heads
        qh = q_ref[h]                            # (HW, DH) bf16
        kh = k_ref[h]
        vh = v_ref[h]
        s = jnp.dot(qh, kh.T, preferred_element_type=jnp.float32) * scale
        s = s - jnp.max(s, axis=-1, keepdims=True)
        e = jnp.exp(s)
        p = e * pl.reciprocal(jnp.sum(e, axis=-1, keepdims=True), approx=True)
        attn_sum = attn_sum + p                  # accumulate for the head-mean
        ctx_h = jnp.dot(p.astype(jnp.bfloat16), vh,
                        preferred_element_type=jnp.float32)
        acc = acc + jnp.dot(ctx_h.astype(jnp.bfloat16),
                            wo_ref[h * dh:(h + 1) * dh, :],
                            preferred_element_type=jnp.float32)

    fexp_ref[...] = acc                          # feature_expansion (HW, C)
    attn_ref[...] = attn_sum * (1.0 / heads)     # torch.mean(attn, dim=1)


def pallas_attention_head(x4_flat, q, k, v, w_o):
    """x4: (HW,C) f32; q/k/v: (heads,HW,DH) bf16; w_o: (C,C).

    Returns (feature_expansion (HW,C) f32, attn_mean (HW,HW) f32).
    Only the head-mean attention is written to HBM (DFSM never needs per-head).
    """
    HW, C = x4_flat.shape
    dh = q.shape[2]
    scale = 1.0 / math.sqrt(dh)
    return pl.pallas_call(
        functools.partial(_attn_fused_kernel, scale=scale),
        out_shape=(
            jax.ShapeDtypeStruct((HW, C), jnp.float32),
            jax.ShapeDtypeStruct((HW, HW), jnp.float32),
        ),
    )(q, k, v, x4_flat, w_o.astype(jnp.bfloat16))


# -------------------------------- DFSM kernel --------------------------------


def _dfsm_kernel(cam_ref, attn_ref, dist_ref, o_ref):
    # cam_ref: (HW, Cpad) bf16 (class dim padded to 128 lanes).
    # attn/dist: (HW, HW) f32.
    a = attn_ref[...]
    sim = jnp.where(a >= 0.5, a, 0.0) * dist_ref[...]
    # torch: sim / (sim.sum(dim=1, keepdim=True) + 1e-5) on a (n, hw_i, hw_j)
    # tensor -> reduce over hw_i, i.e. axis=0 of the 2-D (hw_i, hw_j) view.
    denom = jnp.sum(sim, axis=0, keepdims=True) + 1e-5        # (1, HW)
    sim = sim * pl.reciprocal(denom, approx=True)
    # torch: cam(C,hw) @ sim -> here computed transposed: out = sim^T @ cam,
    # keeping the output lane-dense (HW, Cpad).
    out = jnp.dot(sim.astype(jnp.bfloat16).T, cam_ref[...],
                  preferred_element_type=jnp.float32)
    o_ref[...] = jnp.maximum(out, 0.0)                        # F.relu


def pallas_dfsm_relu(cam_pad, attn_mean, dist):
    HW, NP = cam_pad.shape
    return pl.pallas_call(
        _dfsm_kernel,
        out_shape=jax.ShapeDtypeStruct((HW, NP), jnp.float32),
    )(cam_pad.astype(jnp.bfloat16), attn_mean, dist)


# ------------------------------- glue / params -------------------------------


def spatial_weights_compute(h, w):
    # Pure function of (h, w): pairwise exp(-distance), min-max normalized.
    xx = jnp.tile(jnp.arange(w, dtype=jnp.float32)[None, :], (h, 1))
    yy = jnp.tile(jnp.arange(h, dtype=jnp.float32)[:, None], (1, w))
    coords = jnp.stack([xx, yy], axis=0).reshape(2, h * w)        # (2, hw)
    diff = coords[:, None, :] - coords[:, :, None]                # (2, hw, hw)
    dist = jnp.sqrt(jnp.sum(diff * diff, axis=0))
    dist = dist / jnp.sqrt(float((h - 1) ** 2 + (w - 1) ** 2))
    wgt = jnp.exp(-dist)
    wgt = (wgt - jnp.min(wgt)) / (jnp.max(wgt) - jnp.min(wgt) + 1e-5)
    return wgt.astype(jnp.float32)                                # (hw, hw)


def _xavier(key, shape):
    fan_in, fan_out = shape
    limit = math.sqrt(6.0 / (fan_in + fan_out))
    return jax.random.uniform(key, shape, jnp.float32, -limit, limit)


def init_params(key, num_cls, c_feat, patch_dim):
    ks = jax.random.split(key, 6)
    return {
        "w_patch": _xavier(ks[0], (patch_dim, c_feat)),     # backbone stand-in
        "w_cls": _xavier(ks[1], (c_feat, num_cls - 1)),     # classifier (1x1 conv, no bias)
        "w_q": _xavier(ks[2], (c_feat, c_feat)),
        "w_k": _xavier(ks[3], (c_feat, c_feat)),
        "w_v": _xavier(ks[4], (c_feat, c_feat)),
        "w_o": _xavier(ks[5], (c_feat, c_feat)),
    }


def cam_forward(params, x, label, *, patch=16, heads=8):
    # x: (2, 3, H, W) NCHW — batch of (image, horizontally-flipped image).
    # label only gets concatenated with a bg label in the original module and
    # never affects the returned tensors.
    del label
    N, Cin, H, W = x.shape
    h, w = H // patch, W // patch
    hw = h * w

    # --- backbone stand-in (stages 0-4): non-overlapping patch embedding ---
    # TODO(synk): ResNet-50 stages / pretrained weights (resnet50 module) are
    # external and not provided; replaced with a single patch-embedding matmul.
    patches = x.reshape(N, Cin, h, patch, w, patch)
    patches = patches.transpose(0, 2, 4, 1, 3, 5).reshape(N * hw, Cin * patch * patch)
    feats = pallas_matmul(patches, params["w_patch"], relu=True)   # (N*hw, C)
    c_feat = feats.shape[-1]
    feats = feats.reshape(N, h, w, c_feat)

    # x4 = (x4[0] + x4[1].flip(-1)).unsqueeze(0)   (flip along W)
    x4 = feats[0] + feats[1, :, ::-1, :]                           # (h, w, C)
    x4_flat = x4.reshape(hw, c_feat)

    # feature_expansion, attn = self.attention(x4)
    # TODO(synk): attention.SpatialAttention definition not provided; implemented
    # as standard multi-head spatial self-attention with residual output proj.
    dh = c_feat // heads
    w_qkv = jnp.concatenate([params["w_q"], params["w_k"], params["w_v"]], axis=1)
    qkv = pallas_matmul(x4_flat, w_qkv)                            # (hw, 3C) - one fused call
    qkv = qkv.reshape(hw, 3, heads, dh).transpose(1, 2, 0, 3).astype(jnp.bfloat16)
    q, k, v = qkv[0], qkv[1], qkv[2]                               # (heads, hw, dh)
    feature_expansion, attn_mean = pallas_attention_head(
        x4_flat, q, k, v, params["w_o"])                           # (hw, C), (hw, hw)

    spatial_weight = spatial_weights_compute(h, w)                 # (hw, hw)

    # Both classifier applications in one lane-dense matmul (class dim padded
    # to 128 lanes; the pad columns are zero and are sliced off at the end).
    ncls_m1 = params["w_cls"].shape[1]
    n_pad = max(128, ((ncls_m1 + 127) // 128) * 128)
    w_cls_pad = jnp.pad(params["w_cls"], ((0, 0), (0, n_pad - ncls_m1)))
    feats2 = jnp.concatenate([x4_flat, feature_expansion], axis=0)  # (2*hw, C)
    cam_all = pallas_matmul(feats2, w_cls_pad)                      # (2*hw, n_pad)

    # norm_cam = F.relu(classifier(x4))
    norm_cam = jnp.maximum(cam_all[:hw, :ncls_m1], 0.0)
    norm_cam = norm_cam.reshape(h, w, ncls_m1).transpose(2, 0, 1)   # (ncls-1, h, w)

    # cam_expansion = classifier(feature_expansion) ; DFSM ; F.relu
    cam_exp_pad = cam_all[hw:, :]                                   # (hw, n_pad)
    cam_exp_norm = pallas_dfsm_relu(cam_exp_pad, attn_mean, spatial_weight)
    cam_exp_norm = cam_exp_norm[:, :ncls_m1].reshape(h, w, ncls_m1).transpose(2, 0, 1)

    # (norm_cam[0], cam_expansion_norm[0]) — batch dim already squeezed.
    return norm_cam, cam_exp_norm


# ----------------------------------- main -----------------------------------


if __name__ == "__main__":
    NUM_CLS = 5
    C_FEAT = 256        # small stand-in for 2048
    HEADS = 8
    PATCH = 16
    H = W = 64          # -> h = w = 4, hw = 16

    key = jax.random.PRNGKey(0)
    kx, kp, kl = jax.random.split(key, 3)

    img = jax.random.normal(kx, (1, 3, H, W), jnp.float32)
    x = jnp.concatenate([img, img[:, :, :, ::-1]], axis=0)        # (2, 3, H, W)
    label = (jax.random.uniform(kl, (NUM_CLS - 1, 1, 1)) > 0.5).astype(jnp.float32)

    params = init_params(kp, NUM_CLS, C_FEAT, 3 * PATCH * PATCH)

    fwd = jax.jit(functools.partial(cam_forward, patch=PATCH, heads=HEADS))
    norm_cam, cam_exp_norm = fwd(params, x, label)
    jax.block_until_ready((norm_cam, cam_exp_norm))

    assert norm_cam.shape == (NUM_CLS - 1, H // PATCH, W // PATCH)
    assert cam_exp_norm.shape == (NUM_CLS - 1, H // PATCH, W // PATCH)
    assert bool(jnp.all(norm_cam >= 0)) and bool(jnp.all(cam_exp_norm >= 0))
    assert bool(jnp.all(jnp.isfinite(norm_cam))) and bool(jnp.all(jnp.isfinite(cam_exp_norm)))
    print("KERNEL_OK")
</pallas_src>

<mosaic_0001>
module attributes {stable_mosaic.version = 11 : i64} {
  func.func @_mm_kernel(%arg0: i32, %arg1: i32, %arg2: i32, %arg3: memref<32x256xbf16, #tpu.memory_space<vmem>>, %arg4: memref<256x256xbf16, #tpu.memory_space<vmem>>, %arg5: memref<32x256xf32, #tpu.memory_space<vmem>>, %arg6: memref<32x256xf32, #tpu.memory_space<vmem>>) attributes {dimension_semantics = [#tpu.dimension_semantics<parallel>, #tpu.dimension_semantics<parallel>, #tpu.dimension_semantics<arbitrary>], iteration_bounds = array<i64: 1, 1, 3>, scalar_prefetch = 0 : i64, scratch_operands = 1 : i64, tpu.core_type = #tpu.core_type<tc>, window_params = [{transform_indices = @transform_0, window_bounds = array<i64: 32, 256>}, {transform_indices = @transform_1, window_bounds = array<i64: 256, 256>}, {transform_indices = @transform_2, window_bounds = array<i64: 32, 256>}]} {
    %c0_i32 = arith.constant 0 : i32
    %0 = arith.cmpi eq, %arg2, %c0_i32 : i32
    %1 = arith.extui %0 : i1 to i32
    %c0_i32_0 = arith.constant 0 : i32
    %2 = arith.cmpi ne, %1, %c0_i32_0 : i32
    scf.if %2 {
      %cst_9 = arith.constant 0.000000e+00 : f32
      %12 = vector.broadcast %cst_9 : f32 to vector<32x256xf32>
      %c0_10 = arith.constant 0 : index
      %c0_11 = arith.constant 0 : index
      %13 = vector.load %arg6[%c0_10, %c0_11] : memref<32x256xf32, #tpu.memory_space<vmem>>, vector<32x256xf32>
      tpu.vector_store %arg6[%c0_10, %c0_11], %12 {strides = array<i32>} : memref<32x256xf32, #tpu.memory_space<vmem>>, vector<32x256xf32>,
    } else {
    }
    %c0 = arith.constant 0 : index
    %c0_1 = arith.constant 0 : index
    %3 = vector.load %arg6[%c0, %c0_1] : memref<32x256xf32, #tpu.memory_space<vmem>>, vector<32x256xf32>
    %c0_2 = arith.constant 0 : index
    %c0_3 = arith.constant 0 : index
    %4 = vector.load %arg3[%c0_2, %c0_3] : memref<32x256xbf16, #tpu.memory_space<vmem>>, vector<32x256xbf16>
    %c0_4 = arith.constant 0 : index
    %c0_5 = arith.constant 0 : index
    %5 = vector.load %arg4[%c0_4, %c0_5] : memref<256x256xbf16, #tpu.memory_space<vmem>>, vector<256x256xbf16>
    %cst = arith.constant dense<0.000000e+00> : vector<32x256xf32>
    %6 = tpu.matmul %4, %5, %cst {dimension_numbers = #tpu.dot_dimension_numbers<[1], [0], [0], [1], [0, 0, 1, 1], [], []>} : vector<32x256xbf16>, vector<256x256xbf16>, vector<32x256xf32> -> vector<32x256xf32>
    %7 = arith.addf %3, %6 : vector<32x256xf32>
    %c0_6 = arith.constant 0 : index
    %c0_7 = arith.constant 0 : index
    %8 = vector.load %arg6[%c0_6, %c0_7] : memref<32x256xf32, #tpu.memory_space<vmem>>, vector<32x256xf32>
    tpu.vector_store %arg6[%c0_6, %c0_7], %7 {strides = array<i32>} : memref<32x256xf32, #tpu.memory_space<vmem>>, vector<32x256xf32>,
    %c2_i32 = arith.constant 2 : i32
    %9 = arith.cmpi eq, %arg2, %c2_i32 : i32
    %10 = arith.extui %9 : i1 to i32
    %c0_i32_8 = arith.constant 0 : i32
    %11 = arith.cmpi ne, %10, %c0_i32_8 : i32
    scf.if %11 {
      %c0_9 = arith.constant 0 : index
      %c0_10 = arith.constant 0 : index
      %12 = vector.load %arg6[%c0_9, %c0_10] : memref<32x256xf32, #tpu.memory_space<vmem>>, vector<32x256xf32>
      %cst_11 = arith.constant 0.000000e+00 : f32
      %13 = vector.broadcast %cst_11 : f32 to vector<32x256xf32>
      %14 = arith.maximumf %12, %13 : vector<32x256xf32>
      %c0_12 = arith.constant 0 : index
      %c0_13 = arith.constant 0 : index
      %15 = vector.load %arg5[%c0_12, %c0_13] : memref<32x256xf32, #tpu.memory_space<vmem>>, vector<32x256xf32>
      tpu.vector_store %arg5[%c0_12, %c0_13], %14 {strides = array<i32>} : memref<32x256xf32, #tpu.memory_space<vmem>>, vector<32x256xf32>,
    } else {
    }
    return
  }
  func.func @transform_0(%arg0: i32, %arg1: i32, %arg2: i32) -> (i32, i32) {
    %c0_i32 = arith.constant 0 : i32
    return %arg0, %arg2 : i32, i32
  }
  func.func @transform_1(%arg0: i32, %arg1: i32, %arg2: i32) -> (i32, i32) {
    %c0_i32 = arith.constant 0 : i32
    return %arg2, %arg1 : i32, i32
  }
  func.func @transform_2(%arg0: i32, %arg1: i32, %arg2: i32) -> (i32, i32) {
    %c0_i32 = arith.constant 0 : i32
    return %arg0, %arg1 : i32, i32
  }
}

module attributes {stable_mosaic.version = 11 : i64} {
  func.func @_mm_kernel(%arg0: i32, %arg1: i32, %arg2: i32, %arg3: memref<16x256xbf16, #tpu.memory_space<vmem>>, %arg4: memref<256x256xbf16, #tpu.memory_space<vmem>>, %arg5: memref<16x256xf32, #tpu.memory_space<vmem>>, %arg6: memref<16x256xf32, #tpu.memory_space<vmem>>) attributes {dimension_semantics = [#tpu.dimension_semantics<parallel>, #tpu.dimension_semantics<parallel>, #tpu.dimension_semantics<arbitrary>], iteration_bounds = array<i64: 1, 3, 1>, scalar_prefetch = 0 : i64, scratch_operands = 1 : i64, tpu.core_type = #tpu.core_type<tc>, window_params = [{transform_indices = @transform_0, window_bounds = array<i64: 16, 256>}, {transform_indices = @transform_1, window_bounds = array<i64: 256, 256>}, {transform_indices = @transform_2, window_bounds = array<i64: 16, 256>}]} {
    %c0_i32 = arith.constant 0 : i32
    %0 = arith.cmpi eq, %arg2, %c0_i32 : i32
    %1 = arith.extui %0 : i1 to i32
    %c0_i32_0 = arith.constant 0 : i32
    %2 = arith.cmpi ne, %1, %c0_i32_0 : i32
    scf.if %2 {
      %cst_10 = arith.constant 0.000000e+00 : f32
      %12 = vector.broadcast %cst_10 : f32 to vector<16x256xf32>
      %c0_11 = arith.constant 0 : index
      %c0_12 = arith.constant 0 : index
      %13 = vector.load %arg6[%c0_11, %c0_12] : memref<16x256xf32, #tpu.memory_space<vmem>>, vector<16x256xf32>
      tpu.vector_store %arg6[%c0_11, %c0_12], %12 {strides = array<i32>} : memref<16x256xf32, #tpu.memory_space<vmem>>, vector<16x256xf32>,
    } else {
    }
    %c0 = arith.constant 0 : index
    %c0_1 = arith.constant 0 : index
    %3 = vector.load %arg6[%c0, %c0_1] : memref<16x256xf32, #tpu.memory_space<vmem>>, vector<16x256xf32>
    %c0_2 = arith.constant 0 : index
    %c0_3 = arith.constant 0 : index
    %4 = vector.load %arg3[%c0_2, %c0_3] : memref<16x256xbf16, #tpu.memory_space<vmem>>, vector<16x256xbf16>
    %c0_4 = arith.constant 0 : index
    %c0_5 = arith.constant 0 : index
    %5 = vector.load %arg4[%c0_4, %c0_5] : memref<256x256xbf16, #tpu.memory_space<vmem>>, vector<256x256xbf16>
    %cst = arith.constant dense<0.000000e+00> : vector<16x256xf32>
    %6 = tpu.matmul %4, %5, %cst {dimension_numbers = #tpu.dot_dimension_numbers<[1], [0], [0], [1], [0, 0, 1, 1], [], []>} : vector<16x256xbf16>, vector<256x256xbf16>, vector<16x256xf32> -> vector<16x256xf32>
    %7 = arith.addf %3, %6 : vector<16x256xf32>
    %c0_6 = arith.constant 0 : index
    %c0_7 = arith.constant 0 : index
    %8 = vector.load %arg6[%c0_6, %c0_7] : memref<16x256xf32, #tpu.memory_space<vmem>>, vector<16x256xf32>
    tpu.vector_store %arg6[%c0_6, %c0_7], %7 {strides = array<i32>} : memref<16x256xf32, #tpu.memory_space<vmem>>, vector<16x256xf32>,
    %c0_i32_8 = arith.constant 0 : i32
    %9 = arith.cmpi eq, %arg2, %c0_i32_8 : i32
    %10 = arith.extui %9 : i1 to i32
    %c0_i32_9 = arith.constant 0 : i32
    %11 = arith.cmpi ne, %10, %c0_i32_9 : i32
    scf.if %11 {
      %c0_10 = arith.constant 0 : index
      %c0_11 = arith.constant 0 : index
      %12 = vector.load %arg6[%c0_10, %c0_11] : memref<16x256xf32, #tpu.memory_space<vmem>>, vector<16x256xf32>
      %c0_12 = arith.constant 0 : index
      %c0_13 = arith.constant 0 : index
      %13 = vector.load %arg5[%c0_12, %c0_13] : memref<16x256xf32, #tpu.memory_space<vmem>>, vector<16x256xf32>
      tpu.vector_store %arg5[%c0_12, %c0_13], %12 {strides = array<i32>} : memref<16x256xf32, #tpu.memory_space<vmem>>, vector<16x256xf32>,
    } else {
    }
    return
  }
  func.func @transform_0(%arg0: i32, %arg1: i32, %arg2: i32) -> (i32, i32) {
    %c0_i32 = arith.constant 0 : i32
    return %arg0, %arg2 : i32, i32
  }
  func.func @transform_1(%arg0: i32, %arg1: i32, %arg2: i32) -> (i32, i32) {
    %c0_i32 = arith.constant 0 : i32
    return %arg2, %arg1 : i32, i32
  }
  func.func @transform_2(%arg0: i32, %arg1: i32, %arg2: i32) -> (i32, i32) {
    %c0_i32 = arith.constant 0 : i32
    return %arg0, %arg1 : i32, i32
  }
}

module attributes {stable_mosaic.version = 11 : i64} {
  func.func @_attn_fused_kernel(%arg0: memref<8x16x32xbf16, #tpu.memory_space<vmem>>, %arg1: memref<8x16x32xbf16, #tpu.memory_space<vmem>>, %arg2: memref<8x16x32xbf16, #tpu.memory_space<vmem>>, %arg3: memref<16x256xf32, #tpu.memory_space<vmem>>, %arg4: memref<256x256xbf16, #tpu.memory_space<vmem>>, %arg5: memref<16x256xf32, #tpu.memory_space<vmem>>, %arg6: memref<16x16xf32, #tpu.memory_space<vmem>>) attributes {dimension_semantics = [], scalar_prefetch = 0 : i64, scratch_operands = 0 : i64, tpu.core_type = #tpu.core_type<tc>} {
    %cst = arith.constant 0.000000e+00 : f32
    %0 = vector.broadcast %cst : f32 to vector<16x16xf32>
    %c0 = arith.constant 0 : index
    %c0_0 = arith.constant 0 : index
    %1 = vector.load %arg3[%c0, %c0_0] : memref<16x256xf32, #tpu.memory_space<vmem>>, vector<16x256xf32>
    %c0_1 = arith.constant 0 : index
    %c0_2 = arith.constant 0 : index
    %c0_3 = arith.constant 0 : index
    %2 = vector.load %arg0[%c0_1, %c0_2, %c0_3] : memref<8x16x32xbf16, #tpu.memory_space<vmem>>, vector<1x16x32xbf16>
    %3 = vector.shape_cast %2 : vector<1x16x32xbf16> to vector<16x32xbf16>
    %c0_4 = arith.constant 0 : index
    %c0_5 = arith.constant 0 : index
    %c0_6 = arith.constant 0 : index
    %4 = vector.load %arg1[%c0_4, %c0_5, %c0_6] : memref<8x16x32xbf16, #tpu.memory_space<vmem>>, vector<1x16x32xbf16>
    %5 = vector.shape_cast %4 : vector<1x16x32xbf16> to vector<16x32xbf16>
    %c0_7 = arith.constant 0 : index
    %c0_8 = arith.constant 0 : index
    %c0_9 = arith.constant 0 : index
    %6 = vector.load %arg2[%c0_7, %c0_8, %c0_9] : memref<8x16x32xbf16, #tpu.memory_space<vmem>>, vector<1x16x32xbf16>
    %7 = vector.shape_cast %6 : vector<1x16x32xbf16> to vector<16x32xbf16>
    %8 = tpu.transpose %5, [1, 0] : vector<16x32xbf16> -> vector<32x16xbf16>
    %cst_10 = arith.constant dense<0.000000e+00> : vector<16x16xf32>
    %9 = tpu.matmul %3, %8, %cst_10 {dimension_numbers = #tpu.dot_dimension_numbers<[1], [0], [0], [1], [0, 0, 1, 1], [], []>} : vector<16x32xbf16>, vector<32x16xbf16>, vector<16x16xf32> -> vector<16x16xf32>
    %cst_11 = arith.constant 0.176776692 : f32
    %10 = vector.broadcast %cst_11 : f32 to vector<16x16xf32>
    %11 = arith.mulf %9, %10 : vector<16x16xf32>
    %cst_12 = arith.constant dense<0xFF800000> : vector<16xf32>
    %12 = vector.multi_reduction <maximumf>, %11, %cst_12 [1] : vector<16x16xf32> to vector<16xf32>
    %13 = vector.shape_cast %12 : vector<16xf32> to vector<16x1xf32>
    %14 = vector.broadcast %13 : vector<16x1xf32> to vector<16x16xf32>
    %15 = arith.subf %11, %14 : vector<16x16xf32>
    %16 = math.exp %15 : vector<16x16xf32>
    %cst_13 = arith.constant dense<0.000000e+00> : vector<16xf32>
    %17 = vector.multi_reduction <add>, %16, %cst_13 [1] : vector<16x16xf32> to vector<16xf32>
    %18 = vector.shape_cast %17 : vector<16xf32> to vector<16x1xf32>
    %19 = tpu.reciprocal %18 {approx = true} : vector<16x1xf32> -> vector<16x1xf32>
    %20 = vector.broadcast %19 : vector<16x1xf32> to vector<16x16xf32>
    %21 = arith.mulf %16, %20 : vector<16x16xf32>
    %22 = arith.addf %0, %21 : vector<16x16xf32>
    %23 = arith.truncf %21 : vector<16x16xf32> to vector<16x16xbf16>
    %cst_14 = arith.constant dense<0.000000e+00> : vector<16x32xf32>
    %24 = tpu.matmul %23, %7, %cst_14 {dimension_numbers = #tpu.dot_dimension_numbers<[1], [0], [0], [1], [0, 0, 1, 1], [], []>} : vector<16x16xbf16>, vector<16x32xbf16>, vector<16x32xf32> -> vector<16x32xf32>
    %25 = arith.truncf %24 : vector<16x32xf32> to vector<16x32xbf16>
    %c0_15 = arith.constant 0 : index
    %c0_16 = arith.constant 0 : index
    %26 = vector.load %arg4[%c0_15, %c0_16] : memref<256x256xbf16, #tpu.memory_space<vmem>>, vector<32x256xbf16>
    %cst_17 = arith.constant dense<0.000000e+00> : vector<16x256xf32>
    %27 = tpu.matmul %25, %26, %cst_17 {dimension_numbers = #tpu.dot_dimension_numbers<[1], [0], [0], [1], [0, 0, 1, 1], [], []>} : vector<16x32xbf16>, vector<32x256xbf16>, vector<16x256xf32> -> vector<16x256xf32>
    %28 = arith.addf %1, %27 : vector<16x256xf32>
    %c1 = arith.constant 1 : index
    %c0_18 = arith.constant 0 : index
    %c0_19 = arith.constant 0 : index
    %29 = vector.load %arg0[%c1, %c0_18, %c0_19] : memref<8x16x32xbf16, #tpu.memory_space<vmem>>, vector<1x16x32xbf16>
    %30 = vector.shape_cast %29 : vector<1x16x32xbf16> to vector<16x32xbf16>
    %c1_20 = arith.constant 1 : index
    %c0_21 = arith.constant 0 : index
    %c0_22 = arith.constant 0 : index
    %31 = vector.load %arg1[%c1_20, %c0_21, %c0_22] : memref<8x16x32xbf16, #tpu.memory_space<vmem>>, vector<1x16x32xbf16>
    %32 = vector.shape_cast %31 : vector<1x16x32xbf16> to vector<16x32xbf16>
    %c1_23 = arith.constant 1 : index
    %c0_24 = arith.constant 0 : index
    %c0_25 = arith.constant 0 : index
    %33 = vector.load %arg2[%c1_23, %c0_24, %c0_25] : memref<8x16x32xbf16, #tpu.memory_space<vmem>>, vector<1x16x32xbf16>
    %34 = vector.shape_cast %33 : vector<1x16x32xbf16> to vector<16x32xbf16>
    %35 = tpu.transpose %32, [1, 0] : vector<16x32xbf16> -> vector<32x16xbf16>
    %cst_26 = arith.constant dense<0.000000e+00> : vector<16x16xf32>
    %36 = tpu.matmul %30, %35, %cst_26 {dimension_numbers = #tpu.dot_dimension_numbers<[1], [0], [0], [1], [0, 0, 1, 1], [], []>} : vector<16x32xbf16>, vector<32x16xbf16>, vector<16x16xf32> -> vector<16x16xf32>
    %cst_27 = arith.constant 0.176776692 : f32
    %37 = vector.broadcast %cst_27 : f32 to vector<16x16xf32>
    %38 = arith.mulf %36, %37 : vector<16x16xf32>
    %cst_28 = arith.constant dense<0xFF800000> : vector<16xf32>
    %39 = vector.multi_reduction <maximumf>, %38, %cst_28 [1] : vector<16x16xf32> to vector<16xf32>
    %40 = vector.shape_cast %39 : vector<16xf32> to vector<16x1xf32>
    %41 = vector.broadcast %40 : vector<16x1xf32> to vector<16x16xf32>
    %42 = arith.subf %38, %41 : vector<16x16xf32>
    %43 = math.exp %42 : vector<16x16xf32>
    %cst_29 = arith.constant dense<0.000000e+00> : vector<16xf32>
    %44 = vector.multi_reduction <add>, %43, %cst_29 [1] : vector<16x16xf32> to vector<16xf32>
    %45 = vector.shape_cast %44 : vector<16xf32> to vector<16x1xf32>
    %46 = tpu.reciprocal %45 {approx = true} : vector<16x1xf32> -> vector<16x1xf32>
    %47 = vector.broadcast %46 : vector<16x1xf32> to vector<16x16xf32>
    %48 = arith.mulf %43, %47 : vector<16x16xf32>
    %49 = arith.addf %22, %48 : vector<16x16xf32>
    %50 = arith.truncf %48 : vector<16x16xf32> to vector<16x16xbf16>
    %cst_30 = arith.constant dense<0.000000e+00> : vector<16x32xf32>
    %51 = tpu.matmul %50, %34, %cst_30 {dimension_numbers = #tpu.dot_dimension_numbers<[1], [0], [0], [1], [0, 0, 1, 1], [], []>} : vector<16x16xbf16>, vector<16x32xbf16>, vector<16x32xf32> -> vector<16x32xf32>
    %52 = arith.truncf %51 : vector<16x32xf32> to vector<16x32xbf16>
    %c32 = arith.constant 32 : index
    %c0_31 = arith.constant 0 : index
    %53 = vector.load %arg4[%c32, %c0_31] : memref<256x256xbf16, #tpu.memory_space<vmem>>, vector<32x256xbf16>
    %cst_32 = arith.constant dense<0.000000e+00> : vector<16x256xf32>
    %54 = tpu.matmul %52, %53, %cst_32 {dimension_numbers = #tpu.dot_dimension_numbers<[1], [0], [0], [1], [0, 0, 1, 1], [], []>} : vector<16x32xbf16>, vector<32x256xbf16>, vector<16x256xf32> -> vector<16x256xf32>
    %55 = arith.addf %28, %54 : vector<16x256xf32>
    %c2 = arith.constant 2 : index
    %c0_33 = arith.constant 0 : index
    %c0_34 = arith.constant 0 : index
    %56 = vector.load %arg0[%c2, %c0_33, %c0_34] : memref<8x16x32xbf16, #tpu.memory_space<vmem>>, vector<1x16x32xbf16>
    %57 = vector.shape_cast %56 : vector<1x16x32xbf16> to vector<16x32xbf16>
    %c2_35 = arith.constant 2 : index
    %c0_36 = arith.constant 0 : index
    %c0_37 = arith.constant 0 : index
    %58 = vector.load %arg1[%c2_35, %c0_36, %c0_37] : memref<8x16x32xbf16, #tpu.memory_space<vmem>>, vector<1x16x32xbf16>
    %59 = vector.shape_cast %58 : vector<1x16x32xbf16> to vector<16x32xbf16>
    %c2_38 = arith.constant 2 : index
    %c0_39 = arith.constant 0 : index
    %c0_40 = arith.constant 0 : index
    %60 = vector.load %arg2[%c2_38, %c0_39, %c0_40] : memref<8x16x32xbf16, #tpu.memory_space<vmem>>, vector<1x16x32xbf16>
    %61 = vector.shape_cast %60 : vector<1x16x32xbf16> to vector<16x32xbf16>
    %62 = tpu.transpose %59, [1, 0] : vector<16x32xbf16> -> vector<32x16xbf16>
    %cst_41 = arith.constant dense<0.000000e+00> : vector<16x16xf32>
    %63 = tpu.matmul %57, %62, %cst_41 {dimension_numbers = #tpu.dot_dimension_numbers<[1], [0], [0], [1], [0, 0, 1, 1], [], []>} : vector<16x32xbf16>, vector<32x16xbf16>, vector<16x16xf32> -> vector<16x16xf32>
    %cst_42 = arith.constant 0.176776692 : f32
    %64 = vector.broadcast %cst_42 : f32 to vector<16x16xf32>
    %65 = arith.mulf %63, %64 : vector<16x16xf32>
    %cst_43 = arith.constant dense<0xFF800000> : vector<16xf32>
    %66 = vector.multi_reduction <maximumf>, %65, %cst_43 [1] : vector<16x16xf32> to vector<16xf32>
    %67 = vector.shape_cast %66 : vector<16xf32> to vector<16x1xf32>
    %68 = vector.broadcast %67 : vector<16x1xf32> to vector<16x16xf32>
    %69 = arith.subf %65, %68 : vector<16x16xf32>
    %70 = math.exp %69 : vector<16x16xf32>
    %cst_44 = arith.constant dense<0.000000e+00> : vector<16xf32>
    %71 = vector.multi_reduction <add>, %70, %cst_44 [1] : vector<16x16xf32> to vector<16xf32>
    %72 = vector.shape_cast %71 : vector<16xf32> to vector<16x1xf32>
    %73 = tpu.reciprocal %72 {approx = true} : vector<16x1xf32> -> vector<16x1xf32>
    %74 = vector.broadcast %73 : vector<16x1xf32> to vector<16x16xf32>
    %75 = arith.mulf %70, %74 : vector<16x16xf32>
    %76 = arith.addf %49, %75 : vector<16x16xf32>
    %77 = arith.truncf %75 : vector<16x16xf32> to vector<16x16xbf16>
    %cst_45 = arith.constant dense<0.000000e+00> : vector<16x32xf32>
    %78 = tpu.matmul %77, %61, %cst_45 {dimension_numbers = #tpu.dot_dimension_numbers<[1], [0], [0], [1], [0, 0, 1, 1], [], []>} : vector<16x16xbf16>, vector<16x32xbf16>, vector<16x32xf32> -> vector<16x32xf32>
    %79 = arith.truncf %78 : vector<16x32xf32> to vector<16x32xbf16>
    %c64 = arith.constant 64 : index
    %c0_46 = arith.constant 0 : index
    %80 = vector.load %arg4[%c64, %c0_46] : memref<256x256xbf16, #tpu.memory_space<vmem>>, vector<32x256xbf16>
    %cst_47 = arith.constant dense<0.000000e+00> : vector<16x256xf32>
    %81 = tpu.matmul %79, %80, %cst_47 {dimension_numbers = #tpu.dot_dimension_numbers<[1], [0], [0], [1], [0, 0, 1, 1], [], []>} : vector<16x32xbf16>, vector<32x256xbf16>, vector<16x256xf32> -> vector<16x256xf32>
    %82 = arith.addf %55, %81 : vector<16x256xf32>
    %c3 = arith.constant 3 : index
    %c0_48 = arith.constant 0 : index
    %c0_49 = arith.constant 0 : index
    %83 = vector.load %arg0[%c3, %c0_48, %c0_49] : memref<8x16x32xbf16, #tpu.memory_space<vmem>>, vector<1x16x32xbf16>
    %84 = vector.shape_cast %83 : vector<1x16x32xbf16> to vector<16x32xbf16>
    %c3_50 = arith.constant 3 : index
    %c0_51 = arith.constant 0 : index
    %c0_52 = arith.constant 0 : index
    %85 = vector.load %arg1[%c3_50, %c0_51, %c0_52] : memref<8x16x32xbf16, #tpu.memory_space<vmem>>, vector<1x16x32xbf16>
    %86 = vector.shape_cast %85 : vector<1x16x32xbf16> to vector<16x32xbf16>
    %c3_53 = arith.constant 3 : index
    %c0_54 = arith.constant 0 : index
    %c0_55 = arith.constant 0 : index
    %87 = vector.load %arg2[%c3_53, %c0_54, %c0_55] : memref<8x16x32xbf16, #tpu.memory_space<vmem>>, vector<1x16x32xbf16>
    %88 = vector.shape_cast %87 : vector<1x16x32xbf16> to vector<16x32xbf16>
    %89 = tpu.transpose %86, [1, 0] : vector<16x32xbf16> -> vector<32x16xbf16>
    %cst_56 = arith.constant dense<0.000000e+00> : vector<16x16xf32>
    %90 = tpu.matmul %84, %89, %cst_56 {dimension_numbers = #tpu.dot_dimension_numbers<[1], [0], [0], [1], [0, 0, 1, 1], [], []>} : vector<16x32xbf16>, vector<32x16xbf16>, vector<16x16xf32> -> vector<16x16xf32>
    %cst_57 = arith.constant 0.176776692 : f32
    %91 = vector.broadcast %cst_57 : f32 to vector<16x16xf32>
    %92 = arith.mulf %90, %91 : vector<16x16xf32>
    %cst_58 = arith.constant dense<0xFF800000> : vector<16xf32>
    %93 = vector.multi_reduction <maximumf>, %92, %cst_58 [1] : vector<16x16xf32> to vector<16xf32>
    %94 = vector.shape_cast %93 : vector<16xf32> to vector<16x1xf32>
    %95 = vector.broadcast %94 : vector<16x1xf32> to vector<16x16xf32>
    %96 = arith.subf %92, %95 : vector<16x16xf32>
    %97 = math.exp %96 : vector<16x16xf32>
    %cst_59 = arith.constant dense<0.000000e+00> : vector<16xf32>
    %98 = vector.multi_reduction <add>, %97, %cst_59 [1] : vector<16x16xf32> to vector<16xf32>
    %99 = vector.shape_cast %98 : vector<16xf32> to vector<16x1xf32>
    %100 = tpu.reciprocal %99 {approx = true} : vector<16x1xf32> -> vector<16x1xf32>
    %101 = vector.broadcast %100 : vector<16x1xf32> to vector<16x16xf32>
    %102 = arith.mulf %97, %101 : vector<16x16xf32>
    %103 = arith.addf %76, %102 : vector<16x16xf32>
    %104 = arith.truncf %102 : vector<16x16xf32> to vector<16x16xbf16>
    %cst_60 = arith.constant dense<0.000000e+00> : vector<16x32xf32>
    %105 = tpu.matmul %104, %88, %cst_60 {dimension_numbers = #tpu.dot_dimension_numbers<[1], [0], [0], [1], [0, 0, 1, 1], [], []>} : vector<16x16xbf16>, vector<16x32xbf16>, vector<16x32xf32> -> vector<16x32xf32>
    %106 = arith.truncf %105 : vector<16x32xf32> to vector<16x32xbf16>
    %c96 = arith.constant 96 : index
    %c0_61 = arith.constant 0 : index
    %107 = vector.load %arg4[%c96, %c0_61] : memref<256x256xbf16, #tpu.memory_space<vmem>>, vector<32x256xbf16>
    %cst_62 = arith.constant dense<0.000000e+00> : vector<16x256xf32>
    %108 = tpu.matmul %106, %107, %cst_62 {dimension_numbers = #tpu.dot_dimension_numbers<[1], [0], [0], [1], [0, 0, 1, 1], [], []>} : vector<16x32xbf16>, vector<32x256xbf16>, vector<16x256xf32> -> vector<16x256xf32>
    %109 = arith.addf %82, %108 : vector<16x256xf32>
    %c4 = arith.constant 4 : index
    %c0_63 = arith.constant 0 : index
    %c0_64 = arith.constant 0 : index
    %110 = vector.load %arg0[%c4, %c0_63, %c0_64] : memref<8x16x32xbf16, #tpu.memory_space<vmem>>, vector<1x16x32xbf16>
    %111 = vector.shape_cast %110 : vector<1x16x32xbf16> to vector<16x32xbf16>
    %c4_65 = arith.constant 4 : index
    %c0_66 = arith.constant 0 : index
    %c0_67 = arith.constant 0 : index
    %112 = vector.load %arg1[%c4_65, %c0_66, %c0_67] : memref<8x16x32xbf16, #tpu.memory_space<vmem>>, vector<1x16x32xbf16>
    %113 = vector.shape_cast %112 : vector<1x16x32xbf16> to vector<16x32xbf16>
    %c4_68 = arith.constant 4 : index
    %c0_69 = arith.constant 0 : index
    %c0_70 = arith.constant 0 : index
    %114 = vector.load %arg2[%c4_68, %c0_69, %c0_70] : memref<8x16x32xbf16, #tpu.memory_space<vmem>>, vector<1x16x32xbf16>
    %115 = vector.shape_cast %114 : vector<1x16x32xbf16> to vector<16x32xbf16>
    %116 = tpu.transpose %113, [1, 0] : vector<16x32xbf16> -> vector<32x16xbf16>
    %cst_71 = arith.constant dense<0.000000e+00> : vector<16x16xf32>
    %117 = tpu.matmul %111, %116, %cst_71 {dimension_numbers = #tpu.dot_dimension_numbers<[1], [0], [0], [1], [0, 0, 1, 1], [], []>} : vector<16x32xbf16>, vector<32x16xbf16>, vector<16x16xf32> -> vector<16x16xf32>
    %cst_72 = arith.constant 0.176776692 : f32
    %118 = vector.broadcast %cst_72 : f32 to vector<16x16xf32>
    %119 = arith.mulf %117, %118 : vector<16x16xf32>
    %cst_73 = arith.constant dense<0xFF800000> : vector<16xf32>
    %120 = vector.multi_reduction <maximumf>, %119, %cst_73 [1] : vector<16x16xf32> to vector<16xf32>
    %121 = vector.shape_cast %120 : vector<16xf32> to vector<16x1xf32>
    %122 = vector.broadcast %121 : vector<16x1xf32> to vector<16x16xf32>
    %123 = arith.subf %119, %122 : vector<16x16xf32>
    %124 = math.exp %123 : vector<16x16xf32>
    %cst_74 = arith.constant dense<0.000000e+00> : vector<16xf32>
    %125 = vector.multi_reduction <add>, %124, %cst_74 [1] : vector<16x16xf32> to vector<16xf32>
    %126 = vector.shape_cast %125 : vector<16xf32> to vector<16x1xf32>
    %127 = tpu.reciprocal %126 {approx = true} : vector<16x1xf32> -> vector<16x1xf32>
    %128 = vector.broadcast %127 : vector<16x1xf32> to vector<16x16xf32>
    %129 = arith.mulf %124, %128 : vector<16x16xf32>
    %130 = arith.addf %103, %129 : vector<16x16xf32>
    %131 = arith.truncf %129 : vector<16x16xf32> to vector<16x16xbf16>
    %cst_75 = arith.constant dense<0.000000e+00> : vector<16x32xf32>
    %132 = tpu.matmul %131, %115, %cst_75 {dimension_numbers = #tpu.dot_dimension_numbers<[1], [0], [0], [1], [0, 0, 1, 1], [], []>} : vector<16x16xbf16>, vector<16x32xbf16>, vector<16x32xf32> -> vector<16x32xf32>
    %133 = arith.truncf %132 : vector<16x32xf32> to vector<16x32xbf16>
    %c128 = arith.constant 128 : index
    %c0_76 = arith.constant 0 : index
    %134 = vector.load %arg4[%c128, %c0_76] : memref<256x256xbf16, #tpu.memory_space<vmem>>, vector<32x256xbf16>
    %cst_77 = arith.constant dense<0.000000e+00> : vector<16x256xf32>
    %135 = tpu.matmul %133, %134, %cst_77 {dimension_numbers = #tpu.dot_dimension_numbers<[1], [0], [0], [1], [0, 0, 1, 1], [], []>} : vector<16x32xbf16>, vector<32x256xbf16>, vector<16x256xf32> -> vector<16x256xf32>
    %136 = arith.addf %109, %135 : vector<16x256xf32>
    %c5 = arith.constant 5 : index
    %c0_78 = arith.constant 0 : index
    %c0_79 = arith.constant 0 : index
    %137 = vector.load %arg0[%c5, %c0_78, %c0_79] : memref<8x16x32xbf16, #tpu.memory_space<vmem>>, vector<1x16x32xbf16>
    %138 = vector.shape_cast %137 : vector<1x16x32xbf16> to vector<16x32xbf16>
    %c5_80 = arith.constant 5 : index
    %c0_81 = arith.constant 0 : index
    %c0_82 = arith.constant 0 : index
    %139 = vector.load %arg1[%c5_80, %c0_81, %c0_82] : memref<8x16x32xbf16, #tpu.memory_space<vmem>>, vector<1x16x32xbf16>
    %140 = vector.shape_cast %139 : vector<1x16x32xbf16> to vector<16x32xbf16>
    %c5_83 = arith.constant 5 : index
    %c0_84 = arith.constant 0 : index
    %c0_85 = arith.constant 0 : index
    %141 = vector.load %arg2[%c5_83, %c0_84, %c0_85] : memref<8x16x32xbf16, #tpu.memory_space<vmem>>, vector<1x16x32xbf16>
    %142 = vector.shape_cast %141 : vector<1x16x32xbf16> to vector<16x32xbf16>
    %143 = tpu.transpose %140, [1, 0] : vector<16x32xbf16> -> vector<32x16xbf16>
    %cst_86 = arith.constant dense<0.000000e+00> : vector<16x16xf32>
    %144 = tpu.matmul %138, %143, %cst_86 {dimension_numbers = #tpu.dot_dimension_numbers<[1], [0], [0], [1], [0, 0, 1, 1], [], []>} : vector<16x32xbf16>, vector<32x16xbf16>, vector<16x16xf32> -> vector<16x16xf32>
    %cst_87 = arith.constant 0.176776692 : f32
    %145 = vector.broadcast %cst_87 : f32 to vector<16x16xf32>
    %146 = arith.mulf %144, %145 : vector<16x16xf32>
    %cst_88 = arith.constant dense<0xFF800000> : vector<16xf32>
    %147 = vector.multi_reduction <maximumf>, %146, %cst_88 [1] : vector<16x16xf32> to vector<16xf32>
    %148 = vector.shape_cast %147 : vector<16xf32> to vector<16x1xf32>
    %149 = vector.broadcast %148 : vector<16x1xf32> to vector<16x16xf32>
    %150 = arith.subf %146, %149 : vector<16x16xf32>
    %151 = math.exp %150 : vector<16x16xf32>
    %cst_89 = arith.constant dense<0.000000e+00> : vector<16xf32>
    %152 = vector.multi_reduction <add>, %151, %cst_89 [1] : vector<16x16xf32> to vector<16xf32>
    %153 = vector.shape_cast %152 : vector<16xf32> to vector<16x1xf32>
    %154 = tpu.reciprocal %153 {approx = true} : vector<16x1xf32> -> vector<16x1xf32>
    %155 = vector.broadcast %154 : vector<16x1xf32> to vector<16x16xf32>
    %156 = arith.mulf %151, %155 : vector<16x16xf32>
    %157 = arith.addf %130, %156 : vector<16x16xf32>
    %158 = arith.truncf %156 : vector<16x16xf32> to vector<16x16xbf16>
    %cst_90 = arith.constant dense<0.000000e+00> : vector<16x32xf32>
    %159 = tpu.matmul %158, %142, %cst_90 {dimension_numbers = #tpu.dot_dimension_numbers<[1], [0], [0], [1], [0, 0, 1, 1], [], []>} : vector<16x16xbf16>, vector<16x32xbf16>, vector<16x32xf32> -> vector<16x32xf32>
    %160 = arith.truncf %159 : vector<16x32xf32> to vector<16x32xbf16>
    %c160 = arith.constant 160 : index
    %c0_91 = arith.constant 0 : index
    %161 = vector.load %arg4[%c160, %c0_91] : memref<256x256xbf16, #tpu.memory_space<vmem>>, vector<32x256xbf16>
    %cst_92 = arith.constant dense<0.000000e+00> : vector<16x256xf32>
    %162 = tpu.matmul %160, %161, %cst_92 {dimension_numbers = #tpu.dot_dimension_numbers<[1], [0], [0], [1], [0, 0, 1, 1], [], []>} : vector<16x32xbf16>, vector<32x256xbf16>, vector<16x256xf32> -> vector<16x256xf32>
    %163 = arith.addf %136, %162 : vector<16x256xf32>
    %c6 = arith.constant 6 : index
    %c0_93 = arith.constant 0 : index
    %c0_94 = arith.constant 0 : index
    %164 = vector.load %arg0[%c6, %c0_93, %c0_94] : memref<8x16x32xbf16, #tpu.memory_space<vmem>>, vector<1x16x32xbf16>
    %165 = vector.shape_cast %164 : vector<1x16x32xbf16> to vector<16x32xbf16>
    %c6_95 = arith.constant 6 : index
    %c0_96 = arith.constant 0 : index
    %c0_97 = arith.constant 0 : index
    %166 = vector.load %arg1[%c6_95, %c0_96, %c0_97] : memref<8x16x32xbf16, #tpu.memory_space<vmem>>, vector<1x16x32xbf16>
    %167 = vector.shape_cast %166 : vector<1x16x32xbf16> to vector<16x32xbf16>
    %c6_98 = arith.constant 6 : index
    %c0_99 = arith.constant 0 : index
    %c0_100 = arith.constant 0 : index
    %168 = vector.load %arg2[%c6_98, %c0_99, %c0_100] : memref<8x16x32xbf16, #tpu.memory_space<vmem>>, vector<1x16x32xbf16>
    %169 = vector.shape_cast %168 : vector<1x16x32xbf16> to vector<16x32xbf16>
    %170 = tpu.transpose %167, [1, 0] : vector<16x32xbf16> -> vector<32x16xbf16>
    %cst_101 = arith.constant dense<0.000000e+00> : vector<16x16xf32>
    %171 = tpu.matmul %165, %170, %cst_101 {dimension_numbers = #tpu.dot_dimension_numbers<[1], [0], [0], [1], [0, 0, 1, 1], [], []>} : vector<16x32xbf16>, vector<32x16xbf16>, vector<16x16xf32> -> vector<16x16xf32>
    %cst_102 = arith.constant 0.176776692 : f32
    %172 = vector.broadcast %cst_102 : f32 to vector<16x16xf32>
    %173 = arith.mulf %171, %172 : vector<16x16xf32>
    %cst_103 = arith.constant dense<0xFF800000> : vector<16xf32>
    %174 = vector.multi_reduction <maximumf>, %173, %cst_103 [1] : vector<16x16xf32> to vector<16xf32>
    %175 = vector.shape_cast %174 : vector<16xf32> to vector<16x1xf32>
    %176 = vector.broadcast %175 : vector<16x1xf32> to vector<16x16xf32>
    %177 = arith.subf %173, %176 : vector<16x16xf32>
    %178 = math.exp %177 : vector<16x16xf32>
    %cst_104 = arith.constant dense<0.000000e+00> : vector<16xf32>
    %179 = vector.multi_reduction <add>, %178, %cst_104 [1] : vector<16x16xf32> to vector<16xf32>
    %180 = vector.shape_cast %179 : vector<16xf32> to vector<16x1xf32>
    %181 = tpu.reciprocal %180 {approx = true} : vector<16x1xf32> -> vector<16x1xf32>
    %182 = vector.broadcast %181 : vector<16x1xf32> to vector<16x16xf32>
    %183 = arith.mulf %178, %182 : vector<16x16xf32>
    %184 = arith.addf %157, %183 : vector<16x16xf32>
    %185 = arith.truncf %183 : vector<16x16xf32> to vector<16x16xbf16>
    %cst_105 = arith.constant dense<0.000000e+00> : vector<16x32xf32>
    %186 = tpu.matmul %185, %169, %cst_105 {dimension_numbers = #tpu.dot_dimension_numbers<[1], [0], [0], [1], [0, 0, 1, 1], [], []>} : vector<16x16xbf16>, vector<16x32xbf16>, vector<16x32xf32> -> vector<16x32xf32>
    %187 = arith.truncf %186 : vector<16x32xf32> to vector<16x32xbf16>
    %c192 = arith.constant 192 : index
    %c0_106 = arith.constant 0 : index
    %188 = vector.load %arg4[%c192, %c0_106] : memref<256x256xbf16, #tpu.memory_space<vmem>>, vector<32x256xbf16>
    %cst_107 = arith.constant dense<0.000000e+00> : vector<16x256xf32>
    %189 = tpu.matmul %187, %188, %cst_107 {dimension_numbers = #tpu.dot_dimension_numbers<[1], [0], [0], [1], [0, 0, 1, 1], [], []>} : vector<16x32xbf16>, vector<32x256xbf16>, vector<16x256xf32> -> vector<16x256xf32>
    %190 = arith.addf %163, %189 : vector<16x256xf32>
    %c7 = arith.constant 7 : index
    %c0_108 = arith.constant 0 : index
    %c0_109 = arith.constant 0 : index
    %191 = vector.load %arg0[%c7, %c0_108, %c0_109] : memref<8x16x32xbf16, #tpu.memory_space<vmem>>, vector<1x16x32xbf16>
    %192 = vector.shape_cast %191 : vector<1x16x32xbf16> to vector<16x32xbf16>
    %c7_110 = arith.constant 7 : index
    %c0_111 = arith.constant 0 : index
    %c0_112 = arith.constant 0 : index
    %193 = vector.load %arg1[%c7_110, %c0_111, %c0_112] : memref<8x16x32xbf16, #tpu.memory_space<vmem>>, vector<1x16x32xbf16>
    %194 = vector.shape_cast %193 : vector<1x16x32xbf16> to vector<16x32xbf16>
    %c7_113 = arith.constant 7 : index
    %c0_114 = arith.constant 0 : index
    %c0_115 = arith.constant 0 : index
    %195 = vector.load %arg2[%c7_113, %c0_114, %c0_115] : memref<8x16x32xbf16, #tpu.memory_space<vmem>>, vector<1x16x32xbf16>
    %196 = vector.shape_cast %195 : vector<1x16x32xbf16> to vector<16x32xbf16>
    %197 = tpu.transpose %194, [1, 0] : vector<16x32xbf16> -> vector<32x16xbf16>
    %cst_116 = arith.constant dense<0.000000e+00> : vector<16x16xf32>
    %198 = tpu.matmul %192, %197, %cst_116 {dimension_numbers = #tpu.dot_dimension_numbers<[1], [0], [0], [1], [0, 0, 1, 1], [], []>} : vector<16x32xbf16>, vector<32x16xbf16>, vector<16x16xf32> -> vector<16x16xf32>
    %cst_117 = arith.constant 0.176776692 : f32
    %199 = vector.broadcast %cst_117 : f32 to vector<16x16xf32>
    %200 = arith.mulf %198, %199 : vector<16x16xf32>
    %cst_118 = arith.constant dense<0xFF800000> : vector<16xf32>
    %201 = vector.multi_reduction <maximumf>, %200, %cst_118 [1] : vector<16x16xf32> to vector<16xf32>
    %202 = vector.shape_cast %201 : vector<16xf32> to vector<16x1xf32>
    %203 = vector.broadcast %202 : vector<16x1xf32> to vector<16x16xf32>
    %204 = arith.subf %200, %203 : vector<16x16xf32>
    %205 = math.exp %204 : vector<16x16xf32>
    %cst_119 = arith.constant dense<0.000000e+00> : vector<16xf32>
    %206 = vector.multi_reduction <add>, %205, %cst_119 [1] : vector<16x16xf32> to vector<16xf32>
    %207 = vector.shape_cast %206 : vector<16xf32> to vector<16x1xf32>
    %208 = tpu.reciprocal %207 {approx = true} : vector<16x1xf32> -> vector<16x1xf32>
    %209 = vector.broadcast %208 : vector<16x1xf32> to vector<16x16xf32>
    %210 = arith.mulf %205, %209 : vector<16x16xf32>
    %211 = arith.addf %184, %210 : vector<16x16xf32>
    %212 = arith.truncf %210 : vector<16x16xf32> to vector<16x16xbf16>
    %cst_120 = arith.constant dense<0.000000e+00> : vector<16x32xf32>
    %213 = tpu.matmul %212, %196, %cst_120 {dimension_numbers = #tpu.dot_dimension_numbers<[1], [0], [0], [1], [0, 0, 1, 1], [], []>} : vector<16x16xbf16>, vector<16x32xbf16>, vector<16x32xf32> -> vector<16x32xf32>
    %214 = arith.truncf %213 : vector<16x32xf32> to vector<16x32xbf16>
    %c224 = arith.constant 224 : index
    %c0_121 = arith.constant 0 : index
    %215 = vector.load %arg4[%c224, %c0_121] : memref<256x256xbf16, #tpu.memory_space<vmem>>, vector<32x256xbf16>
    %cst_122 = arith.constant dense<0.000000e+00> : vector<16x256xf32>
    %216 = tpu.matmul %214, %215, %cst_122 {dimension_numbers = #tpu.dot_dimension_numbers<[1], [0], [0], [1], [0, 0, 1, 1], [], []>} : vector<16x32xbf16>, vector<32x256xbf16>, vector<16x256xf32> -> vector<16x256xf32>
    %217 = arith.addf %190, %216 : vector<16x256xf32>
    %c0_123 = arith.constant 0 : index
    %c0_124 = arith.constant 0 : index
    %218 = vector.load %arg5[%c0_123, %c0_124] : memref<16x256xf32, #tpu.memory_space<vmem>>, vector<16x256xf32>
    tpu.vector_store %arg5[%c0_123, %c0_124], %217 {strides = array<i32>} : memref<16x256xf32, #tpu.memory_space<vmem>>, vector<16x256xf32>,
    %cst_125 = arith.constant 1.250000e-01 : f32
    %219 = vector.broadcast %cst_125 : f32 to vector<16x16xf32>
    %220 = arith.mulf %211, %219 : vector<16x16xf32>
    %c0_126 = arith.constant 0 : index
    %c0_127 = arith.constant 0 : index
    %221 = vector.load %arg6[%c0_126, %c0_127] : memref<16x16xf32, #tpu.memory_space<vmem>>, vector<16x16xf32>
    tpu.vector_store %arg6[%c0_126, %c0_127], %220 {strides = array<i32>} : memref<16x16xf32, #tpu.memory_space<vmem>>, vector<16x16xf32>,
    return
  }
}

module attributes {stable_mosaic.version = 11 : i64} {
  func.func @_mm_kernel(%arg0: i32, %arg1: i32, %arg2: i32, %arg3: memref<32x256xbf16, #tpu.memory_space<vmem>>, %arg4: memref<256x128xbf16, #tpu.memory_space<vmem>>, %arg5: memref<32x128xf32, #tpu.memory_space<vmem>>, %arg6: memref<32x128xf32, #tpu.memory_space<vmem>>) attributes {dimension_semantics = [#tpu.dimension_semantics<parallel>, #tpu.dimension_semantics<parallel>, #tpu.dimension_semantics<arbitrary>], iteration_bounds = array<i64: 1, 1, 1>, scalar_prefetch = 0 : i64, scratch_operands = 1 : i64, tpu.core_type = #tpu.core_type<tc>, window_params = [{transform_indices = @transform_0, window_bounds = array<i64: 32, 256>}, {transform_indices = @transform_1, window_bounds = array<i64: 256, 128>}, {transform_indices = @transform_2, window_bounds = array<i64: 32, 128>}]} {
    %c0_i32 = arith.constant 0 : i32
    %0 = arith.cmpi eq, %arg2, %c0_i32 : i32
    %1 = arith.extui %0 : i1 to i32
    %c0_i32_0 = arith.constant 0 : i32
    %2 = arith.cmpi ne, %1, %c0_i32_0 : i32
    scf.if %2 {
      %cst_10 = arith.constant 0.000000e+00 : f32
      %12 = vector.broadcast %cst_10 : f32 to vector<32x128xf32>
      %c0_11 = arith.constant 0 : index
      %c0_12 = arith.constant 0 : index
      %13 = vector.load %arg6[%c0_11, %c0_12] : memref<32x128xf32, #tpu.memory_space<vmem>>, vector<32x128xf32>
      tpu.vector_store %arg6[%c0_11, %c0_12], %12 {strides = array<i32>} : memref<32x128xf32, #tpu.memory_space<vmem>>, vector<32x128xf32>,
    } else {
    }
    %c0 = arith.constant 0 : index
    %c0_1 = arith.constant 0 : index
    %3 = vector.load %arg6[%c0, %c0_1] : memref<32x128xf32, #tpu.memory_space<vmem>>, vector<32x128xf32>
    %c0_2 = arith.constant 0 : index
    %c0_3 = arith.constant 0 : index
    %4 = vector.load %arg3[%c0_2, %c0_3] : memref<32x256xbf16, #tpu.memory_space<vmem>>, vector<32x256xbf16>
    %c0_4 = arith.constant 0 : index
    %c0_5 = arith.constant 0 : index
    %5 = vector.load %arg4[%c0_4, %c0_5] : memref<256x128xbf16, #tpu.memory_space<vmem>>, vector<256x128xbf16>
    %cst = arith.constant dense<0.000000e+00> : vector<32x128xf32>
    %6 = tpu.matmul %4, %5, %cst {dimension_numbers = #tpu.dot_dimension_numbers<[1], [0], [0], [1], [0, 0, 1, 1], [], []>} : vector<32x256xbf16>, vector<256x128xbf16>, vector<32x128xf32> -> vector<32x128xf32>
    %7 = arith.addf %3, %6 : vector<32x128xf32>
    %c0_6 = arith.constant 0 : index
    %c0_7 = arith.constant 0 : index
    %8 = vector.load %arg6[%c0_6, %c0_7] : memref<32x128xf32, #tpu.memory_space<vmem>>, vector<32x128xf32>
    tpu.vector_store %arg6[%c0_6, %c0_7], %7 {strides = array<i32>} : memref<32x128xf32, #tpu.memory_space<vmem>>, vector<32x128xf32>,
    %c0_i32_8 = arith.constant 0 : i32
    %9 = arith.cmpi eq, %arg2, %c0_i32_8 : i32
    %10 = arith.extui %9 : i1 to i32
    %c0_i32_9 = arith.constant 0 : i32
    %11 = arith.cmpi ne, %10, %c0_i32_9 : i32
    scf.if %11 {
      %c0_10 = arith.constant 0 : index
      %c0_11 = arith.constant 0 : index
      %12 = vector.load %arg6[%c0_10, %c0_11] : memref<32x128xf32, #tpu.memory_space<vmem>>, vector<32x128xf32>
      %c0_12 = arith.constant 0 : index
      %c0_13 = arith.constant 0 : index
      %13 = vector.load %arg5[%c0_12, %c0_13] : memref<32x128xf32, #tpu.memory_space<vmem>>, vector<32x128xf32>
      tpu.vector_store %arg5[%c0_12, %c0_13], %12 {strides = array<i32>} : memref<32x128xf32, #tpu.memory_space<vmem>>, vector<32x128xf32>,
    } else {
    }
    return
  }
  func.func @transform_0(%arg0: i32, %arg1: i32, %arg2: i32) -> (i32, i32) {
    %c0_i32 = arith.constant 0 : i32
    return %arg0, %arg2 : i32, i32
  }
  func.func @transform_1(%arg0: i32, %arg1: i32, %arg2: i32) -> (i32, i32) {
    %c0_i32 = arith.constant 0 : i32
    return %arg2, %arg1 : i32, i32
  }
  func.func @transform_2(%arg0: i32, %arg1: i32, %arg2: i32) -> (i32, i32) {
    %c0_i32 = arith.constant 0 : i32
    return %arg0, %arg1 : i32, i32
  }
}

module attributes {stable_mosaic.version = 11 : i64} {
  func.func @_dfsm_kernel(%arg0: memref<16x128xbf16, #tpu.memory_space<vmem>>, %arg1: memref<16x16xf32, #tpu.memory_space<vmem>>, %arg2: memref<16x16xf32, #tpu.memory_space<vmem>>, %arg3: memref<16x128xf32, #tpu.memory_space<vmem>>) attributes {dimension_semantics = [], scalar_prefetch = 0 : i64, scratch_operands = 0 : i64, tpu.core_type = #tpu.core_type<tc>} {
    %c0 = arith.constant 0 : index
    %c0_0 = arith.constant 0 : index
    %0 = vector.load %arg1[%c0, %c0_0] : memref<16x16xf32, #tpu.memory_space<vmem>>, vector<16x16xf32>
    %cst = arith.constant 5.000000e-01 : f32
    %1 = vector.broadcast %cst : f32 to vector<16x16xf32>
    %2 = arith.cmpf oge, %0, %1 : vector<16x16xf32>
    %cst_1 = arith.constant 0.000000e+00 : f32
    %3 = vector.broadcast %cst_1 : f32 to vector<16x16xf32>
    %4 = arith.select %2, %0, %3 : vector<16x16xi1>, vector<16x16xf32>
    %c0_2 = arith.constant 0 : index
    %c0_3 = arith.constant 0 : index
    %5 = vector.load %arg2[%c0_2, %c0_3] : memref<16x16xf32, #tpu.memory_space<vmem>>, vector<16x16xf32>
    %6 = arith.mulf %4, %5 : vector<16x16xf32>
    %cst_4 = arith.constant dense<0.000000e+00> : vector<16xf32>
    %7 = vector.multi_reduction <add>, %6, %cst_4 [0] : vector<16x16xf32> to vector<16xf32>
    %8 = vector.shape_cast %7 : vector<16xf32> to vector<1x16xf32>
    %cst_5 = arith.constant 9.99999974E-6 : f32
    %9 = vector.broadcast %cst_5 : f32 to vector<1x16xf32>
    %10 = arith.addf %8, %9 : vector<1x16xf32>
    %11 = tpu.reciprocal %10 {approx = true} : vector<1x16xf32> -> vector<1x16xf32>
    %12 = vector.broadcast %11 : vector<1x16xf32> to vector<16x16xf32>
    %13 = arith.mulf %6, %12 : vector<16x16xf32>
    %14 = arith.truncf %13 : vector<16x16xf32> to vector<16x16xbf16>
    %15 = tpu.transpose %14, [1, 0] : vector<16x16xbf16> -> vector<16x16xbf16>
    %c0_6 = arith.constant 0 : index
    %c0_7 = arith.constant 0 : index
    %16 = vector.load %arg0[%c0_6, %c0_7] : memref<16x128xbf16, #tpu.memory_space<vmem>>, vector<16x128xbf16>
    %cst_8 = arith.constant dense<0.000000e+00> : vector<16x128xf32>
    %17 = tpu.matmul %15, %16, %cst_8 {dimension_numbers = #tpu.dot_dimension_numbers<[1], [0], [0], [1], [0, 0, 1, 1], [], []>} : vector<16x16xbf16>, vector<16x128xbf16>, vector<16x128xf32> -> vector<16x128xf32>
    %cst_9 = arith.constant 0.000000e+00 : f32
    %18 = vector.broadcast %cst_9 : f32 to vector<16x128xf32>
    %19 = arith.maximumf %17, %18 : vector<16x128xf32>
    %c0_10 = arith.constant 0 : index
    %c0_11 = arith.constant 0 : index
    %20 = vector.load %arg3[%c0_10, %c0_11] : memref<16x128xf32, #tpu.memory_space<vmem>>, vector<16x128xf32>
    tpu.vector_store %arg3[%c0_10, %c0_11], %19 {strides = array<i32>} : memref<16x128xf32, #tpu.memory_space<vmem>>, vector<16x128xf32>,
    return
  }
}

</mosaic_0001>

<llo_original>
// kernel: cam_forward.5
$region0: #{cam_forward.5}
  #allocation0 [shape = 'u32[]', space=smem, size = 0x4, offset = 0x4, fixed_abs, tag = 'smem constant byte address 0x4 - core index']
  #allocation1 [shape = 'u32[144,128]{1,0:T(1,128)}', space=vmem, size = 0x12000, scoped, tag = 'internal scratch']
  #allocation2 [shape = 'f32[32,256]{1,0:T(8,128)}', space=vmem, size = 0x8000, scoped, tag = 'scratch operand']
  %s0 = inlined_call_operand.vmem [shape: bf16[32,768], index: 0, kind: input, shape index: {}]
  %s1 = inlined_call_operand.vmem [shape: bf16[768,256], index: 1, kind: input, shape index: {}]
  %s2 = inlined_call_operand.vmem [shape: f32[32,256], index: 2, kind: output, shape index: {}]
  %s3 = sld [smem:[#allocation0]]
  $region87: #{cam_forward.5} parent=0
    _
  %s5 = ssub.s32 1, %s3
  %s6 = scalar_select 0, %s5, %s3
  $region1: #{cam_forward.5} parent=0
    #allocation3 [shape = 'u8[32768]{0}', space=vmem, size = 0x8000, scoped, tag = 'input window, operand 0']
    loop: start=0, step=1, limit=5
    $region2: #{cam_forward.5} parent=1 // loop_pre_header
      _
    $region3: #{cam_forward.5} parent=1 // loop_header
      %s8 = sphi 0, %s12
      %p9 = scmp.ge.s32.totalorder %s8, 5
      %s15 = sphi 0, %s34
      %s16 = sphi 0, %s30
      %s17 = sphi 0, %s26
      %s18 = sphi 0, %s15
      %s19 = sphi 0, %s16
      %s20 = sphi 0, %s17
      %s21 = sphi 0, %s18
      %s22 = sphi 0, %s19
      %s23 = sphi 0, %s20
      %s39 = sphi 0, %s41
      %s42 = sphi 0, %s39
      %s43 = sphi 0, %s42
      %s59 = sphi 0, %s43
      %s67 = sphi 0, %s69
      %s70 = sphi 0, %s67
      %s71 = sphi 0, %s70
      %s87 = sphi 0, %s71
      %s95 = sphi 0, %s97
      %s98 = sphi 0, %s95
      %s99 = sphi 0, %s98
      %s115 = sphi 0, %s99
    $region4: #{cam_forward.5} parent=1 // loop_header_branch
      %11 = sbr.rel (%p9) target = $region8
    $region5: #{cam_forward.5} parent=1 // loop_body
      %s13 = ssub.s32 %s8, 1
      %s14 = ssub.s32 %s8, 2
      %s24 = sadd.s32 1, %s17
      %p25 = scmp.ge.s32.totalorder %s24, 3
      %s26 = scalar_select %p25, 0, %s24
      %s27 = sadd.s32 1, %s16
      %s28 = scalar_select %p25, %s27, %s16
      %p29 = scmp.ge.s32.totalorder %s28, 1
      %s30 = scalar_select %p29, 0, %s28
      %s31 = sadd.s32 1, %s15
      %s32 = scalar_select %p29, %s31, %s15
      %p33 = scmp.ge.s32.totalorder %s32, 1
      %s34 = scalar_select %p33, 0, %s32
      %s35 = ssub.s32 %s15, %s34
      %s36 = ssub.s32 %s17, %s26
      %s37 = sor.u32 %s35, %s36
      %p38 = scmp.eq.s32.totalorder %s37, 0
      %s40 = sadd.s32 %s39, 1
      %s41 = scalar_select %p38, %s39, %s40
      %p44 = pneg %p38
      %p45 = scmp.eq.s32.totalorder %s8, 2
      %p46 = por %p44, %p45
      %p47 = scmp.ne.s32.totalorder %s39, %s42
      %p48 = scmp.eq.s32.totalorder %s8, 0
      %p49 = por %p47, %p48
      %p50 = scmp.ne.s32.totalorder %s39, %s42
      %p51 = scmp.eq.s32.totalorder %s13, 2
      %p52 = por %p50, %p51
      %p53 = scmp.ne.s32.totalorder %s42, %s43
      %p54 = scmp.eq.s32.totalorder %s13, 0
      %p55 = por %p53, %p54
      %p56 = scmp.ne.s32.totalorder %s42, %s43
      %p57 = scmp.eq.s32.totalorder %s14, 2
      %p58 = por %p56, %p57
      %p60 = scmp.ne.s32.totalorder %s43, %s59
      %p61 = scmp.eq.s32.totalorder %s14, 0
      %p62 = por %p60, %p61
      %s63 = ssub.s32 %s17, %s26
      %s64 = ssub.s32 %s16, %s30
      %s65 = sor.u32 %s63, %s64
      %p66 = scmp.eq.s32.totalorder %s65, 0
      %s68 = sadd.s32 %s67, 1
      %s69 = scalar_select %p66, %s67, %s68
      %p72 = pneg %p66
      %p73 = scmp.eq.s32.totalorder %s8, 2
      %p74 = por %p72, %p73
      %p75 = scmp.ne.s32.totalorder %s67, %s70
      %p76 = scmp.eq.s32.totalorder %s8, 0
      %p77 = por %p75, %p76
      %p78 = scmp.ne.s32.totalorder %s67, %s70
      %p79 = scmp.eq.s32.totalorder %s13, 2
      %p80 = por %p78, %p79
      %p81 = scmp.ne.s32.totalorder %s70, %s71
      %p82 = scmp.eq.s32.totalorder %s13, 0
      %p83 = por %p81, %p82
      %p84 = scmp.ne.s32.totalorder %s70, %s71
      %p85 = scmp.eq.s32.totalorder %s14, 2
      %p86 = por %p84, %p85
      %p88 = scmp.ne.s32.totalorder %s71, %s87
      %p89 = scmp.eq.s32.totalorder %s14, 0
      %p90 = por %p88, %p89
      %s91 = ssub.s32 %s15, %s34
      %s92 = ssub.s32 %s16, %s30
      %s93 = sor.u32 %s91, %s92
      %p94 = scmp.eq.s32.totalorder %s93, 0
      %s96 = sadd.s32 %s95, 1
      %s97 = scalar_select %p94, %s95, %s96
      %p100 = pneg %p94
      %p101 = scmp.eq.s32.totalorder %s8, 2
      %p102 = por %p100, %p101
      %p103 = scmp.ne.s32.totalorder %s95, %s98
      %p104 = scmp.eq.s32.totalorder %s8, 0
      %p105 = por %p103, %p104
      %p106 = scmp.ne.s32.totalorder %s95, %s98
      %p107 = scmp.eq.s32.totalorder %s13, 2
      %p108 = por %p106, %p107
      %p109 = scmp.ne.s32.totalorder %s98, %s99
      %p110 = scmp.eq.s32.totalorder %s13, 0
      %p111 = por %p109, %p110
      %p112 = scmp.ne.s32.totalorder %s98, %s99
      %p113 = scmp.eq.s32.totalorder %s14, 2
      %p114 = por %p112, %p113
      %p116 = scmp.ne.s32.totalorder %s99, %s115
      %p117 = scmp.eq.s32.totalorder %s14, 0
      %p118 = por %p116, %p117
      %p119 = scmp.le.s32.totalorder 1, %s8
      %p120 = scmp.lt.s32.totalorder %s8, 4
      %p121 = pnand %p119, %p120
      %p122 = pneg %p121
      // Predicated region
      $region9: #{cam_forward.5} parent=5 // pred_check
        _
      $region10: #{cam_forward.5} parent=5 // pred_check_branch
        %124 = sbr.rel (%p121) target = $region12
      $region11: #{cam_forward.5} parent=5 // pred_region
        %s125 = ssub.s32 %s8, 1
      $region12: #{cam_forward.5} parent=5 // pred_fallthru
        _
      %p126 = scmp.lt.s32.totalorder %s8, 3
      // Predicated region
      $region13: #{cam_forward.5} parent=5 // pred_check
        %p127 = pneg %p126
      $region14: #{cam_forward.5} parent=5 // pred_check_branch
        %129 = sbr.rel (%p127) target = $region16
      $region15: #{cam_forward.5} parent=5 // pred_region
        // Predicated region
        $region17: #{cam_forward.5} parent=15 // pred_check
          %p130 = pneg %p49
        $region18: #{cam_forward.5} parent=15 // pred_check_branch
          %132 = sbr.rel (%p130) target = $region20
        $region19: #{cam_forward.5} parent=15 // pred_region
          %s133 = sand.u32 %s39, 1
          %s134 = sand.u32 %s39, 1
          %s135 = smul.addr %s134, 32
          %s136 = scalar_lea.vmem [#allocation3], %s135
          %s137 = smul.u32 4, %s15
          %s138 = smul.u32 2, %s17
          %s139 = smul.addr %s137, 6
          %s140 = sadd.s32 %s138, %s139
          %s141 = smul.addr %s140, 4
          %s142 = scalar_lea.vmem %s0, %s141
          // Predicated region
          $region21: #{cam_forward.5} parent=19 // pred_check
            _
          $region22: #{cam_forward.5} parent=19 // pred_check_branch
            %144 = sbr.rel (0) target = $region24
          $region23: #{cam_forward.5} parent=19 // pred_region
            // Predicated region
            $region25: #{cam_forward.5} parent=23 // pred_check
              _
            $region26: #{cam_forward.5} parent=23 // pred_check_branch
              %146 = sbr.rel (0) target = $region28
            $region27: #{cam_forward.5} parent=23 // pred_region
              // Predicated region
              $region40: #{cam_forward.5} parent=27 // pred_check
                _
              $region41: #{cam_forward.5} parent=27 // pred_check_branch
                %167 = sbr.rel (0) target = $region43
              $region42: #{cam_forward.5} parent=27 // pred_region
                loop: start=0, step=1, limit=1
                $region44: #{cam_forward.5} parent=42 // loop_pre_header
                  _
                $region45: #{cam_forward.5} parent=42 // loop_header
                  %s169 = sphi 0, %s173
                  %p170 = scmp.ge.s32.totalorder %s169, 1
                  %s174 = sphi %s142, %s142
                  %s175 = sphi %s136, %s136
                $region46: #{cam_forward.5} parent=42 // loop_header_branch
                  %172 = sbr.rel (%p170) target = $region50
                $region47: #{cam_forward.5} parent=42 // loop_body
                  %v176 = vld [vmem:[%s174] sm:$0xff]
                  %177 = vst [vmem:[%s175] sm:$0xff] %v176
                  %v178 = vld [vmem:[%s174 + $0x18] sm:$0xff]
                  %179 = vst [vmem:[%s175 + $0x8] sm:$0xff] %v178
                  %v180 = vld [vmem:[%s174 + $0x30] sm:$0xff]
                  %181 = vst [vmem:[%s175 + $0x10] sm:$0xff] %v180
                  %v182 = vld [vmem:[%s174 + $0x48] sm:$0xff]
                  %183 = vst [vmem:[%s175 + $0x18] sm:$0xff] %v182
                $region48: #{cam_forward.5} parent=42 // loop_footer
                  %s173 = sadd.s32 1, %s169
                $region49: #{cam_forward.5} parent=42 // loop_footer_branch
                  %168 = sbr.rel target = $region45
                $region50: #{cam_forward.5} parent=42 // loop_exit
                  _
              $region43: #{cam_forward.5} parent=27 // pred_fallthru
                _
              // Predicated region
              $region51: #{cam_forward.5} parent=27 // pred_check
                _
              $region52: #{cam_forward.5} parent=27 // pred_check_branch
                %185 = sbr.rel target = $region54
              $region53: #{cam_forward.5} parent=27 // pred_region
                _
              $region54: #{cam_forward.5} parent=27 // pred_fallthru
                _
            $region28: #{cam_forward.5} parent=23 // pred_fallthru
              _
            // Predicated region
            $region29: #{cam_forward.5} parent=23 // pred_check
              _
            $region30: #{cam_forward.5} parent=23 // pred_check_branch
              %148 = sbr.rel target = $region32
            $region31: #{cam_forward.5} parent=23 // pred_region
              loop: start=0, step=1, limit=1
              $region33: #{cam_forward.5} parent=31 // loop_pre_header
                _
              $region34: #{cam_forward.5} parent=31 // loop_header
                %s151 = sphi 0, %s155
                %p152 = scmp.ge.s32.totalorder %s151, 1
                %s156 = sphi %s142, %s142
                %s157 = sphi %s136, %s136
              $region35: #{cam_forward.5} parent=31 // loop_header_branch
                %154 = sbr.rel (%p152) target = $region39
              $region36: #{cam_forward.5} parent=31 // loop_body
                %v158 = vld [vmem:[%s156] sm:$0xff]
                %159 = vst [vmem:[%s157] sm:$0xff] %v158
                %v160 = vld [vmem:[%s156 + $0x18] sm:$0xff]
                %161 = vst [vmem:[%s157 + $0x8] sm:$0xff] %v160
                %v162 = vld [vmem:[%s156 + $0x30] sm:$0xff]
                %163 = vst [vmem:[%s157 + $0x10] sm:$0xff] %v162
                %v164 = vld [vmem:[%s156 + $0x48] sm:$0xff]
                %165 = vst [vmem:[%s157 + $0x18] sm:$0xff] %v164
              $region37: #{cam_forward.5} parent=31 // loop_footer
                %s155 = sadd.s32 1, %s151
              $region38: #{cam_forward.5} parent=31 // loop_footer_branch
                %150 = sbr.rel target = $region34
              $region39: #{cam_forward.5} parent=31 // loop_exit
                _
            $region32: #{cam_forward.5} parent=23 // pred_fallthru
              _
          $region24: #{cam_forward.5} parent=19 // pred_fallthru
            _
          %186 = vnop
        $region20: #{cam_forward.5} parent=15 // pred_fallthru
          _
        // Predicated region
        $region55: #{cam_forward.5} parent=15 // pred_check
          %p187 = pneg %p77
        $region56: #{cam_forward.5} parent=15 // pred_check_branch
          %189 = sbr.rel (%p187) target = $region58
        $region57: #{cam_forward.5} parent=15 // pred_region
          %s190 = smul.u32 32, %s17
          %s191 = smul.u32 2, %s16
          %p192 = scmp.lt.s32.totalorder %s190, 95
          %s193 = scalar_select %p192, %s190, 95
          %p194 = scmp.lt.s32.totalorder %s191, 1
          %s195 = scalar_select %p194, %s191, 1
          %s196 = smul.addr %s193, 2
          %s197 = sadd.s32 %s195, %s196
          %s198 = smul.addr %s197, 4
          %s199 = scalar_lea.vmem %s1, %s198
          %s200 = smul.u32 32, %s17
          %s201 = smul.u32 2, %s16
        $region58: #{cam_forward.5} parent=15 // pred_fallthru
          _
      $region16: #{cam_forward.5} parent=5 // pred_fallthru
        _
      %p202 = scmp.le.s32.totalorder 1, %s8
      %p203 = scmp.lt.s32.totalorder %s8, 4
      %p204 = pnand %p202, %p203
      %p205 = pneg %p204
      // Predicated region
      $region59: #{cam_forward.5} parent=5 // pred_check
        _
      $region60: #{cam_forward.5} parent=5 // pred_check_branch
        %207 = sbr.rel (%p204) target = $region62
      $region61: #{cam_forward.5} parent=5 // pred_region
        %s208 = ssub.s32 %s8, 1
        %s209 = sand.u32 %s42, 1
        %s210 = sand.u32 %s42, 1
        %s211 = smul.addr %s210, 32
        %s212 = scalar_lea.vmem [#allocation3], %s211
        // Predicated region
        $region63: #{cam_forward.5} parent=61 // pred_check
          %p213 = pneg %p55
        $region64: #{cam_forward.5} parent=61 // pred_check_branch
          %215 = sbr.rel (%p213) target = $region66
        $region65: #{cam_forward.5} parent=61 // pred_region
          _
        $region66: #{cam_forward.5} parent=61 // pred_fallthru
          _
        %s216 = sand.u32 %s42, 1
        %s217 = sand.u32 %s42, 1
        %s218 = smul.addr %s217, 32
        %s219 = scalar_lea.vmem [#allocation3], %s218
        %p220 = pneg %p55
        %p221 = pneg %p52
        %s222 = smul.u32 32, %s20
        %s223 = smul.u32 2, %s19
        %p224 = scmp.lt.s32.totalorder %s222, 95
        %s225 = scalar_select %p224, %s222, 95
        %p226 = scmp.lt.s32.totalorder %s223, 1
        %s227 = scalar_select %p226, %s223, 1
        %s228 = smul.addr %s225, 2
        %s229 = sadd.s32 %s227, %s228
        %s230 = smul.addr %s229, 4
        %s231 = scalar_lea.vmem %s1, %s230
        %p232 = pneg %p83
        %p233 = pneg %p80
        %p234 = pneg %p111
        %p235 = pneg %p108
        %s236 = smul.u32 4, %s18
        %s237 = smul.u32 2, %s19
        %p238 = scmp.lt.s32.totalorder %s236, 3
        %s239 = scalar_select %p238, %s236, 3
        %p240 = scmp.lt.s32.totalorder %s237, 1
        %s241 = scalar_select %p240, %s237, 1
        %s242 = smul.addr %s239, 2
        %s243 = sadd.s32 %s241, %s242
        %s244 = smul.addr %s243, 8
        %s245 = scalar_lea.vmem %s2, %s244
        %s246 = smul.u32 4, %s18
        %s247 = smul.u32 2, %s20
        %s248 = smul.u32 32, %s20
        %s249 = smul.u32 2, %s19
        %p250 = scmp.lt.s32.totalorder %s248, 95
        %s251 = scalar_select %p250, %s248, 95
        %p252 = scmp.lt.s32.totalorder %s249, 1
        %s253 = scalar_select %p252, %s249, 1
        %s254 = smul.addr %s251, 2
        %s255 = sadd.s32 %s253, %s254
        %s256 = smul.addr %s255, 4
        %s257 = scalar_lea.vmem %s1, %s256
        %s258 = smul.u32 32, %s20
        %s259 = smul.u32 2, %s19
        %s260 = smul.u32 4, %s18
        %s261 = smul.u32 2, %s19
        %p262 = scmp.lt.s32.totalorder %s260, 3
        %s263 = scalar_select %p262, %s260, 3
        %p264 = scmp.lt.s32.totalorder %s261, 1
        %s265 = scalar_select %p264, %s261, 1
        %s266 = smul.addr %s263, 2
        %s267 = sadd.s32 %s265, %s266
        %s268 = smul.addr %s267, 8
        %s269 = scalar_lea.vmem %s2, %s268
        %s270 = smul.u32 4, %s18
        %s271 = smul.u32 2, %s19
        %p272 = scmp.eq.s32.totalorder %s20, 0
        // Predicated region
        $region67: #{cam_forward.5} parent=61 // pred_check
          %p273 = pneg %p272
        $region68: #{cam_forward.5} parent=61 // pred_check_branch
          %275 = sbr.rel (%p273) target = $region70
        $region69: #{cam_forward.5} parent=61 // pred_region
          %276 = vst [vmem:[#allocation2] sm:$0xff] 0.0
          %277 = vst [vmem:[#allocation2 + $0x8] sm:$0xff] 0.0
          %278 = vst [vmem:[#allocation2 + $0x10] sm:$0xff] 0.0
          %279 = vst [vmem:[#allocation2 + $0x18] sm:$0xff] 0.0
          %280 = vst [vmem:[#allocation2 + $0x20] sm:$0xff] 0.0
          %281 = vst [vmem:[#allocation2 + $0x28] sm:$0xff] 0.0
          %282 = vst [vmem:[#allocation2 + $0x30] sm:$0xff] 0.0
          %283 = vst [vmem:[#allocation2 + $0x38] sm:$0xff] 0.0
        $region70: #{cam_forward.5} parent=61 // pred_fallthru
          _
        %v284 = vld [vmem:[#allocation2] sm:$0xff]
        %v285 = vld [vmem:[#allocation2 + $0x8] sm:$0xff]
        %v286 = vld [vmem:[#allocation2 + $0x10] sm:$0xff]
        %v287 = vld [vmem:[#allocation2 + $0x18] sm:$0xff]
        %v288 = vld [vmem:[#allocation2 + $0x20] sm:$0xff]
        %v289 = vld [vmem:[#allocation2 + $0x28] sm:$0xff]
        %v290 = vld [vmem:[#allocation2 + $0x30] sm:$0xff]
        %v291 = vld [vmem:[#allocation2 + $0x38] sm:$0xff]
        %v292 = vld [vmem:[%s212] sm:$0xff]
        %v293 = vld [vmem:[%s212 + $0x8] sm:$0xff]
        %v294 = vld [vmem:[%s212 + $0x10] sm:$0xff]
        %v295 = vld [vmem:[%s212 + $0x18] sm:$0xff]
        %v296 = vld [vmem:[%s257] sm:$0xff]
        %v297 = vld [vmem:[%s257 + $0x8] sm:$0xff]
        %v298 = vld [vmem:[%s257 + $0x10] sm:$0xff]
        %v299 = vld [vmem:[%s257 + $0x18] sm:$0xff]
        %v300 = vld [vmem:[%s257 + $0x20] sm:$0xff]
        %v301 = vld [vmem:[%s257 + $0x28] sm:$0xff]
        %v302 = vld [vmem:[%s257 + $0x30] sm:$0xff]
        %v303 = vld [vmem:[%s257 + $0x38] sm:$0xff]
        %v304 = vld [vmem:[%s257 + $0x40] sm:$0xff]
        %v305 = vld [vmem:[%s257 + $0x48] sm:$0xff]
        %v306 = vld [vmem:[%s257 + $0x50] sm:$0xff]
        %v307 = vld [vmem:[%s257 + $0x58] sm:$0xff]
        %v308 = vld [vmem:[%s257 + $0x60] sm:$0xff]
        %v309 = vld [vmem:[%s257 + $0x68] sm:$0xff]
        %v310 = vld [vmem:[%s257 + $0x70] sm:$0xff]
        %v311 = vld [vmem:[%s257 + $0x78] sm:$0xff]
        %v312 = vld [vmem:[%s257 + $0x80] sm:$0xff]
        %v313 = vld [vmem:[%s257 + $0x88] sm:$0xff]
        %v314 = vld [vmem:[%s257 + $0x90] sm:$0xff]
        %v315 = vld [vmem:[%s257 + $0x98] sm:$0xff]
        %v316 = vld [vmem:[%s257 + $0xa0] sm:$0xff]
        %v317 = vld [vmem:[%s257 + $0xa8] sm:$0xff]
        %v318 = vld [vmem:[%s257 + $0xb0] sm:$0xff]
        %v319 = vld [vmem:[%s257 + $0xb8] sm:$0xff]
        %v320 = vld [vmem:[%s257 + $0xc0] sm:$0xff]
        %v321 = vld [vmem:[%s257 + $0xc8] sm:$0xff]
        %v322 = vld [vmem:[%s257 + $0xd0] sm:$0xff]
        %v323 = vld [vmem:[%s257 + $0xd8] sm:$0xff]
        %v324 = vld [vmem:[%s257 + $0xe0] sm:$0xff]
        %v325 = vld [vmem:[%s257 + $0xe8] sm:$0xff]
        %v326 = vld [vmem:[%s257 + $0xf0] sm:$0xff]
        %v327 = vld [vmem:[%s257 + $0xf8] sm:$0xff]
        %v332 = vunpack.c.l.b16 %v292
        %v333 = vunpack.c.h.b16 %v292
        %v334 = vunpack.c.l.b16 %v293
        %v335 = vunpack.c.h.b16 %v293
        %v336 = vunpack.c.l.b16 %v294
        %v337 = vunpack.c.h.b16 %v294
        %v338 = vunpack.c.l.b16 %v295
        %v339 = vunpack.c.h.b16 %v295
        %v340 = vpack.c.b16 %v334, %v332
        %v341 = vpack.c.b16 %v335, %v333
        %v342 = vpack.c.b16 %v338, %v336
        %v343 = vpack.c.b16 %v339, %v337
        %v380 = vunpack.c.l.b16 %v296
        %v381 = vunpack.c.h.b16 %v296
        %v382 = vunpack.c.l.b16 %v297
        %v383 = vunpack.c.h.b16 %v297
        %v384 = vunpack.c.l.b16 %v298
        %v385 = vunpack.c.h.b16 %v298
        %v386 = vunpack.c.l.b16 %v299
        %v387 = vunpack.c.h.b16 %v299
        %v388 = vunpack.c.l.b16 %v300
        %v389 = vunpack.c.h.b16 %v300
        %v390 = vunpack.c.l.b16 %v301
        %v391 = vunpack.c.h.b16 %v301
        %v392 = vunpack.c.l.b16 %v302
        %v393 = vunpack.c.h.b16 %v302
        %v394 = vunpack.c.l.b16 %v303
        %v395 = vunpack.c.h.b16 %v303
        %v396 = vunpack.c.l.b16 %v304
        %v397 = vunpack.c.h.b16 %v304
        %v398 = vunpack.c.l.b16 %v305
        %v399 = vunpack.c.h.b16 %v305
        %v400 = vunpack.c.l.b16 %v306
        %v401 = vunpack.c.h.b16 %v306
        %v402 = vunpack.c.l.b16 %v307
        %v403 = vunpack.c.h.b16 %v307
        %v404 = vunpack.c.l.b16 %v308
        %v405 = vunpack.c.h.b16 %v308
        %v406 = vunpack.c.l.b16 %v309
        %v407 = vunpack.c.h.b16 %v309
        %v408 = vunpack.c.l.b16 %v310
        %v409 = vunpack.c.h.b16 %v310
        %v410 = vunpack.c.l.b16 %v311
        %v411 = vunpack.c.h.b16 %v311
        %v412 = vunpack.c.l.b16 %v312
        %v413 = vunpack.c.h.b16 %v312
        %v414 = vunpack.c.l.b16 %v313
        %v415 = vunpack.c.h.b16 %v313
        %v416 = vunpack.c.l.b16 %v314
        %v417 = vunpack.c.h.b16 %v314
        %v418 = vunpack.c.l.b16 %v315
        %v419 = vunpack.c.h.b16 %v315
        %v420 = vunpack.c.l.b16 %v316
        %v421 = vunpack.c.h.b16 %v316
        %v422 = vunpack.c.l.b16 %v317
        %v423 = vunpack.c.h.b16 %v317
        %v424 = vunpack.c.l.b16 %v318
        %v425 = vunpack.c.h.b16 %v318
        %v426 = vunpack.c.l.b16 %v319
        %v427 = vunpack.c.h.b16 %v319
        %v428 = vunpack.c.l.b16 %v320
        %v429 = vunpack.c.h.b16 %v320
        %v430 = vunpack.c.l.b16 %v321
        %v431 = vunpack.c.h.b16 %v321
        %v432 = vunpack.c.l.b16 %v322
        %v433 = vunpack.c.h.b16 %v322
        %v434 = vunpack.c.l.b16 %v323
        %v435 = vunpack.c.h.b16 %v323
        %v436 = vunpack.c.l.b16 %v324
        %v437 = vunpack.c.h.b16 %v324
        %v438 = vunpack.c.l.b16 %v325
        %v439 = vunpack.c.h.b16 %v325
        %v440 = vunpack.c.l.b16 %v326
        %v441 = vunpack.c.h.b16 %v326
        %v442 = vunpack.c.l.b16 %v327
        %v443 = vunpack.c.h.b16 %v327
        %v444 = vpack.c.b16 %v382, %v380
        %v445 = vpack.c.b16 %v383, %v381
        %v446 = vpack.c.b16 %v386, %v384
        %v447 = vpack.c.b16 %v387, %v385
        %v448 = vpack.c.b16 %v390, %v388
        %v449 = vpack.c.b16 %v391, %v389
        %v450 = vpack.c.b16 %v394, %v392
        %v451 = vpack.c.b16 %v395, %v393
        %v452 = vpack.c.b16 %v398, %v396
        %v453 = vpack.c.b16 %v399, %v397
        %v454 = vpack.c.b16 %v402, %v400
        %v455 = vpack.c.b16 %v403, %v401
        %v456 = vpack.c.b16 %v406, %v404
        %v457 = vpack.c.b16 %v407, %v405
        %v458 = vpack.c.b16 %v410, %v408
        %v459 = vpack.c.b16 %v411, %v409
        %v460 = vpack.c.b16 %v414, %v412
        %v461 = vpack.c.b16 %v415, %v413
        %v462 = vpack.c.b16 %v418, %v416
        %v463 = vpack.c.b16 %v419, %v417
        %v464 = vpack.c.b16 %v422, %v420
        %v465 = vpack.c.b16 %v423, %v421
        %v466 = vpack.c.b16 %v426, %v424
        %v467 = vpack.c.b16 %v427, %v425
        %v468 = vpack.c.b16 %v430, %v428
        %v469 = vpack.c.b16 %v431, %v429
        %v470 = vpack.c.b16 %v434, %v432
        %v471 = vpack.c.b16 %v435, %v433
        %v472 = vpack.c.b16 %v438, %v436
        %v473 = vpack.c.b16 %v439, %v437
        %v474 = vpack.c.b16 %v442, %v440
        %v475 = vpack.c.b16 %v443, %v441
        %508 = vmatprep.subr.bf16.mxu0 %v445
        %509 = vmatpush1.bf16.msra.mxu0 %v444
        %510 = vmatprep.subr.bf16.mxu0 %v447
        %511 = vmatpush1.bf16.msra.mxu0 %v446
        %512 = vmatprep.subr.bf16.mxu0 %v449
        %513 = vmatpush1.bf16.msra.mxu0 %v448
        %514 = vmatprep.subr.bf16.mxu0 %v451
        %515 = vmatpush1.bf16.msra.mxu0 %v450
        %516 = vmatprep.subr.bf16.mxu0 %v453
        %517 = vmatpush1.bf16.msra.mxu0 %v452
        %518 = vmatprep.subr.bf16.mxu0 %v455
        %519 = vmatpush1.bf16.msra.mxu0 %v454
        %520 = vmatprep.subr.bf16.mxu0 %v457
        %521 = vmatpush1.bf16.msra.mxu0 %v456
        %522 = vmatprep.subr.bf16.mxu0 %v459
        %523 = vmatpush1.bf16.msra.mxu0 %v458
        %524 = vmatprep.subr.bf16.mxu0 %v461
        %525 = vmatpush1.bf16.msra.mxu0 %v460
        %526 = vmatprep.subr.bf16.mxu0 %v463
        %527 = vmatpush1.bf16.msra.mxu0 %v462
        %528 = vmatprep.subr.bf16.mxu0 %v465
        %529 = vmatpush1.bf16.msra.mxu0 %v464
        %530 = vmatprep.subr.bf16.mxu0 %v467
        %531 = vmatpush1.bf16.msra.mxu0 %v466
        %532 = vmatprep.subr.bf16.mxu0 %v469
        %533 = vmatpush1.bf16.msra.mxu0 %v468
        %534 = vmatprep.subr.bf16.mxu0 %v471
        %535 = vmatpush1.bf16.msra.mxu0 %v470
        %536 = vmatprep.subr.bf16.mxu0 %v473
        %537 = vmatpush1.bf16.msra.mxu0 %v472
        %538 = vmatprep.subr.bf16.mxu0 %v475
        %539 = vmatpush1.bf16.msra.mxu0 %v474
        %540 = vmatprep.mubr.bf16.mxu0 %v341
        %541 = vmatmul.mubr.bf16.gmra.mrb[0].mxu0 %v340
        %v542 = vpop.f32.mrb[0].mxu0
        %v543 = vadd.f32 0.0, %v542
        %v544 = vpop.f32.mrb[0].mxu0
        %v545 = vadd.f32 0.0, %v544
        %v546 = vpop.f32.mrb[0].mxu0
        %v547 = vadd.f32 0.0, %v546
        %v548 = vpop.f32.mrb[0].mxu0
        %v549 = vadd.f32 0.0, %v548
        %550 = vmatprep.mubr.bf16.mxu0 %v343
        %551 = vmatmul.mubr.bf16.gmra.mrb[0].mxu0 %v342
        %v552 = vpop.f32.mrb[0].mxu0
        %v553 = vadd.f32 0.0, %v552
        %v554 = vpop.f32.mrb[0].mxu0
        %v555 = vadd.f32 0.0, %v554
        %v556 = vpop.f32.mrb[0].mxu0
        %v557 = vadd.f32 0.0, %v556
        %v558 = vpop.f32.mrb[0].mxu0
        %v559 = vadd.f32 0.0, %v558
        %560 = vdwg.mxu0
        %v561 = vadd.f32 %v284, %v543
        %v562 = vadd.f32 %v285, %v545
        %v563 = vadd.f32 %v286, %v547
        %v564 = vadd.f32 %v287, %v549
        %v565 = vadd.f32 %v288, %v553
        %v566 = vadd.f32 %v289, %v555
        %v567 = vadd.f32 %v290, %v557
        %v568 = vadd.f32 %v291, %v559
        %569 = vst [vmem:[#allocation2] sm:$0xff] %v561
        %570 = vst [vmem:[#allocation2 + $0x8] sm:$0xff] %v562
        %571 = vst [vmem:[#allocation2 + $0x10] sm:$0xff] %v563
        %572 = vst [vmem:[#allocation2 + $0x18] sm:$0xff] %v564
        %573 = vst [vmem:[#allocation2 + $0x20] sm:$0xff] %v565
        %574 = vst [vmem:[#allocation2 + $0x28] sm:$0xff] %v566
        %575 = vst [vmem:[#allocation2 + $0x30] sm:$0xff] %v567
        %576 = vst [vmem:[#allocation2 + $0x38] sm:$0xff] %v568
        %p577 = scmp.eq.s32.totalorder %s20, 2
        // Predicated region
        $region71: #{cam_forward.5} parent=61 // pred_check
          %p578 = pneg %p577
        $region72: #{cam_forward.5} parent=61 // pred_check_branch
          %580 = sbr.rel (%p578) target = $region74
        $region73: #{cam_forward.5} parent=61 // pred_region
          %v581 = vld [vmem:[#allocation2] sm:$0xff]
          %v582 = vld [vmem:[#allocation2 + $0x8] sm:$0xff]
          %v583 = vld [vmem:[#allocation2 + $0x10] sm:$0xff]
          %v584 = vld [vmem:[#allocation2 + $0x18] sm:$0xff]
          %v585 = vld [vmem:[#allocation2 + $0x20] sm:$0xff]
          %v586 = vld [vmem:[#allocation2 + $0x28] sm:$0xff]
          %v587 = vld [vmem:[#allocation2 + $0x30] sm:$0xff]
          %v588 = vld [vmem:[#allocation2 + $0x38] sm:$0xff]
          %v589 = vmax.f32 %v581, 0.0
          %v590 = vmax.f32 %v582, 0.0
          %v591 = vmax.f32 %v583, 0.0
          %v592 = vmax.f32 %v584, 0.0
          %v593 = vmax.f32 %v585, 0.0
          %v594 = vmax.f32 %v586, 0.0
          %v595 = vmax.f32 %v587, 0.0
          %v596 = vmax.f32 %v588, 0.0
          %597 = vst [vmem:[%s269] sm:$0xff] %v589
          %598 = vst [vmem:[%s269 + $0x8] sm:$0xff] %v590
          %599 = vst [vmem:[%s269 + $0x10] sm:$0xff] %v591
          %600 = vst [vmem:[%s269 + $0x18] sm:$0xff] %v592
          %601 = vst [vmem:[%s269 + $0x20] sm:$0xff] %v593
          %602 = vst [vmem:[%s269 + $0x28] sm:$0xff] %v594
          %603 = vst [vmem:[%s269 + $0x30] sm:$0xff] %v595
          %604 = vst [vmem:[%s269 + $0x38] sm:$0xff] %v596
        $region74: #{cam_forward.5} parent=61 // pred_fallthru
          _
        %s605 = smul.u32 4, %s18
        %s606 = smul.u32 2, %s19
        %p607 = scmp.lt.s32.totalorder %s605, 3
        %s608 = scalar_select %p607, %s605, 3
        %p609 = scmp.lt.s32.totalorder %s606, 1
        %s610 = scalar_select %p609, %s606, 1
        %s611 = smul.addr %s608, 2
        %s612 = sadd.s32 %s610, %s611
        %s613 = smul.addr %s612, 8
        %s614 = scalar_lea.vmem %s2, %s613
        // Predicated region
        $region75: #{cam_forward.5} parent=61 // pred_check
          %p615 = pneg %p108
        $region76: #{cam_forward.5} parent=61 // pred_check_branch
          %617 = sbr.rel (%p615) target = $region78
        $region77: #{cam_forward.5} parent=61 // pred_region
          %s618 = smul.u32 4, %s18
          %s619 = smul.u32 2, %s19
        $region78: #{cam_forward.5} parent=61 // pred_fallthru
          _
        // Predicated region
        $region79: #{cam_forward.5} parent=61 // pred_check
          %p620 = pneg %p108
        $region80: #{cam_forward.5} parent=61 // pred_check_branch
          %622 = sbr.rel (%p620) target = $region82
        $region81: #{cam_forward.5} parent=61 // pred_region
          %s623 = smul.u32 4, %s18
          %s624 = smul.u32 2, %s19
          %p625 = scmp.lt.s32.totalorder %s623, 3
          %s626 = scalar_select %p625, %s623, 3
          %p627 = scmp.lt.s32.totalorder %s624, 1
          %s628 = scalar_select %p627, %s624, 1
          %s629 = smul.addr %s626, 2
          %s630 = sadd.s32 %s628, %s629
          %s631 = smul.addr %s630, 8
          %s632 = scalar_lea.vmem %s2, %s631
        $region82: #{cam_forward.5} parent=61 // pred_fallthru
          _
      $region62: #{cam_forward.5} parent=5 // pred_fallthru
        _
      %p633 = scmp.le.s32.totalorder 2, %s8
      // Predicated region
      $region83: #{cam_forward.5} parent=5 // pred_check
        %p634 = pneg %p633
      $region84: #{cam_forward.5} parent=5 // pred_check_branch
        %636 = sbr.rel (%p634) target = $region86
      $region85: #{cam_forward.5} parent=5 // pred_region
        %s637 = ssub.s32 %s8, 2
      $region86: #{cam_forward.5} parent=5 // pred_fallthru
        _
    $region6: #{cam_forward.5} parent=1 // loop_footer
      %s12 = sadd.s32 1, %s8
    $region7: #{cam_forward.5} parent=1 // loop_footer_branch
      %7 = sbr.rel target = $region3
    $region8: #{cam_forward.5} parent=1 // loop_exit
      _

// kernel: cam_forward.6
$region0: #{cam_forward.6}
  #allocation0 [shape = 'u32[]', space=smem, size = 0x4, offset = 0x4, fixed_abs, tag = 'smem constant byte address 0x4 - core index']
  #allocation1 [shape = 'u32[144,128]{1,0:T(1,128)}', space=vmem, size = 0x12000, scoped, tag = 'internal scratch']
  #allocation2 [shape = 'f32[16,256]{1,0:T(8,128)}', space=vmem, size = 0x4000, scoped, tag = 'scratch operand']
  %s0 = inlined_call_operand.vmem [shape: bf16[16,256], index: 0, kind: input, shape index: {}]
  %s1 = inlined_call_operand.vmem [shape: bf16[256,768], index: 1, kind: input, shape index: {}]
  %s2 = inlined_call_operand.vmem [shape: f32[16,768], index: 2, kind: output, shape index: {}]
  %s3 = sld [smem:[#allocation0]]
  $region106: #{cam_forward.6} parent=0
    _
  %s5 = ssub.s32 1, %s3
  %s6 = scalar_select 0, %s5, %s3
  $region1: #{cam_forward.6} parent=0
    #allocation3 [shape = 'u8[262144]{0}', space=vmem, size = 0x40000, scoped, tag = 'input window, operand 1']
    #allocation4 [shape = 'u8[32768]{0}', space=vmem, size = 0x8000, scoped, tag = 'output window, operand 0']
    loop: start=0, step=1, limit=5
    $region2: #{cam_forward.6} parent=1 // loop_pre_header
      _
    $region3: #{cam_forward.6} parent=1 // loop_header
      %s8 = sphi 0, %s12
      %p9 = scmp.ge.s32.totalorder %s8, 5
      %s15 = sphi 0, %s34
      %s16 = sphi 0, %s30
      %s17 = sphi 0, %s26
      %s18 = sphi 0, %s15
      %s19 = sphi 0, %s16
      %s20 = sphi 0, %s17
      %s21 = sphi 0, %s18
      %s22 = sphi 0, %s19
      %s23 = sphi 0, %s20
      %s39 = sphi 0, %s41
      %s42 = sphi 0, %s39
      %s43 = sphi 0, %s42
      %s59 = sphi 0, %s43
      %s67 = sphi 0, %s69
      %s70 = sphi 0, %s67
      %s71 = sphi 0, %s70
      %s87 = sphi 0, %s71
      %s95 = sphi 0, %s97
      %s98 = sphi 0, %s95
      %s99 = sphi 0, %s98
      %s115 = sphi 0, %s99
    $region4: #{cam_forward.6} parent=1 // loop_header_branch
      %11 = sbr.rel (%p9) target = $region8
    $region5: #{cam_forward.6} parent=1 // loop_body
      %s13 = ssub.s32 %s8, 1
      %s14 = ssub.s32 %s8, 2
      %s24 = sadd.s32 1, %s17
      %p25 = scmp.ge.s32.totalorder %s24, 1
      %s26 = scalar_select %p25, 0, %s24
      %s27 = sadd.s32 1, %s16
      %s28 = scalar_select %p25, %s27, %s16
      %p29 = scmp.ge.s32.totalorder %s28, 3
      %s30 = scalar_select %p29, 0, %s28
      %s31 = sadd.s32 1, %s15
      %s32 = scalar_select %p29, %s31, %s15
      %p33 = scmp.ge.s32.totalorder %s32, 1
      %s34 = scalar_select %p33, 0, %s32
      %s35 = ssub.s32 %s15, %s34
      %s36 = ssub.s32 %s17, %s26
      %s37 = sor.u32 %s35, %s36
      %p38 = scmp.eq.s32.totalorder %s37, 0
      %s40 = sadd.s32 %s39, 1
      %s41 = scalar_select %p38, %s39, %s40
      %p44 = pneg %p38
      %p45 = scmp.eq.s32.totalorder %s8, 2
      %p46 = por %p44, %p45
      %p47 = scmp.ne.s32.totalorder %s39, %s42
      %p48 = scmp.eq.s32.totalorder %s8, 0
      %p49 = por %p47, %p48
      %p50 = scmp.ne.s32.totalorder %s39, %s42
      %p51 = scmp.eq.s32.totalorder %s13, 2
      %p52 = por %p50, %p51
      %p53 = scmp.ne.s32.totalorder %s42, %s43
      %p54 = scmp.eq.s32.totalorder %s13, 0
      %p55 = por %p53, %p54
      %p56 = scmp.ne.s32.totalorder %s42, %s43
      %p57 = scmp.eq.s32.totalorder %s14, 2
      %p58 = por %p56, %p57
      %p60 = scmp.ne.s32.totalorder %s43, %s59
      %p61 = scmp.eq.s32.totalorder %s14, 0
      %p62 = por %p60, %p61
      %s63 = ssub.s32 %s17, %s26
      %s64 = ssub.s32 %s16, %s30
      %s65 = sor.u32 %s63, %s64
      %p66 = scmp.eq.s32.totalorder %s65, 0
      %s68 = sadd.s32 %s67, 1
      %s69 = scalar_select %p66, %s67, %s68
      %p72 = pneg %p66
      %p73 = scmp.eq.s32.totalorder %s8, 2
      %p74 = por %p72, %p73
      %p75 = scmp.ne.s32.totalorder %s67, %s70
      %p76 = scmp.eq.s32.totalorder %s8, 0
      %p77 = por %p75, %p76
      %p78 = scmp.ne.s32.totalorder %s67, %s70
      %p79 = scmp.eq.s32.totalorder %s13, 2
      %p80 = por %p78, %p79
      %p81 = scmp.ne.s32.totalorder %s70, %s71
      %p82 = scmp.eq.s32.totalorder %s13, 0
      %p83 = por %p81, %p82
      %p84 = scmp.ne.s32.totalorder %s70, %s71
      %p85 = scmp.eq.s32.totalorder %s14, 2
      %p86 = por %p84, %p85
      %p88 = scmp.ne.s32.totalorder %s71, %s87
      %p89 = scmp.eq.s32.totalorder %s14, 0
      %p90 = por %p88, %p89
      %s91 = ssub.s32 %s15, %s34
      %s92 = ssub.s32 %s16, %s30
      %s93 = sor.u32 %s91, %s92
      %p94 = scmp.eq.s32.totalorder %s93, 0
      %s96 = sadd.s32 %s95, 1
      %s97 = scalar_select %p94, %s95, %s96
      %p100 = pneg %p94
      %p101 = scmp.eq.s32.totalorder %s8, 2
      %p102 = por %p100, %p101
      %p103 = scmp.ne.s32.totalorder %s95, %s98
      %p104 = scmp.eq.s32.totalorder %s8, 0
      %p105 = por %p103, %p104
      %p106 = scmp.ne.s32.totalorder %s95, %s98
      %p107 = scmp.eq.s32.totalorder %s13, 2
      %p108 = por %p106, %p107
      %p109 = scmp.ne.s32.totalorder %s98, %s99
      %p110 = scmp.eq.s32.totalorder %s13, 0
      %p111 = por %p109, %p110
      %p112 = scmp.ne.s32.totalorder %s98, %s99
      %p113 = scmp.eq.s32.totalorder %s14, 2
      %p114 = por %p112, %p113
      %p116 = scmp.ne.s32.totalorder %s99, %s115
      %p117 = scmp.eq.s32.totalorder %s14, 0
      %p118 = por %p116, %p117
      %p119 = scmp.le.s32.totalorder 1, %s8
      %p120 = scmp.lt.s32.totalorder %s8, 4
      %p121 = pnand %p119, %p120
      %p122 = pneg %p121
      // Predicated region
      $region9: #{cam_forward.6} parent=5 // pred_check
        _
      $region10: #{cam_forward.6} parent=5 // pred_check_branch
        %124 = sbr.rel (%p121) target = $region12
      $region11: #{cam_forward.6} parent=5 // pred_region
        %s125 = ssub.s32 %s8, 1
        // Predicated region
        $region13: #{cam_forward.6} parent=11 // pred_check
          %p126 = pneg %p55
        $region14: #{cam_forward.6} parent=11 // pred_check_branch
          %128 = sbr.rel (%p126) target = $region16
        $region15: #{cam_forward.6} parent=11 // pred_region
          %s129 = smul.u32 2, %s18
          %s130 = smul.u32 2, %s20
          %p131 = scmp.lt.s32.totalorder %s129, 1
          %s132 = scalar_select %p131, %s129, 1
          %p133 = scmp.lt.s32.totalorder %s130, 1
          %s134 = scalar_select %p133, %s130, 1
          %s135 = smul.addr %s132, 2
          %s136 = sadd.s32 %s134, %s135
          %s137 = smul.addr %s136, 4
          %s138 = scalar_lea.vmem %s0, %s137
          %s139 = smul.u32 2, %s18
          %s140 = smul.u32 2, %s20
        $region16: #{cam_forward.6} parent=11 // pred_fallthru
          _
      $region12: #{cam_forward.6} parent=5 // pred_fallthru
        _
      %p141 = scmp.lt.s32.totalorder %s8, 3
      // Predicated region
      $region17: #{cam_forward.6} parent=5 // pred_check
        %p142 = pneg %p141
      $region18: #{cam_forward.6} parent=5 // pred_check_branch
        %144 = sbr.rel (%p142) target = $region20
      $region19: #{cam_forward.6} parent=5 // pred_region
        // Predicated region
        $region21: #{cam_forward.6} parent=19 // pred_check
          %p145 = pneg %p77
        $region22: #{cam_forward.6} parent=19 // pred_check_branch
          %147 = sbr.rel (%p145) target = $region24
        $region23: #{cam_forward.6} parent=19 // pred_region
          %s148 = sand.u32 %s67, 1
          %s149 = sand.u32 %s67, 1
          %s150 = smul.addr %s149, 256
          %s151 = scalar_lea.vmem [#allocation3], %s150
          %s152 = smul.u32 32, %s17
          %s153 = smul.u32 2, %s16
          %s154 = smul.addr %s152, 6
          %s155 = sadd.s32 %s153, %s154
          %s156 = smul.addr %s155, 4
          %s157 = scalar_lea.vmem %s1, %s156
          // Predicated region
          $region25: #{cam_forward.6} parent=23 // pred_check
            _
          $region26: #{cam_forward.6} parent=23 // pred_check_branch
            %159 = sbr.rel (0) target = $region28
          $region27: #{cam_forward.6} parent=23 // pred_region
            // Predicated region
            $region29: #{cam_forward.6} parent=27 // pred_check
              _
            $region30: #{cam_forward.6} parent=27 // pred_check_branch
              %161 = sbr.rel (0) target = $region32
            $region31: #{cam_forward.6} parent=27 // pred_region
              // Predicated region
              $region44: #{cam_forward.6} parent=31 // pred_check
                _
              $region45: #{cam_forward.6} parent=31 // pred_check_branch
                %238 = sbr.rel (0) target = $region47
              $region46: #{cam_forward.6} parent=31 // pred_region
                loop: start=0, step=1, limit=1
                $region48: #{cam_forward.6} parent=46 // loop_pre_header
                  _
                $region49: #{cam_forward.6} parent=46 // loop_header
                  %s240 = sphi 0, %s244
                  %p241 = scmp.ge.s32.totalorder %s240, 1
                  %s245 = sphi %s157, %s157
                  %s246 = sphi %s151, %s151
                $region50: #{cam_forward.6} parent=46 // loop_header_branch
                  %243 = sbr.rel (%p241) target = $region54
                $region51: #{cam_forward.6} parent=46 // loop_body
                  %v247 = vld [vmem:[%s245] sm:$0xff]
                  %248 = vst [vmem:[%s246] sm:$0xff] %v247
                  %v249 = vld [vmem:[%s245 + $0x18] sm:$0xff]
                  %250 = vst [vmem:[%s246 + $0x8] sm:$0xff] %v249
                  %v251 = vld [vmem:[%s245 + $0x30] sm:$0xff]
                  %252 = vst [vmem:[%s246 + $0x10] sm:$0xff] %v251
                  %v253 = vld [vmem:[%s245 + $0x48] sm:$0xff]
                  %254 = vst [vmem:[%s246 + $0x18] sm:$0xff] %v253
                  %v255 = vld [vmem:[%s245 + $0x60] sm:$0xff]
                  %256 = vst [vmem:[%s246 + $0x20] sm:$0xff] %v255
                  %v257 = vld [vmem:[%s245 + $0x78] sm:$0xff]
                  %258 = vst [vmem:[%s246 + $0x28] sm:$0xff] %v257
                  %v259 = vld [vmem:[%s245 + $0x90] sm:$0xff]
                  %260 = vst [vmem:[%s246 + $0x30] sm:$0xff] %v259
                  %v261 = vld [vmem:[%s245 + $0xa8] sm:$0xff]
                  %262 = vst [vmem:[%s246 + $0x38] sm:$0xff] %v261
                  %v263 = vld [vmem:[%s245 + $0xc0] sm:$0xff]
                  %264 = vst [vmem:[%s246 + $0x40] sm:$0xff] %v263
                  %v265 = vld [vmem:[%s245 + $0xd8] sm:$0xff]
                  %266 = vst [vmem:[%s246 + $0x48] sm:$0xff] %v265
                  %v267 = vld [vmem:[%s245 + $0xf0] sm:$0xff]
                  %268 = vst [vmem:[%s246 + $0x50] sm:$0xff] %v267
                  %v269 = vld [vmem:[%s245 + $0x108] sm:$0xff]
                  %270 = vst [vmem:[%s246 + $0x58] sm:$0xff] %v269
                  %v271 = vld [vmem:[%s245 + $0x120] sm:$0xff]
                  %272 = vst [vmem:[%s246 + $0x60] sm:$0xff] %v271
                  %v273 = vld [vmem:[%s245 + $0x138] sm:$0xff]
                  %274 = vst [vmem:[%s246 + $0x68] sm:$0xff] %v273
                  %v275 = vld [vmem:[%s245 + $0x150] sm:$0xff]
                  %276 = vst [vmem:[%s246 + $0x70] sm:$0xff] %v275
                  %v277 = vld [vmem:[%s245 + $0x168] sm:$0xff]
                  %278 = vst [vmem:[%s246 + $0x78] sm:$0xff] %v277
                  %v279 = vld [vmem:[%s245 + $0x180] sm:$0xff]
                  %280 = vst [vmem:[%s246 + $0x80] sm:$0xff] %v279
                  %v281 = vld [vmem:[%s245 + $0x198] sm:$0xff]
                  %282 = vst [vmem:[%s246 + $0x88] sm:$0xff] %v281
                  %v283 = vld [vmem:[%s245 + $0x1b0] sm:$0xff]
                  %284 = vst [vmem:[%s246 + $0x90] sm:$0xff] %v283
                  %v285 = vld [vmem:[%s245 + $0x1c8] sm:$0xff]
                  %286 = vst [vmem:[%s246 + $0x98] sm:$0xff] %v285
                  %v287 = vld [vmem:[%s245 + $0x1e0] sm:$0xff]
                  %288 = vst [vmem:[%s246 + $0xa0] sm:$0xff] %v287
                  %v289 = vld [vmem:[%s245 + $0x1f8] sm:$0xff]
                  %290 = vst [vmem:[%s246 + $0xa8] sm:$0xff] %v289
                  %v291 = vld [vmem:[%s245 + $0x210] sm:$0xff]
                  %292 = vst [vmem:[%s246 + $0xb0] sm:$0xff] %v291
                  %v293 = vld [vmem:[%s245 + $0x228] sm:$0xff]
                  %294 = vst [vmem:[%s246 + $0xb8] sm:$0xff] %v293
                  %v295 = vld [vmem:[%s245 + $0x240] sm:$0xff]
                  %296 = vst [vmem:[%s246 + $0xc0] sm:$0xff] %v295
                  %v297 = vld [vmem:[%s245 + $0x258] sm:$0xff]
                  %298 = vst [vmem:[%s246 + $0xc8] sm:$0xff] %v297
                  %v299 = vld [vmem:[%s245 + $0x270] sm:$0xff]
                  %300 = vst [vmem:[%s246 + $0xd0] sm:$0xff] %v299
                  %v301 = vld [vmem:[%s245 + $0x288] sm:$0xff]
                  %302 = vst [vmem:[%s246 + $0xd8] sm:$0xff] %v301
                  %v303 = vld [vmem:[%s245 + $0x2a0] sm:$0xff]
                  %304 = vst [vmem:[%s246 + $0xe0] sm:$0xff] %v303
                  %v305 = vld [vmem:[%s245 + $0x2b8] sm:$0xff]
                  %306 = vst [vmem:[%s246 + $0xe8] sm:$0xff] %v305
                  %v307 = vld [vmem:[%s245 + $0x2d0] sm:$0xff]
                  %308 = vst [vmem:[%s246 + $0xf0] sm:$0xff] %v307
                  %v309 = vld [vmem:[%s245 + $0x2e8] sm:$0xff]
                  %310 = vst [vmem:[%s246 + $0xf8] sm:$0xff] %v309
                $region52: #{cam_forward.6} parent=46 // loop_footer
                  %s244 = sadd.s32 1, %s240
                $region53: #{cam_forward.6} parent=46 // loop_footer_branch
                  %239 = sbr.rel target = $region49
                $region54: #{cam_forward.6} parent=46 // loop_exit
                  _
              $region47: #{cam_forward.6} parent=31 // pred_fallthru
                _
              // Predicated region
              $region55: #{cam_forward.6} parent=31 // pred_check
                _
              $region56: #{cam_forward.6} parent=31 // pred_check_branch
                %312 = sbr.rel target = $region58
              $region57: #{cam_forward.6} parent=31 // pred_region
                _
              $region58: #{cam_forward.6} parent=31 // pred_fallthru
                _
            $region32: #{cam_forward.6} parent=27 // pred_fallthru
              _
            // Predicated region
            $region33: #{cam_forward.6} parent=27 // pred_check
              _
            $region34: #{cam_forward.6} parent=27 // pred_check_branch
              %163 = sbr.rel target = $region36
            $region35: #{cam_forward.6} parent=27 // pred_region
              loop: start=0, step=1, limit=1
              $region37: #{cam_forward.6} parent=35 // loop_pre_header
                _
              $region38: #{cam_forward.6} parent=35 // loop_header
                %s166 = sphi 0, %s170
                %p167 = scmp.ge.s32.totalorder %s166, 1
                %s171 = sphi %s157, %s157
                %s172 = sphi %s151, %s151
              $region39: #{cam_forward.6} parent=35 // loop_header_branch
                %169 = sbr.rel (%p167) target = $region43
              $region40: #{cam_forward.6} parent=35 // loop_body
                %v173 = vld [vmem:[%s171] sm:$0xff]
                %174 = vst [vmem:[%s172] sm:$0xff] %v173
                %v175 = vld [vmem:[%s171 + $0x18] sm:$0xff]
                %176 = vst [vmem:[%s172 + $0x8] sm:$0xff] %v175
                %v177 = vld [vmem:[%s171 + $0x30] sm:$0xff]
                %178 = vst [vmem:[%s172 + $0x10] sm:$0xff] %v177
                %v179 = vld [vmem:[%s171 + $0x48] sm:$0xff]
                %180 = vst [vmem:[%s172 + $0x18] sm:$0xff] %v179
                %v181 = vld [vmem:[%s171 + $0x60] sm:$0xff]
                %182 = vst [vmem:[%s172 + $0x20] sm:$0xff] %v181
                %v183 = vld [vmem:[%s171 + $0x78] sm:$0xff]
                %184 = vst [vmem:[%s172 + $0x28] sm:$0xff] %v183
                %v185 = vld [vmem:[%s171 + $0x90] sm:$0xff]
                %186 = vst [vmem:[%s172 + $0x30] sm:$0xff] %v185
                %v187 = vld [vmem:[%s171 + $0xa8] sm:$0xff]
                %188 = vst [vmem:[%s172 + $0x38] sm:$0xff] %v187
                %v189 = vld [vmem:[%s171 + $0xc0] sm:$0xff]
                %190 = vst [vmem:[%s172 + $0x40] sm:$0xff] %v189
                %v191 = vld [vmem:[%s171 + $0xd8] sm:$0xff]
                %192 = vst [vmem:[%s172 + $0x48] sm:$0xff] %v191
                %v193 = vld [vmem:[%s171 + $0xf0] sm:$0xff]
                %194 = vst [vmem:[%s172 + $0x50] sm:$0xff] %v193
                %v195 = vld [vmem:[%s171 + $0x108] sm:$0xff]
                %196 = vst [vmem:[%s172 + $0x58] sm:$0xff] %v195
                %v197 = vld [vmem:[%s171 + $0x120] sm:$0xff]
                %198 = vst [vmem:[%s172 + $0x60] sm:$0xff] %v197
                %v199 = vld [vmem:[%s171 + $0x138] sm:$0xff]
                %200 = vst [vmem:[%s172 + $0x68] sm:$0xff] %v199
                %v201 = vld [vmem:[%s171 + $0x150] sm:$0xff]
                %202 = vst [vmem:[%s172 + $0x70] sm:$0xff] %v201
                %v203 = vld [vmem:[%s171 + $0x168] sm:$0xff]
                %204 = vst [vmem:[%s172 + $0x78] sm:$0xff] %v203
                %v205 = vld [vmem:[%s171 + $0x180] sm:$0xff]
                %206 = vst [vmem:[%s172 + $0x80] sm:$0xff] %v205
                %v207 = vld [vmem:[%s171 + $0x198] sm:$0xff]
                %208 = vst [vmem:[%s172 + $0x88] sm:$0xff] %v207
                %v209 = vld [vmem:[%s171 + $0x1b0] sm:$0xff]
                %210 = vst [vmem:[%s172 + $0x90] sm:$0xff] %v209
                %v211 = vld [vmem:[%s171 + $0x1c8] sm:$0xff]
                %212 = vst [vmem:[%s172 + $0x98] sm:$0xff] %v211
                %v213 = vld [vmem:[%s171 + $0x1e0] sm:$0xff]
                %214 = vst [vmem:[%s172 + $0xa0] sm:$0xff] %v213
                %v215 = vld [vmem:[%s171 + $0x1f8] sm:$0xff]
                %216 = vst [vmem:[%s172 + $0xa8] sm:$0xff] %v215
                %v217 = vld [vmem:[%s171 + $0x210] sm:$0xff]
                %218 = vst [vmem:[%s172 + $0xb0] sm:$0xff] %v217
                %v219 = vld [vmem:[%s171 + $0x228] sm:$0xff]
                %220 = vst [vmem:[%s172 + $0xb8] sm:$0xff] %v219
                %v221 = vld [vmem:[%s171 + $0x240] sm:$0xff]
                %222 = vst [vmem:[%s172 + $0xc0] sm:$0xff] %v221
                %v223 = vld [vmem:[%s171 + $0x258] sm:$0xff]
                %224 = vst [vmem:[%s172 + $0xc8] sm:$0xff] %v223
                %v225 = vld [vmem:[%s171 + $0x270] sm:$0xff]
                %226 = vst [vmem:[%s172 + $0xd0] sm:$0xff] %v225
                %v227 = vld [vmem:[%s171 + $0x288] sm:$0xff]
                %228 = vst [vmem:[%s172 + $0xd8] sm:$0xff] %v227
                %v229 = vld [vmem:[%s171 + $0x2a0] sm:$0xff]
                %230 = vst [vmem:[%s172 + $0xe0] sm:$0xff] %v229
                %v231 = vld [vmem:[%s171 + $0x2b8] sm:$0xff]
                %232 = vst [vmem:[%s172 + $0xe8] sm:$0xff] %v231
                %v233 = vld [vmem:[%s171 + $0x2d0] sm:$0xff]
                %234 = vst [vmem:[%s172 + $0xf0] sm:$0xff] %v233
                %v235 = vld [vmem:[%s171 + $0x2e8] sm:$0xff]
                %236 = vst [vmem:[%s172 + $0xf8] sm:$0xff] %v235
              $region41: #{cam_forward.6} parent=35 // loop_footer
                %s170 = sadd.s32 1, %s166
              $region42: #{cam_forward.6} parent=35 // loop_footer_branch
                %165 = sbr.rel target = $region38
              $region43: #{cam_forward.6} parent=35 // loop_exit
                _
            $region36: #{cam_forward.6} parent=27 // pred_fallthru
              _
          $region28: #{cam_forward.6} parent=23 // pred_fallthru
            _
          %313 = vnop
        $region24: #{cam_forward.6} parent=19 // pred_fallthru
          _
      $region20: #{cam_forward.6} parent=5 // pred_fallthru
        _
      %p314 = scmp.le.s32.totalorder 1, %s8
      %p315 = scmp.lt.s32.totalorder %s8, 4
      %p316 = pnand %p314, %p315
      %p317 = pneg %p316
      // Predicated region
      $region59: #{cam_forward.6} parent=5 // pred_check
        _
      $region60: #{cam_forward.6} parent=5 // pred_check_branch
        %319 = sbr.rel (%p316) target = $region62
      $region61: #{cam_forward.6} parent=5 // pred_region
        %s320 = ssub.s32 %s8, 1
        %s321 = sand.u32 %s70, 1
        %s322 = sand.u32 %s70, 1
        %s323 = smul.addr %s322, 256
        %s324 = scalar_lea.vmem [#allocation3], %s323
        // Predicated region
        $region63: #{cam_forward.6} parent=61 // pred_check
          %p325 = pneg %p83
        $region64: #{cam_forward.6} parent=61 // pred_check_branch
          %327 = sbr.rel (%p325) target = $region66
        $region65: #{cam_forward.6} parent=61 // pred_region
          _
        $region66: #{cam_forward.6} parent=61 // pred_fallthru
          _
        %s328 = smul.u32 2, %s18
        %s329 = smul.u32 2, %s20
        %p330 = scmp.lt.s32.totalorder %s328, 1
        %s331 = scalar_select %p330, %s328, 1
        %p332 = scmp.lt.s32.totalorder %s329, 1
        %s333 = scalar_select %p332, %s329, 1
        %s334 = smul.addr %s331, 2
        %s335 = sadd.s32 %s333, %s334
        %s336 = smul.addr %s335, 4
        %s337 = scalar_lea.vmem %s0, %s336
        %p338 = pneg %p55
        %p339 = pneg %p52
        %s340 = sand.u32 %s70, 1
        %s341 = sand.u32 %s70, 1
        %s342 = smul.addr %s341, 256
        %s343 = scalar_lea.vmem [#allocation3], %s342
        %p344 = pneg %p83
        %p345 = pneg %p80
        %p346 = pneg %p111
        %p347 = pneg %p108
        %s348 = sand.u32 %s98, 1
        %s349 = sand.u32 %s98, 1
        %s350 = smul.addr %s349, 32
        %s351 = scalar_lea.vmem [#allocation4], %s350
        %s352 = smul.u32 2, %s18
        %s353 = smul.u32 2, %s20
        %p354 = scmp.lt.s32.totalorder %s352, 1
        %s355 = scalar_select %p354, %s352, 1
        %p356 = scmp.lt.s32.totalorder %s353, 1
        %s357 = scalar_select %p356, %s353, 1
        %s358 = smul.addr %s355, 2
        %s359 = sadd.s32 %s357, %s358
        %s360 = smul.addr %s359, 4
        %s361 = scalar_lea.vmem %s0, %s360
        %s362 = smul.u32 2, %s18
        %s363 = smul.u32 2, %s20
        %s364 = smul.u32 32, %s20
        %s365 = smul.u32 2, %s19
        %s366 = smul.u32 2, %s18
        %s367 = smul.u32 2, %s19
        %p368 = scmp.eq.s32.totalorder %s20, 0
        // Predicated region
        $region67: #{cam_forward.6} parent=61 // pred_check
          %p369 = pneg %p368
        $region68: #{cam_forward.6} parent=61 // pred_check_branch
          %371 = sbr.rel (%p369) target = $region70
        $region69: #{cam_forward.6} parent=61 // pred_region
          %372 = vst [vmem:[#allocation2] sm:$0xff] 0.0
          %373 = vst [vmem:[#allocation2 + $0x8] sm:$0xff] 0.0
          %374 = vst [vmem:[#allocation2 + $0x10] sm:$0xff] 0.0
          %375 = vst [vmem:[#allocation2 + $0x18] sm:$0xff] 0.0
        $region70: #{cam_forward.6} parent=61 // pred_fallthru
          _
        %v376 = vld [vmem:[#allocation2] sm:$0xff]
        %v377 = vld [vmem:[#allocation2 + $0x8] sm:$0xff]
        %v378 = vld [vmem:[#allocation2 + $0x10] sm:$0xff]
        %v379 = vld [vmem:[#allocation2 + $0x18] sm:$0xff]
        %v380 = vld [vmem:[%s361] sm:$0xff]
        %v381 = vld [vmem:[%s361 + $0x8] sm:$0xff]
        %v382 = vld [vmem:[%s324] sm:$0xff]
        %v383 = vld [vmem:[%s324 + $0x8] sm:$0xff]
        %v384 = vld [vmem:[%s324 + $0x10] sm:$0xff]
        %v385 = vld [vmem:[%s324 + $0x18] sm:$0xff]
        %v386 = vld [vmem:[%s324 + $0x20] sm:$0xff]
        %v387 = vld [vmem:[%s324 + $0x28] sm:$0xff]
        %v388 = vld [vmem:[%s324 + $0x30] sm:$0xff]
        %v389 = vld [vmem:[%s324 + $0x38] sm:$0xff]
        %v390 = vld [vmem:[%s324 + $0x40] sm:$0xff]
        %v391 = vld [vmem:[%s324 + $0x48] sm:$0xff]
        %v392 = vld [vmem:[%s324 + $0x50] sm:$0xff]
        %v393 = vld [vmem:[%s324 + $0x58] sm:$0xff]
        %v394 = vld [vmem:[%s324 + $0x60] sm:$0xff]
        %v395 = vld [vmem:[%s324 + $0x68] sm:$0xff]
        %v396 = vld [vmem:[%s324 + $0x70] sm:$0xff]
        %v397 = vld [vmem:[%s324 + $0x78] sm:$0xff]
        %v398 = vld [vmem:[%s324 + $0x80] sm:$0xff]
        %v399 = vld [vmem:[%s324 + $0x88] sm:$0xff]
        %v400 = vld [vmem:[%s324 + $0x90] sm:$0xff]
        %v401 = vld [vmem:[%s324 + $0x98] sm:$0xff]
        %v402 = vld [vmem:[%s324 + $0xa0] sm:$0xff]
        %v403 = vld [vmem:[%s324 + $0xa8] sm:$0xff]
        %v404 = vld [vmem:[%s324 + $0xb0] sm:$0xff]
        %v405 = vld [vmem:[%s324 + $0xb8] sm:$0xff]
        %v406 = vld [vmem:[%s324 + $0xc0] sm:$0xff]
        %v407 = vld [vmem:[%s324 + $0xc8] sm:$0xff]
        %v408 = vld [vmem:[%s324 + $0xd0] sm:$0xff]
        %v409 = vld [vmem:[%s324 + $0xd8] sm:$0xff]
        %v410 = vld [vmem:[%s324 + $0xe0] sm:$0xff]
        %v411 = vld [vmem:[%s324 + $0xe8] sm:$0xff]
        %v412 = vld [vmem:[%s324 + $0xf0] sm:$0xff]
        %v413 = vld [vmem:[%s324 + $0xf8] sm:$0xff]
        %v416 = vunpack.c.l.b16 %v380
        %v417 = vunpack.c.h.b16 %v380
        %v418 = vunpack.c.l.b16 %v381
        %v419 = vunpack.c.h.b16 %v381
        %v420 = vpack.c.b16 %v418, %v416
        %v421 = vpack.c.b16 %v419, %v417
        %v456 = vunpack.c.l.b16 %v382
        %v457 = vunpack.c.h.b16 %v382
        %v458 = vunpack.c.l.b16 %v383
        %v459 = vunpack.c.h.b16 %v383
        %v460 = vunpack.c.l.b16 %v384
        %v461 = vunpack.c.h.b16 %v384
        %v462 = vunpack.c.l.b16 %v385
        %v463 = vunpack.c.h.b16 %v385
        %v464 = vunpack.c.l.b16 %v386
        %v465 = vunpack.c.h.b16 %v386
        %v466 = vunpack.c.l.b16 %v387
        %v467 = vunpack.c.h.b16 %v387
        %v468 = vunpack.c.l.b16 %v388
        %v469 = vunpack.c.h.b16 %v388
        %v470 = vunpack.c.l.b16 %v389
        %v471 = vunpack.c.h.b16 %v389
        %v472 = vunpack.c.l.b16 %v390
        %v473 = vunpack.c.h.b16 %v390
        %v474 = vunpack.c.l.b16 %v391
        %v475 = vunpack.c.h.b16 %v391
        %v476 = vunpack.c.l.b16 %v392
        %v477 = vunpack.c.h.b16 %v392
        %v478 = vunpack.c.l.b16 %v393
        %v479 = vunpack.c.h.b16 %v393
        %v480 = vunpack.c.l.b16 %v394
        %v481 = vunpack.c.h.b16 %v394
        %v482 = vunpack.c.l.b16 %v395
        %v483 = vunpack.c.h.b16 %v395
        %v484 = vunpack.c.l.b16 %v396
        %v485 = vunpack.c.h.b16 %v396
        %v486 = vunpack.c.l.b16 %v397
        %v487 = vunpack.c.h.b16 %v397
        %v488 = vunpack.c.l.b16 %v398
        %v489 = vunpack.c.h.b16 %v398
        %v490 = vunpack.c.l.b16 %v399
        %v491 = vunpack.c.h.b16 %v399
        %v492 = vunpack.c.l.b16 %v400
        %v493 = vunpack.c.h.b16 %v400
        %v494 = vunpack.c.l.b16 %v401
        %v495 = vunpack.c.h.b16 %v401
        %v496 = vunpack.c.l.b16 %v402
        %v497 = vunpack.c.h.b16 %v402
        %v498 = vunpack.c.l.b16 %v403
        %v499 = vunpack.c.h.b16 %v403
        %v500 = vunpack.c.l.b16 %v404
        %v501 = vunpack.c.h.b16 %v404
        %v502 = vunpack.c.l.b16 %v405
        %v503 = vunpack.c.h.b16 %v405
        %v504 = vunpack.c.l.b16 %v406
        %v505 = vunpack.c.h.b16 %v406
        %v506 = vunpack.c.l.b16 %v407
        %v507 = vunpack.c.h.b16 %v407
        %v508 = vunpack.c.l.b16 %v408
        %v509 = vunpack.c.h.b16 %v408
        %v510 = vunpack.c.l.b16 %v409
        %v511 = vunpack.c.h.b16 %v409
        %v512 = vunpack.c.l.b16 %v410
        %v513 = vunpack.c.h.b16 %v410
        %v514 = vunpack.c.l.b16 %v411
        %v515 = vunpack.c.h.b16 %v411
        %v516 = vunpack.c.l.b16 %v412
        %v517 = vunpack.c.h.b16 %v412
        %v518 = vunpack.c.l.b16 %v413
        %v519 = vunpack.c.h.b16 %v413
        %v520 = vpack.c.b16 %v458, %v456
        %v521 = vpack.c.b16 %v459, %v457
        %v522 = vpack.c.b16 %v462, %v460
        %v523 = vpack.c.b16 %v463, %v461
        %v524 = vpack.c.b16 %v466, %v464
        %v525 = vpack.c.b16 %v467, %v465
        %v526 = vpack.c.b16 %v470, %v468
        %v527 = vpack.c.b16 %v471, %v469
        %v528 = vpack.c.b16 %v474, %v472
        %v529 = vpack.c.b16 %v475, %v473
        %v530 = vpack.c.b16 %v478, %v476
        %v531 = vpack.c.b16 %v479, %v477
        %v532 = vpack.c.b16 %v482, %v480
        %v533 = vpack.c.b16 %v483, %v481
        %v534 = vpack.c.b16 %v486, %v484
        %v535 = vpack.c.b16 %v487, %v485
        %v536 = vpack.c.b16 %v490, %v488
        %v537 = vpack.c.b16 %v491, %v489
        %v538 = vpack.c.b16 %v494, %v492
        %v539 = vpack.c.b16 %v495, %v493
        %v540 = vpack.c.b16 %v498, %v496
        %v541 = vpack.c.b16 %v499, %v497
        %v542 = vpack.c.b16 %v502, %v500
        %v543 = vpack.c.b16 %v503, %v501
        %v544 = vpack.c.b16 %v506, %v504
        %v545 = vpack.c.b16 %v507, %v505
        %v546 = vpack.c.b16 %v510, %v508
        %v547 = vpack.c.b16 %v511, %v509
        %v548 = vpack.c.b16 %v514, %v512
        %v549 = vpack.c.b16 %v515, %v513
        %v550 = vpack.c.b16 %v518, %v516
        %v551 = vpack.c.b16 %v519, %v517
        %584 = vmatprep.subr.bf16.mxu0 %v521
        %585 = vmatpush1.bf16.msra.mxu0 %v520
        %586 = vmatprep.subr.bf16.mxu0 %v523
        %587 = vmatpush1.bf16.msra.mxu0 %v522
        %588 = vmatprep.subr.bf16.mxu0 %v525
        %589 = vmatpush1.bf16.msra.mxu0 %v524
        %590 = vmatprep.subr.bf16.mxu0 %v527
        %591 = vmatpush1.bf16.msra.mxu0 %v526
        %592 = vmatprep.subr.bf16.mxu0 %v529
        %593 = vmatpush1.bf16.msra.mxu0 %v528
        %594 = vmatprep.subr.bf16.mxu0 %v531
        %595 = vmatpush1.bf16.msra.mxu0 %v530
        %596 = vmatprep.subr.bf16.mxu0 %v533
        %597 = vmatpush1.bf16.msra.mxu0 %v532
        %598 = vmatprep.subr.bf16.mxu0 %v535
        %599 = vmatpush1.bf16.msra.mxu0 %v534
        %600 = vmatprep.subr.bf16.mxu0 %v537
        %601 = vmatpush1.bf16.msra.mxu0 %v536
        %602 = vmatprep.subr.bf16.mxu0 %v539
        %603 = vmatpush1.bf16.msra.mxu0 %v538
        %604 = vmatprep.subr.bf16.mxu0 %v541
        %605 = vmatpush1.bf16.msra.mxu0 %v540
        %606 = vmatprep.subr.bf16.mxu0 %v543
        %607 = vmatpush1.bf16.msra.mxu0 %v542
        %608 = vmatprep.subr.bf16.mxu0 %v545
        %609 = vmatpush1.bf16.msra.mxu0 %v544
        %610 = vmatprep.subr.bf16.mxu0 %v547
        %611 = vmatpush1.bf16.msra.mxu0 %v546
        %612 = vmatprep.subr.bf16.mxu0 %v549
        %613 = vmatpush1.bf16.msra.mxu0 %v548
        %614 = vmatprep.subr.bf16.mxu0 %v551
        %615 = vmatpush1.bf16.msra.mxu0 %v550
        %616 = vmatprep.mubr.bf16.mxu0 %v421
        %617 = vmatmul.mubr.bf16.gmra.mrb[0].mxu0 %v420
        %v618 = vpop.f32.mrb[0].mxu0
        %v619 = vadd.f32 0.0, %v618
        %v620 = vpop.f32.mrb[0].mxu0
        %v621 = vadd.f32 0.0, %v620
        %v622 = vpop.f32.mrb[0].mxu0
        %v623 = vadd.f32 0.0, %v622
        %v624 = vpop.f32.mrb[0].mxu0
        %v625 = vadd.f32 0.0, %v624
        %626 = vdwg.mxu0
        %v627 = vadd.f32 %v376, %v619
        %v628 = vadd.f32 %v377, %v621
        %v629 = vadd.f32 %v378, %v623
        %v630 = vadd.f32 %v379, %v625
        %631 = vst [vmem:[#allocation2] sm:$0xff] %v627
        %632 = vst [vmem:[#allocation2 + $0x8] sm:$0xff] %v628
        %633 = vst [vmem:[#allocation2 + $0x10] sm:$0xff] %v629
        %634 = vst [vmem:[#allocation2 + $0x18] sm:$0xff] %v630
        // Predicated region
        $region71: #{cam_forward.6} parent=61 // pred_check
          %p635 = pneg %p368
        $region72: #{cam_forward.6} parent=61 // pred_check_branch
          %637 = sbr.rel (%p635) target = $region74
        $region73: #{cam_forward.6} parent=61 // pred_region
          %v638 = vld [vmem:[#allocation2] sm:$0xff]
          %v639 = vld [vmem:[#allocation2 + $0x8] sm:$0xff]
          %v640 = vld [vmem:[#allocation2 + $0x10] sm:$0xff]
          %v641 = vld [vmem:[#allocation2 + $0x18] sm:$0xff]
          %642 = vst [vmem:[%s351] sm:$0xff] %v638
          %643 = vst [vmem:[%s351 + $0x8] sm:$0xff] %v639
          %644 = vst [vmem:[%s351 + $0x10] sm:$0xff] %v640
          %645 = vst [vmem:[%s351 + $0x18] sm:$0xff] %v641
        $region74: #{cam_forward.6} parent=61 // pred_fallthru
          _
        %s646 = sand.u32 %s98, 1
        %s647 = sand.u32 %s98, 1
        %s648 = smul.addr %s647, 32
        %s649 = scalar_lea.vmem [#allocation4], %s648
        // Predicated region
        $region75: #{cam_forward.6} parent=61 // pred_check
          %p650 = pneg %p108
        $region76: #{cam_forward.6} parent=61 // pred_check_branch
          %652 = sbr.rel (%p650) target = $region78
        $region77: #{cam_forward.6} parent=61 // pred_region
          %s653 = smul.u32 2, %s18
          %s654 = smul.u32 2, %s19
          %s655 = smul.addr %s653, 6
          %s656 = sadd.s32 %s654, %s655
          %s657 = smul.addr %s656, 8
          %s658 = scalar_lea.vmem %s2, %s657
          // Predicated region
          $region79: #{cam_forward.6} parent=77 // pred_check
            _
          $region80: #{cam_forward.6} parent=77 // pred_check_branch
            %660 = sbr.rel (0) target = $region82
          $region81: #{cam_forward.6} parent=77 // pred_region
            // Predicated region
            $region83: #{cam_forward.6} parent=81 // pred_check
              _
            $region84: #{cam_forward.6} parent=81 // pred_check_branch
              %662 = sbr.rel (0) target = $region86
            $region85: #{cam_forward.6} parent=81 // pred_region
              loop: start=0, step=1, limit=1
              $region87: #{cam_forward.6} parent=85 // loop_pre_header
                _
              $region88: #{cam_forward.6} parent=85 // loop_header
                %s664 = sphi 0, %s668
                %p665 = scmp.ge.s32.totalorder %s664, 1
                %s669 = sphi %s649, %s649
                %s670 = sphi %s658, %s658
              $region89: #{cam_forward.6} parent=85 // loop_header_branch
                %667 = sbr.rel (%p665) target = $region93
              $region90: #{cam_forward.6} parent=85 // loop_body
                %v671 = vld [vmem:[%s669] sm:$0xff]
                %672 = vst [vmem:[%s670] sm:$0xff] %v671
                %v673 = vld [vmem:[%s669 + $0x8] sm:$0xff]
                %674 = vst [vmem:[%s670 + $0x8] sm:$0xff] %v673
                %v675 = vld [vmem:[%s669 + $0x10] sm:$0xff]
                %676 = vst [vmem:[%s670 + $0x30] sm:$0xff] %v675
                %v677 = vld [vmem:[%s669 + $0x18] sm:$0xff]
                %678 = vst [vmem:[%s670 + $0x38] sm:$0xff] %v677
              $region91: #{cam_forward.6} parent=85 // loop_footer
                %s668 = sadd.s32 1, %s664
              $region92: #{cam_forward.6} parent=85 // loop_footer_branch
                %663 = sbr.rel target = $region88
              $region93: #{cam_forward.6} parent=85 // loop_exit
                _
            $region86: #{cam_forward.6} parent=81 // pred_fallthru
              _
            // Predicated region
            $region94: #{cam_forward.6} parent=81 // pred_check
              _
            $region95: #{cam_forward.6} parent=81 // pred_check_branch
              %680 = sbr.rel target = $region97
            $region96: #{cam_forward.6} parent=81 // pred_region
              _
            $region97: #{cam_forward.6} parent=81 // pred_fallthru
              _
          $region82: #{cam_forward.6} parent=77 // pred_fallthru
            _
          %681 = vnop
        $region78: #{cam_forward.6} parent=61 // pred_fallthru
          _
      $region62: #{cam_forward.6} parent=5 // pred_fallthru
        _
      %p682 = scmp.le.s32.totalorder 2, %s8
      // Predicated region
      $region98: #{cam_forward.6} parent=5 // pred_check
        %p683 = pneg %p682
      $region99: #{cam_forward.6} parent=5 // pred_check_branch
        %685 = sbr.rel (%p683) target = $region101
      $region100: #{cam_forward.6} parent=5 // pred_region
        %s686 = ssub.s32 %s8, 2
        // Predicated region
        $region102: #{cam_forward.6} parent=100 // pred_check
          %p687 = pneg %p114
        $region103: #{cam_forward.6} parent=100 // pred_check_branch
          %689 = sbr.rel (%p687) target = $region105
        $region104: #{cam_forward.6} parent=100 // pred_region
          %s690 = sand.u32 %s99, 1
          %s691 = sand.u32 %s99, 1
          %s692 = smul.addr %s691, 32
          %s693 = scalar_lea.vmem [#allocation4], %s692
        $region105: #{cam_forward.6} parent=100 // pred_fallthru
          _
      $region101: #{cam_forward.6} parent=5 // pred_fallthru
        _
    $region6: #{cam_forward.6} parent=1 // loop_footer
      %s12 = sadd.s32 1, %s8
    $region7: #{cam_forward.6} parent=1 // loop_footer_branch
      %7 = sbr.rel target = $region3
    $region8: #{cam_forward.6} parent=1 // loop_exit
      _

// kernel: sub.11
$region0: #{sub.11}
  %s0 = inlined_call_operand.vmem [shape: f32[2,4,4], index: 0, kind: input, shape index: {}]
  %s1 = inlined_call_operand.vmem [shape: f32[2,16], index: 1, kind: output, shape index: {}]
  $region1: #{sub.11} parent=0
    #allocation0 [shape = 'u8[4096]{0}', space=vmem, size = 0x1000, scoped, tag = 'scoped mem for output reshape']
    #allocation1 [shape = 'u8[8192]{0}', space=vmem, size = 0x2000, scoped, tag = 'scoped mem for input reshape']
    %s3 = sshllo.u32 0, 4
    %s4 = scalar_lea.vmem %s0, 4
    %v5 = vld [vmem:[%s4] sm:%s3]
    %s6 = scalar_lea.vmem [#allocation1], 8
    %7 = vst [vmem:[%s6] sm:%s3] %v5
    %v8 = vld [vmem:[%s0] sm:%s3]
    %9 = vst [vmem:[#allocation1] sm:%s3] %v8
    %s10 = smov 3
    %v11 = vld [vmem:[#allocation1] ss:$8 sm:%s10]
    %vm12 = vcmask 31744
    %13 = vst.msk [vmem:[#allocation0] sm:$0x3] %vm12, %v11
    %s14 = scalar_lea.vmem [#allocation1], 3
    %s15 = smov 3
    %v16 = vld [vmem:[%s14] ss:$8 sm:%s15]
    %17 = vrot.lane.b32.xlu0 %v16, 12
    %v18 = vpop.permute.xlu0 %17
    %vm19 = vcmask 130144
    %20 = vst.msk [vmem:[#allocation0] sm:$0x3] %vm19, %v18
    %s21 = scalar_lea.vmem [#allocation1], 2
    %s22 = smov 3
    %v23 = vld [vmem:[%s21] ss:$8 sm:%s22]
    %24 = vrot.lane.b32.xlu0 %v23, 8
    %v25 = vpop.permute.xlu0 %24
    %vm26 = vcmask 97344
    %27 = vst.msk [vmem:[#allocation0] sm:$0x3] %vm26, %v25
    %s28 = scalar_lea.vmem [#allocation1], 1
    %s29 = smov 3
    %v30 = vld [vmem:[%s28] ss:$8 sm:%s29]
    %31 = vrot.lane.b32.xlu0 %v30, 4
    %v32 = vpop.permute.xlu0 %31
    %vm33 = vcmask 64544
    %34 = vst.msk [vmem:[#allocation0] sm:$0x3] %vm33, %v32
    %s36 = sshllo.u32 0, 2
    %v38 = vld [vmem:[#allocation0] sm:%s36]
    %s39 = sshllo.u32 0, 2
    %40 = vst [vmem:[%s1] sm:%s39] %v38

// kernel: cam_forward.9
$region0: #{cam_forward.9}
  #allocation0 [shape = 'u32[]', space=smem, size = 0x4, offset = 0x4, fixed_abs, tag = 'smem constant byte address 0x4 - core index']
  #allocation1 [shape = 'u32[144,128]{1,0:T(1,128)}', space=vmem, size = 0x12000, scoped, tag = 'internal scratch']
  %s0 = inlined_call_operand.vmem [shape: bf16[16,128], index: 0, kind: input, shape index: {}]
  %s1 = inlined_call_operand.vmem [shape: f32[16,16], index: 1, kind: input, shape index: {}]
  %s2 = inlined_call_operand.vmem [shape: f32[16,16], index: 2, kind: input, shape index: {}]
  %s3 = inlined_call_operand.vmem [shape: f32[16,128], index: 3, kind: output, shape index: {}]
  %s4 = sld [smem:[#allocation0]]
  $region22: #{cam_forward.9} parent=0
    _
  %s6 = ssub.s32 1, %s4
  %s7 = scalar_select 0, %s6, %s4
  // Predicated region
  $region2: #{cam_forward.9} parent=0 // pred_check
    _
  $region3: #{cam_forward.9} parent=0 // pred_check_branch
    %9 = sbr.rel (0) target = $region5
  $region4: #{cam_forward.9} parent=0 // pred_region
    _
  $region5: #{cam_forward.9} parent=0 // pred_fallthru
    _
  // Predicated region
  $region6: #{cam_forward.9} parent=0 // pred_check
    _
  $region7: #{cam_forward.9} parent=0 // pred_check_branch
    %11 = sbr.rel (0) target = $region9
  $region8: #{cam_forward.9} parent=0 // pred_region
    _
  $region9: #{cam_forward.9} parent=0 // pred_fallthru
    _
  // Predicated region
  $region10: #{cam_forward.9} parent=0 // pred_check
    _
  $region11: #{cam_forward.9} parent=0 // pred_check_branch
    %13 = sbr.rel (0) target = $region13
  $region12: #{cam_forward.9} parent=0 // pred_region
    _
  $region13: #{cam_forward.9} parent=0 // pred_fallthru
    _
  %v15 = vld [vmem:[%s1] sm:$0xff]
  %v16 = vld [vmem:[%s1 + $0x8] sm:$0xff]
  %vm17 = vcmp.ge.f32.partialorder %v15, 0.5
  %vm18 = vcmp.ge.f32.partialorder %v16, 0.5
  %v19 = vsel %vm17, %v15, 0.0
  %v20 = vsel %vm18, %v16, 0.0
  %v21 = vld [vmem:[%s2] sm:$0xff]
  %v22 = vld [vmem:[%s2 + $0x8] sm:$0xff]
  %v23 = vmul.f32 %v19, %v21
  %v24 = vmul.f32 %v20, %v22
  %vm25 = vcmask 130048
  %v26 = vsel %vm25, %v23, 0.0
  %v27 = vsel %vm25, %v24, 0.0
  %v28 = vadd.f32 %v26, %v27
  %v29 = vrot.slane %v28, 4
  %v30 = vadd.f32 %v28, %v29
  %v31 = vrot.slane %v30, 2
  %v32 = vadd.f32 %v30, %v31
  %v33 = vrot.slane %v32, 1
  %v34 = vadd.f32 %v32, %v33
  %v35 = vadd.f32 %v34, 1e-05
  %v36 = vrcp.pop %v35
  %v37 = vmul.f32 %v23, %v36
  %v38 = vmul.f32 %v24, %v36
  %v39 = vpack.c.bf16 %v38, %v37
  %40 = vxpose.xlu0.c.b16.start [1/8] %v39, 128
  %41 = vxpose.xlu0.c.b16.cont [2/8] 0, 128
  %42 = vxpose.xlu0.c.b16.cont [3/8] 0, 128
  %43 = vxpose.xlu0.c.b16.cont [4/8] 0, 128
  %44 = vxpose.xlu0.c.b16.cont [5/8] 0, 128
  %45 = vxpose.xlu0.c.b16.cont [6/8] 0, 128
  %46 = vxpose.xlu0.c.b16.cont [7/8] 0, 128
  %47 = vxpose.xlu0.c.b16.end [8/8] 0, 128
  %v48 = vpop.trf.xlu0
  %v49 = vpop.trf.xlu0
  %v50 = vpop.trf.xlu0
  %v51 = vpop.trf.xlu0
  %v52 = vpop.trf.xlu0
  %v53 = vpop.trf.xlu0
  %v54 = vpop.trf.xlu0
  %v55 = vpop.trf.xlu0
  %v56 = vld [vmem:[%s0] sm:$0xf]
  %v57 = vld [vmem:[%s0 + $0x4] sm:$0xf]
  %v60 = vunpack.c.l.b16 %v56
  %v61 = vunpack.c.l.b16 %v57
  %v62 = vpack.c.b16 %v61, %v60
  %v65 = vsel %vm25, %v48, 0
  %67 = vmatprep.subr.bf16.mxu0 0
  %68 = vmatpush1.bf16.msra.mxu0 %v62
  %69 = vmatprep.subr.bf16.mxu0 0
  %70 = vmatpush1.bf16.msra.mxu0 0
  %71 = vmatprep.subr.bf16.mxu0 0
  %72 = vmatpush1.bf16.msra.mxu0 0
  %73 = vmatprep.subr.bf16.mxu0 0
  %74 = vmatpush1.bf16.msra.mxu0 0
  %75 = vmatprep.subr.bf16.mxu0 0
  %76 = vmatpush1.bf16.msra.mxu0 0
  %77 = vmatprep.subr.bf16.mxu0 0
  %78 = vmatpush1.bf16.msra.mxu0 0
  %79 = vmatprep.subr.bf16.mxu0 0
  %80 = vmatpush1.bf16.msra.mxu0 0
  %81 = vmatprep.subr.bf16.mxu0 0
  %82 = vmatpush1.bf16.msra.mxu0 0
  %83 = vmatprep.subr.bf16.mxu0 0
  %84 = vmatpush1.bf16.msra.mxu0 0
  %85 = vmatprep.subr.bf16.mxu0 0
  %86 = vmatpush1.bf16.msra.mxu0 0
  %87 = vmatprep.subr.bf16.mxu0 0
  %88 = vmatpush1.bf16.msra.mxu0 0
  %89 = vmatprep.subr.bf16.mxu0 0
  %90 = vmatpush1.bf16.msra.mxu0 0
  %91 = vmatprep.subr.bf16.mxu0 0
  %92 = vmatpush1.bf16.msra.mxu0 0
  %93 = vmatprep.subr.bf16.mxu0 0
  %94 = vmatpush1.bf16.msra.mxu0 0
  %95 = vmatprep.subr.bf16.mxu0 0
  %96 = vmatpush1.bf16.msra.mxu0 0
  %97 = vmatprep.subr.bf16.mxu0 0
  %98 = vmatpush1.bf16.msra.mxu0 0
  %99 = vmatprep.mubr.bf16.mxu0 0
  %100 = vmatmul.mubr.bf16.gmra.mrb[0].mxu0 %v65
  %v101 = vpop.f32.mrb[0].mxu0
  %v102 = vadd.f32 0.0, %v101
  %v103 = vpop.f32.mrb[0].mxu0
  %v104 = vpop.f32.mrb[0].mxu0
  %v105 = vadd.f32 0.0, %v104
  %v106 = vpop.f32.mrb[0].mxu0
  %107 = vdwg.mxu0
  %v108 = vmax.f32 %v102, 0.0
  %v109 = vmax.f32 %v105, 0.0
  %110 = vst [vmem:[%s3] sm:$0xff] %v108
  %111 = vst [vmem:[%s3 + $0x8] sm:$0xff] %v109
  // Predicated region
  $region14: #{cam_forward.9} parent=0 // pred_check
    _
  $region15: #{cam_forward.9} parent=0 // pred_check_branch
    %113 = sbr.rel (0) target = $region17
  $region16: #{cam_forward.9} parent=0 // pred_region
    _
  $region17: #{cam_forward.9} parent=0 // pred_fallthru
    _
  // Predicated region
  $region18: #{cam_forward.9} parent=0 // pred_check
    _
  $region19: #{cam_forward.9} parent=0 // pred_check_branch
    %115 = sbr.rel (0) target = $region21
  $region20: #{cam_forward.9} parent=0 // pred_region
    _
  $region21: #{cam_forward.9} parent=0 // pred_fallthru
    _

// kernel: cam_forward.8
$region0: #{cam_forward.8}
  #allocation0 [shape = 'u32[]', space=smem, size = 0x4, offset = 0x4, fixed_abs, tag = 'smem constant byte address 0x4 - core index']
  #allocation1 [shape = 'u32[144,128]{1,0:T(1,128)}', space=vmem, size = 0x12000, scoped, tag = 'internal scratch']
  #allocation2 [shape = 'f32[32,128]{1,0:T(8,128)}', space=vmem, size = 0x4000, scoped, tag = 'scratch operand']
  %s0 = inlined_call_operand.vmem [shape: bf16[32,256], index: 0, kind: input, shape index: {}]
  %s1 = inlined_call_operand.vmem [shape: bf16[256,128], index: 1, kind: input, shape index: {}]
  %s2 = inlined_call_operand.vmem [shape: f32[32,128], index: 2, kind: output, shape index: {}]
  %s3 = sld [smem:[#allocation0]]
  $region26: #{cam_forward.8} parent=0
    _
  %s5 = ssub.s32 1, %s3
  %s6 = scalar_select 0, %s5, %s3
  // Predicated region
  $region2: #{cam_forward.8} parent=0 // pred_check
    _
  $region3: #{cam_forward.8} parent=0 // pred_check_branch
    %8 = sbr.rel (0) target = $region5
  $region4: #{cam_forward.8} parent=0 // pred_region
    _
  $region5: #{cam_forward.8} parent=0 // pred_fallthru
    _
  // Predicated region
  $region6: #{cam_forward.8} parent=0 // pred_check
    _
  $region7: #{cam_forward.8} parent=0 // pred_check_branch
    %10 = sbr.rel (0) target = $region9
  $region8: #{cam_forward.8} parent=0 // pred_region
    _
  $region9: #{cam_forward.8} parent=0 // pred_fallthru
    _
  %p12 = scmp.eq.s32.totalorder 0, 0
  // Predicated region
  $region10: #{cam_forward.8} parent=0 // pred_check
    %p13 = pneg %p12
  $region11: #{cam_forward.8} parent=0 // pred_check_branch
    %15 = sbr.rel (%p13) target = $region13
  $region12: #{cam_forward.8} parent=0 // pred_region
    %16 = vst [vmem:[#allocation2] sm:$0xff] 0.0
    %17 = vst [vmem:[#allocation2 + $0x8] sm:$0xff] 0.0
    %18 = vst [vmem:[#allocation2 + $0x10] sm:$0xff] 0.0
    %19 = vst [vmem:[#allocation2 + $0x18] sm:$0xff] 0.0
  $region13: #{cam_forward.8} parent=0 // pred_fallthru
    _
  %v20 = vld [vmem:[#allocation2] sm:$0xff]
  %v21 = vld [vmem:[#allocation2 + $0x8] sm:$0xff]
  %v22 = vld [vmem:[#allocation2 + $0x10] sm:$0xff]
  %v23 = vld [vmem:[#allocation2 + $0x18] sm:$0xff]
  %v24 = vld [vmem:[%s0] sm:$0xff]
  %v25 = vld [vmem:[%s0 + $0x8] sm:$0xff]
  %v26 = vld [vmem:[%s0 + $0x10] sm:$0xff]
  %v27 = vld [vmem:[%s0 + $0x18] sm:$0xff]
  %v28 = vld [vmem:[%s1] sm:$0xf]
  %v29 = vld [vmem:[%s1 + $0x4] sm:$0xf]
  %v30 = vld [vmem:[%s1 + $0x8] sm:$0xf]
  %v31 = vld [vmem:[%s1 + $0xc] sm:$0xf]
  %v32 = vld [vmem:[%s1 + $0x10] sm:$0xf]
  %v33 = vld [vmem:[%s1 + $0x14] sm:$0xf]
  %v34 = vld [vmem:[%s1 + $0x18] sm:$0xf]
  %v35 = vld [vmem:[%s1 + $0x1c] sm:$0xf]
  %v36 = vld [vmem:[%s1 + $0x20] sm:$0xf]
  %v37 = vld [vmem:[%s1 + $0x24] sm:$0xf]
  %v38 = vld [vmem:[%s1 + $0x28] sm:$0xf]
  %v39 = vld [vmem:[%s1 + $0x2c] sm:$0xf]
  %v40 = vld [vmem:[%s1 + $0x30] sm:$0xf]
  %v41 = vld [vmem:[%s1 + $0x34] sm:$0xf]
  %v42 = vld [vmem:[%s1 + $0x38] sm:$0xf]
  %v43 = vld [vmem:[%s1 + $0x3c] sm:$0xf]
  %v44 = vld [vmem:[%s1 + $0x40] sm:$0xf]
  %v45 = vld [vmem:[%s1 + $0x44] sm:$0xf]
  %v46 = vld [vmem:[%s1 + $0x48] sm:$0xf]
  %v47 = vld [vmem:[%s1 + $0x4c] sm:$0xf]
  %v48 = vld [vmem:[%s1 + $0x50] sm:$0xf]
  %v49 = vld [vmem:[%s1 + $0x54] sm:$0xf]
  %v50 = vld [vmem:[%s1 + $0x58] sm:$0xf]
  %v51 = vld [vmem:[%s1 + $0x5c] sm:$0xf]
  %v52 = vld [vmem:[%s1 + $0x60] sm:$0xf]
  %v53 = vld [vmem:[%s1 + $0x64] sm:$0xf]
  %v54 = vld [vmem:[%s1 + $0x68] sm:$0xf]
  %v55 = vld [vmem:[%s1 + $0x6c] sm:$0xf]
  %v56 = vld [vmem:[%s1 + $0x70] sm:$0xf]
  %v57 = vld [vmem:[%s1 + $0x74] sm:$0xf]
  %v58 = vld [vmem:[%s1 + $0x78] sm:$0xf]
  %v59 = vld [vmem:[%s1 + $0x7c] sm:$0xf]
  %v64 = vunpack.c.l.b16 %v24
  %v65 = vunpack.c.h.b16 %v24
  %v66 = vunpack.c.l.b16 %v25
  %v67 = vunpack.c.h.b16 %v25
  %v68 = vunpack.c.l.b16 %v26
  %v69 = vunpack.c.h.b16 %v26
  %v70 = vunpack.c.l.b16 %v27
  %v71 = vunpack.c.h.b16 %v27
  %v72 = vpack.c.b16 %v66, %v64
  %v73 = vpack.c.b16 %v67, %v65
  %v74 = vpack.c.b16 %v70, %v68
  %v75 = vpack.c.b16 %v71, %v69
  %v112 = vunpack.c.l.b16 %v28
  %v113 = vunpack.c.l.b16 %v29
  %v114 = vunpack.c.l.b16 %v30
  %v115 = vunpack.c.l.b16 %v31
  %v116 = vunpack.c.l.b16 %v32
  %v117 = vunpack.c.l.b16 %v33
  %v118 = vunpack.c.l.b16 %v34
  %v119 = vunpack.c.l.b16 %v35
  %v120 = vunpack.c.l.b16 %v36
  %v121 = vunpack.c.l.b16 %v37
  %v122 = vunpack.c.l.b16 %v38
  %v123 = vunpack.c.l.b16 %v39
  %v124 = vunpack.c.l.b16 %v40
  %v125 = vunpack.c.l.b16 %v41
  %v126 = vunpack.c.l.b16 %v42
  %v127 = vunpack.c.l.b16 %v43
  %v128 = vunpack.c.l.b16 %v44
  %v129 = vunpack.c.l.b16 %v45
  %v130 = vunpack.c.l.b16 %v46
  %v131 = vunpack.c.l.b16 %v47
  %v132 = vunpack.c.l.b16 %v48
  %v133 = vunpack.c.l.b16 %v49
  %v134 = vunpack.c.l.b16 %v50
  %v135 = vunpack.c.l.b16 %v51
  %v136 = vunpack.c.l.b16 %v52
  %v137 = vunpack.c.l.b16 %v53
  %v138 = vunpack.c.l.b16 %v54
  %v139 = vunpack.c.l.b16 %v55
  %v140 = vunpack.c.l.b16 %v56
  %v141 = vunpack.c.l.b16 %v57
  %v142 = vunpack.c.l.b16 %v58
  %v143 = vunpack.c.l.b16 %v59
  %v144 = vpack.c.b16 %v113, %v112
  %v145 = vpack.c.b16 %v115, %v114
  %v146 = vpack.c.b16 %v117, %v116
  %v147 = vpack.c.b16 %v119, %v118
  %v148 = vpack.c.b16 %v121, %v120
  %v149 = vpack.c.b16 %v123, %v122
  %v150 = vpack.c.b16 %v125, %v124
  %v151 = vpack.c.b16 %v127, %v126
  %v152 = vpack.c.b16 %v129, %v128
  %v153 = vpack.c.b16 %v131, %v130
  %v154 = vpack.c.b16 %v133, %v132
  %v155 = vpack.c.b16 %v135, %v134
  %v156 = vpack.c.b16 %v137, %v136
  %v157 = vpack.c.b16 %v139, %v138
  %v158 = vpack.c.b16 %v141, %v140
  %v159 = vpack.c.b16 %v143, %v142
  %176 = vmatprep.subr.bf16.mxu0 0
  %177 = vmatpush1.bf16.msra.mxu0 %v144
  %178 = vmatprep.subr.bf16.mxu0 0
  %179 = vmatpush1.bf16.msra.mxu0 %v145
  %180 = vmatprep.subr.bf16.mxu0 0
  %181 = vmatpush1.bf16.msra.mxu0 %v146
  %182 = vmatprep.subr.bf16.mxu0 0
  %183 = vmatpush1.bf16.msra.mxu0 %v147
  %184 = vmatprep.subr.bf16.mxu0 0
  %185 = vmatpush1.bf16.msra.mxu0 %v148
  %186 = vmatprep.subr.bf16.mxu0 0
  %187 = vmatpush1.bf16.msra.mxu0 %v149
  %188 = vmatprep.subr.bf16.mxu0 0
  %189 = vmatpush1.bf16.msra.mxu0 %v150
  %190 = vmatprep.subr.bf16.mxu0 0
  %191 = vmatpush1.bf16.msra.mxu0 %v151
  %192 = vmatprep.subr.bf16.mxu0 0
  %193 = vmatpush1.bf16.msra.mxu0 %v152
  %194 = vmatprep.subr.bf16.mxu0 0
  %195 = vmatpush1.bf16.msra.mxu0 %v153
  %196 = vmatprep.subr.bf16.mxu0 0
  %197 = vmatpush1.bf16.msra.mxu0 %v154
  %198 = vmatprep.subr.bf16.mxu0 0
  %199 = vmatpush1.bf16.msra.mxu0 %v155
  %200 = vmatprep.subr.bf16.mxu0 0
  %201 = vmatpush1.bf16.msra.mxu0 %v156
  %202 = vmatprep.subr.bf16.mxu0 0
  %203 = vmatpush1.bf16.msra.mxu0 %v157
  %204 = vmatprep.subr.bf16.mxu0 0
  %205 = vmatpush1.bf16.msra.mxu0 %v158
  %206 = vmatprep.subr.bf16.mxu0 0
  %207 = vmatpush1.bf16.msra.mxu0 %v159
  %208 = vmatprep.mubr.bf16.mxu0 %v73
  %209 = vmatmul.mubr.bf16.gmra.mrb[0].mxu0 %v72
  %v210 = vpop.f32.mrb[0].mxu0
  %v211 = vadd.f32 0.0, %v210
  %v212 = vpop.f32.mrb[0].mxu0
  %v213 = vpop.f32.mrb[0].mxu0
  %v214 = vadd.f32 0.0, %v213
  %v215 = vpop.f32.mrb[0].mxu0
  %216 = vmatprep.mubr.bf16.mxu0 %v75
  %217 = vmatmul.mubr.bf16.gmra.mrb[0].mxu0 %v74
  %v218 = vpop.f32.mrb[0].mxu0
  %v219 = vadd.f32 0.0, %v218
  %v220 = vpop.f32.mrb[0].mxu0
  %v221 = vpop.f32.mrb[0].mxu0
  %v222 = vadd.f32 0.0, %v221
  %v223 = vpop.f32.mrb[0].mxu0
  %224 = vdwg.mxu0
  %v225 = vadd.f32 %v20, %v211
  %v226 = vadd.f32 %v21, %v214
  %v227 = vadd.f32 %v22, %v219
  %v228 = vadd.f32 %v23, %v222
  %229 = vst [vmem:[#allocation2] sm:$0xff] %v225
  %230 = vst [vmem:[#allocation2 + $0x8] sm:$0xff] %v226
  %231 = vst [vmem:[#allocation2 + $0x10] sm:$0xff] %v227
  %232 = vst [vmem:[#allocation2 + $0x18] sm:$0xff] %v228
  // Predicated region
  $region14: #{cam_forward.8} parent=0 // pred_check
    %p233 = pneg %p12
  $region15: #{cam_forward.8} parent=0 // pred_check_branch
    %235 = sbr.rel (%p233) target = $region17
  $region16: #{cam_forward.8} parent=0 // pred_region
    %v236 = vld [vmem:[#allocation2] sm:$0xff]
    %v237 = vld [vmem:[#allocation2 + $0x8] sm:$0xff]
    %v238 = vld [vmem:[#allocation2 + $0x10] sm:$0xff]
    %v239 = vld [vmem:[#allocation2 + $0x18] sm:$0xff]
    %240 = vst [vmem:[%s2] sm:$0xff] %v236
    %241 = vst [vmem:[%s2 + $0x8] sm:$0xff] %v237
    %242 = vst [vmem:[%s2 + $0x10] sm:$0xff] %v238
    %243 = vst [vmem:[%s2 + $0x18] sm:$0xff] %v239
  $region17: #{cam_forward.8} parent=0 // pred_fallthru
    _
  // Predicated region
  $region18: #{cam_forward.8} parent=0 // pred_check
    _
  $region19: #{cam_forward.8} parent=0 // pred_check_branch
    %245 = sbr.rel (0) target = $region21
  $region20: #{cam_forward.8} parent=0 // pred_region
    _
  $region21: #{cam_forward.8} parent=0 // pred_fallthru
    _
  // Predicated region
  $region22: #{cam_forward.8} parent=0 // pred_check
    _
  $region23: #{cam_forward.8} parent=0 // pred_check_branch
    %247 = sbr.rel (0) target = $region25
  $region24: #{cam_forward.8} parent=0 // pred_region
    _
  $region25: #{cam_forward.8} parent=0 // pred_fallthru
    _

// kernel: cam_forward.7
$region0: #{cam_forward.7}
  #allocation0 [shape = 'u32[]', space=smem, size = 0x4, offset = 0x4, fixed_abs, tag = 'smem constant byte address 0x4 - core index']
  #allocation1 [shape = 'u32[144,128]{1,0:T(1,128)}', space=vmem, size = 0x12000, scoped, tag = 'internal scratch']
  %s0 = inlined_call_operand.vmem [shape: bf16[8,16,32], index: 0, kind: input, shape index: {}]
  %s1 = inlined_call_operand.vmem [shape: bf16[8,16,32], index: 1, kind: input, shape index: {}]
  %s2 = inlined_call_operand.vmem [shape: bf16[8,16,32], index: 2, kind: input, shape index: {}]
  %s3 = inlined_call_operand.vmem [shape: f32[16,256], index: 3, kind: input, shape index: {}]
  %s4 = inlined_call_operand.vmem [shape: bf16[256,256], index: 4, kind: input, shape index: {}]
  %s5 = inlined_call_operand.vmem [shape: f32[16,256], index: 5, kind: output, shape index: {0}]
  %s6 = inlined_call_operand.vmem [shape: f32[16,16], index: 6, kind: output, shape index: {1}]
  %7 = xla_tuple %s5, %s6
  %s8 = sld [smem:[#allocation0]]
  $region38: #{cam_forward.7} parent=0
    _
  %s10 = ssub.s32 1, %s8
  %s11 = scalar_select 0, %s10, %s8
  // Predicated region
  $region2: #{cam_forward.7} parent=0 // pred_check
    _
  $region3: #{cam_forward.7} parent=0 // pred_check_branch
    %13 = sbr.rel (0) target = $region5
  $region4: #{cam_forward.7} parent=0 // pred_region
    _
  $region5: #{cam_forward.7} parent=0 // pred_fallthru
    _
  // Predicated region
  $region6: #{cam_forward.7} parent=0 // pred_check
    _
  $region7: #{cam_forward.7} parent=0 // pred_check_branch
    %15 = sbr.rel (0) target = $region9
  $region8: #{cam_forward.7} parent=0 // pred_region
    _
  $region9: #{cam_forward.7} parent=0 // pred_fallthru
    _
  // Predicated region
  $region10: #{cam_forward.7} parent=0 // pred_check
    _
  $region11: #{cam_forward.7} parent=0 // pred_check_branch
    %17 = sbr.rel (0) target = $region13
  $region12: #{cam_forward.7} parent=0 // pred_region
    _
  $region13: #{cam_forward.7} parent=0 // pred_fallthru
    _
  // Predicated region
  $region14: #{cam_forward.7} parent=0 // pred_check
    _
  $region15: #{cam_forward.7} parent=0 // pred_check_branch
    %19 = sbr.rel (0) target = $region17
  $region16: #{cam_forward.7} parent=0 // pred_region
    _
  $region17: #{cam_forward.7} parent=0 // pred_fallthru
    _
  // Predicated region
  $region18: #{cam_forward.7} parent=0 // pred_check
    _
  $region19: #{cam_forward.7} parent=0 // pred_check_branch
    %21 = sbr.rel (0) target = $region21
  $region20: #{cam_forward.7} parent=0 // pred_region
    _
  $region21: #{cam_forward.7} parent=0 // pred_fallthru
    _
  %v23 = vld [vmem:[%s3] sm:$0xff]
  %v24 = vld [vmem:[%s3 + $0x8] sm:$0xff]
  %v25 = vld [vmem:[%s3 + $0x10] sm:$0xff]
  %v26 = vld [vmem:[%s3 + $0x18] sm:$0xff]
  %v27 = vld [vmem:[%s0] sm:$0xf]
  %v28 = vld [vmem:[%s0 + $0x4] sm:$0xf]
  %v29 = vld [vmem:[%s1] sm:$0xf]
  %v30 = vld [vmem:[%s1 + $0x4] sm:$0xf]
  %v31 = vld [vmem:[%s2] sm:$0xf]
  %v32 = vld [vmem:[%s2 + $0x4] sm:$0xf]
  %v35 = vunpack.c.l.b16 %v27
  %v36 = vunpack.c.l.b16 %v28
  %v37 = vpack.c.b16 %v36, %v35
  %v40 = vunpack.c.l.b16 %v29
  %v41 = vunpack.c.l.b16 %v30
  %v42 = vpack.c.b16 %v41, %v40
  %vm43 = vcmask 261120
  %v45 = vsel %vm43, %v37, 0
  %v48 = vsel %vm43, %v42, 0
  %50 = vmatprep.subr.bf16.mxu0 0
  %51 = vmatpush1.bf16.xpose.msra.mxu0 %v48
  %52 = vmatprep.subr.bf16.mxu0 0
  %53 = vmatpush1.bf16.xpose.msra.mxu0 0
  %54 = vmatprep.subr.bf16.mxu0 0
  %55 = vmatpush1.bf16.xpose.msra.mxu0 0
  %56 = vmatprep.subr.bf16.mxu0 0
  %57 = vmatpush1.bf16.xpose.msra.mxu0 0
  %58 = vmatprep.subr.bf16.mxu0 0
  %59 = vmatpush1.bf16.xpose.msra.mxu0 0
  %60 = vmatprep.subr.bf16.mxu0 0
  %61 = vmatpush1.bf16.xpose.msra.mxu0 0
  %62 = vmatprep.subr.bf16.mxu0 0
  %63 = vmatpush1.bf16.xpose.msra.mxu0 0
  %64 = vmatprep.subr.bf16.mxu0 0
  %65 = vmatpush1.bf16.xpose.msra.mxu0 0
  %66 = vmatprep.subr.bf16.mxu0 0
  %67 = vmatpush1.bf16.xpose.msra.mxu0 0
  %68 = vmatprep.subr.bf16.mxu0 0
  %69 = vmatpush1.bf16.xpose.msra.mxu0 0
  %70 = vmatprep.subr.bf16.mxu0 0
  %71 = vmatpush1.bf16.xpose.msra.mxu0 0
  %72 = vmatprep.subr.bf16.mxu0 0
  %73 = vmatpush1.bf16.xpose.msra.mxu0 0
  %74 = vmatprep.subr.bf16.mxu0 0
  %75 = vmatpush1.bf16.xpose.msra.mxu0 0
  %76 = vmatprep.subr.bf16.mxu0 0
  %77 = vmatpush1.bf16.xpose.msra.mxu0 0
  %78 = vmatprep.subr.bf16.mxu0 0
  %79 = vmatpush1.bf16.xpose.msra.mxu0 0
  %80 = vmatprep.subr.bf16.mxu0 0
  %81 = vmatpush1.bf16.xpose.msra.mxu0 0
  %82 = vmatprep.mubr.bf16.mxu0 0
  %83 = vmatmul.mubr.bf16.gmra.mrb[0].mxu0 %v45
  %v84 = vpop.f32.mrb[0].mxu0
  %v85 = vadd.f32 0.0, %v84
  %v86 = vpop.f32.mrb[0].mxu0
  %v87 = vpop.f32.mrb[0].mxu0
  %v88 = vadd.f32 0.0, %v87
  %v89 = vpop.f32.mrb[0].mxu0
  %90 = vdwg.mxu0
  %v91 = vmul.f32 %v85, 0.17677669
  %v92 = vmul.f32 %v88, 0.17677669
  %vm93 = vcmask 130048
  %v94 = vsel %vm93, %v91, -inf
  %95 = vmax.xlane.f32.xlu0 %v94
  %v96 = vpop.xlane.xlu0 %95
  %v97 = vsel %vm93, %v92, -inf
  %98 = vmax.xlane.f32.xlu0 %v97
  %v99 = vpop.xlane.xlu0 %98
  %v100 = vsub.f32 %v91, %v96
  %v101 = vsub.f32 %v92, %v99
  %v102 = vmul.f32 %v100, 1.442695
  %v103 = vpow.pop %v102
  %v104 = vmul.f32 %v101, 1.442695
  %v105 = vpow.pop %v104
  %v106 = vsel %vm93, %v103, 0.0
  %107 = vadd.xlane.f32.xlu0 %v106
  %v108 = vpop.xlane.xlu0 %107
  %v109 = vsel %vm93, %v105, 0.0
  %110 = vadd.xlane.f32.xlu0 %v109
  %v111 = vpop.xlane.xlu0 %110
  %v112 = vrcp.pop %v108
  %v113 = vrcp.pop %v111
  %v114 = vmul.f32 %v103, %v112
  %v115 = vmul.f32 %v105, %v113
  %v116 = vadd.f32 %v114, 0.0
  %v117 = vadd.f32 %v115, 0.0
  %v118 = vpack.c.bf16 %v115, %v114
  %v121 = vunpack.c.l.b16 %v31
  %v122 = vunpack.c.l.b16 %v32
  %v123 = vpack.c.b16 %v122, %v121
  %v126 = vsel %vm93, %v118, 0
  %128 = vmatprep.subr.bf16.mxu0 0
  %129 = vmatpush1.bf16.msra.mxu0 %v123
  %130 = vmatprep.subr.bf16.mxu0 0
  %131 = vmatpush1.bf16.msra.mxu0 0
  %132 = vmatprep.subr.bf16.mxu0 0
  %133 = vmatpush1.bf16.msra.mxu0 0
  %134 = vmatprep.subr.bf16.mxu0 0
  %135 = vmatpush1.bf16.msra.mxu0 0
  %136 = vmatprep.subr.bf16.mxu0 0
  %137 = vmatpush1.bf16.msra.mxu0 0
  %138 = vmatprep.subr.bf16.mxu0 0
  %139 = vmatpush1.bf16.msra.mxu0 0
  %140 = vmatprep.subr.bf16.mxu0 0
  %141 = vmatpush1.bf16.msra.mxu0 0
  %142 = vmatprep.subr.bf16.mxu0 0
  %143 = vmatpush1.bf16.msra.mxu0 0
  %144 = vmatprep.subr.bf16.mxu0 0
  %145 = vmatpush1.bf16.msra.mxu0 0
  %146 = vmatprep.subr.bf16.mxu0 0
  %147 = vmatpush1.bf16.msra.mxu0 0
  %148 = vmatprep.subr.bf16.mxu0 0
  %149 = vmatpush1.bf16.msra.mxu0 0
  %150 = vmatprep.subr.bf16.mxu0 0
  %151 = vmatpush1.bf16.msra.mxu0 0
  %152 = vmatprep.subr.bf16.mxu0 0
  %153 = vmatpush1.bf16.msra.mxu0 0
  %154 = vmatprep.subr.bf16.mxu0 0
  %155 = vmatpush1.bf16.msra.mxu0 0
  %156 = vmatprep.subr.bf16.mxu0 0
  %157 = vmatpush1.bf16.msra.mxu0 0
  %158 = vmatprep.subr.bf16.mxu0 0
  %159 = vmatpush1.bf16.msra.mxu0 0
  %160 = vmatprep.mubr.bf16.mxu0 0
  %161 = vmatmul.mubr.bf16.gmra.mrb[0].mxu0 %v126
  %v162 = vpop.f32.mrb[0].mxu0
  %v163 = vadd.f32 0.0, %v162
  %v164 = vpop.f32.mrb[0].mxu0
  %v165 = vpop.f32.mrb[0].mxu0
  %v166 = vadd.f32 0.0, %v165
  %v167 = vpop.f32.mrb[0].mxu0
  %168 = vdwg.mxu0
  %v169 = vpack.c.bf16 %v166, %v163
  %v170 = vld [vmem:[%s4] sm:$0xff]
  %v171 = vld [vmem:[%s4 + $0x8] sm:$0xff]
  %v172 = vld [vmem:[%s4 + $0x10] sm:$0xff]
  %v173 = vld [vmem:[%s4 + $0x18] sm:$0xff]
  %v178 = vunpack.c.l.b16 %v170
  %v179 = vunpack.c.h.b16 %v170
  %v180 = vunpack.c.l.b16 %v171
  %v181 = vunpack.c.h.b16 %v171
  %v182 = vunpack.c.l.b16 %v172
  %v183 = vunpack.c.h.b16 %v172
  %v184 = vunpack.c.l.b16 %v173
  %v185 = vunpack.c.h.b16 %v173
  %v186 = vpack.c.b16 %v180, %v178
  %v187 = vpack.c.b16 %v181, %v179
  %v188 = vpack.c.b16 %v184, %v182
  %v189 = vpack.c.b16 %v185, %v183
  %v195 = vsel %vm43, %v169, 0
  %197 = vmatprep.subr.bf16.mxu0 %v187
  %198 = vmatpush1.bf16.msra.mxu0 %v186
  %199 = vmatprep.subr.bf16.mxu0 %v189
  %200 = vmatpush1.bf16.msra.mxu0 %v188
  %201 = vmatprep.subr.bf16.mxu0 0
  %202 = vmatpush1.bf16.msra.mxu0 0
  %203 = vmatprep.subr.bf16.mxu0 0
  %204 = vmatpush1.bf16.msra.mxu0 0
  %205 = vmatprep.subr.bf16.mxu0 0
  %206 = vmatpush1.bf16.msra.mxu0 0
  %207 = vmatprep.subr.bf16.mxu0 0
  %208 = vmatpush1.bf16.msra.mxu0 0
  %209 = vmatprep.subr.bf16.mxu0 0
  %210 = vmatpush1.bf16.msra.mxu0 0
  %211 = vmatprep.subr.bf16.mxu0 0
  %212 = vmatpush1.bf16.msra.mxu0 0
  %213 = vmatprep.subr.bf16.mxu0 0
  %214 = vmatpush1.bf16.msra.mxu0 0
  %215 = vmatprep.subr.bf16.mxu0 0
  %216 = vmatpush1.bf16.msra.mxu0 0
  %217 = vmatprep.subr.bf16.mxu0 0
  %218 = vmatpush1.bf16.msra.mxu0 0
  %219 = vmatprep.subr.bf16.mxu0 0
  %220 = vmatpush1.bf16.msra.mxu0 0
  %221 = vmatprep.subr.bf16.mxu0 0
  %222 = vmatpush1.bf16.msra.mxu0 0
  %223 = vmatprep.subr.bf16.mxu0 0
  %224 = vmatpush1.bf16.msra.mxu0 0
  %225 = vmatprep.subr.bf16.mxu0 0
  %226 = vmatpush1.bf16.msra.mxu0 0
  %227 = vmatprep.subr.bf16.mxu0 0
  %228 = vmatpush1.bf16.msra.mxu0 0
  %229 = vmatprep.mubr.bf16.mxu0 0
  %230 = vmatmul.mubr.bf16.gmra.mrb[0].mxu0 %v195
  %v231 = vpop.f32.mrb[0].mxu0
  %v232 = vadd.f32 0.0, %v231
  %v233 = vpop.f32.mrb[0].mxu0
  %v234 = vadd.f32 0.0, %v233
  %v235 = vpop.f32.mrb[0].mxu0
  %v236 = vadd.f32 0.0, %v235
  %v237 = vpop.f32.mrb[0].mxu0
  %v238 = vadd.f32 0.0, %v237
  %239 = vdwg.mxu0
  %v240 = vadd.f32 %v23, %v232
  %v241 = vadd.f32 %v24, %v234
  %v242 = vadd.f32 %v25, %v236
  %v243 = vadd.f32 %v26, %v238
  %s244 = scalar_lea.vmem %s0, 8
  %v245 = vld [vmem:[%s244] sm:$0xf]
  %v246 = vld [vmem:[%s244 + $0x4] sm:$0xf]
  %s247 = scalar_lea.vmem %s1, 8
  %v248 = vld [vmem:[%s247] sm:$0xf]
  %v249 = vld [vmem:[%s247 + $0x4] sm:$0xf]
  %s250 = scalar_lea.vmem %s2, 8
  %v251 = vld [vmem:[%s250] sm:$0xf]
  %v252 = vld [vmem:[%s250 + $0x4] sm:$0xf]
  %v255 = vunpack.c.l.b16 %v245
  %v256 = vunpack.c.l.b16 %v246
  %v257 = vpack.c.b16 %v256, %v255
  %v260 = vunpack.c.l.b16 %v248
  %v261 = vunpack.c.l.b16 %v249
  %v262 = vpack.c.b16 %v261, %v260
  %v264 = vsel %vm43, %v257, 0
  %v267 = vsel %vm43, %v262, 0
  %269 = vmatprep.subr.bf16.mxu0 0
  %270 = vmatpush1.bf16.xpose.msra.mxu0 %v267
  %271 = vmatprep.subr.bf16.mxu0 0
  %272 = vmatpush1.bf16.xpose.msra.mxu0 0
  %273 = vmatprep.subr.bf16.mxu0 0
  %274 = vmatpush1.bf16.xpose.msra.mxu0 0
  %275 = vmatprep.subr.bf16.mxu0 0
  %276 = vmatpush1.bf16.xpose.msra.mxu0 0
  %277 = vmatprep.subr.bf16.mxu0 0
  %278 = vmatpush1.bf16.xpose.msra.mxu0 0
  %279 = vmatprep.subr.bf16.mxu0 0
  %280 = vmatpush1.bf16.xpose.msra.mxu0 0
  %281 = vmatprep.subr.bf16.mxu0 0
  %282 = vmatpush1.bf16.xpose.msra.mxu0 0
  %283 = vmatprep.subr.bf16.mxu0 0
  %284 = vmatpush1.bf16.xpose.msra.mxu0 0
  %285 = vmatprep.subr.bf16.mxu0 0
  %286 = vmatpush1.bf16.xpose.msra.mxu0 0
  %287 = vmatprep.subr.bf16.mxu0 0
  %288 = vmatpush1.bf16.xpose.msra.mxu0 0
  %289 = vmatprep.subr.bf16.mxu0 0
  %290 = vmatpush1.bf16.xpose.msra.mxu0 0
  %291 = vmatprep.subr.bf16.mxu0 0
  %292 = vmatpush1.bf16.xpose.msra.mxu0 0
  %293 = vmatprep.subr.bf16.mxu0 0
  %294 = vmatpush1.bf16.xpose.msra.mxu0 0
  %295 = vmatprep.subr.bf16.mxu0 0
  %296 = vmatpush1.bf16.xpose.msra.mxu0 0
  %297 = vmatprep.subr.bf16.mxu0 0
  %298 = vmatpush1.bf16.xpose.msra.mxu0 0
  %299 = vmatprep.subr.bf16.mxu0 0
  %300 = vmatpush1.bf16.xpose.msra.mxu0 0
  %301 = vmatprep.mubr.bf16.mxu0 0
  %302 = vmatmul.mubr.bf16.gmra.mrb[0].mxu0 %v264
  %v303 = vpop.f32.mrb[0].mxu0
  %v304 = vadd.f32 0.0, %v303
  %v305 = vpop.f32.mrb[0].mxu0
  %v306 = vpop.f32.mrb[0].mxu0
  %v307 = vadd.f32 0.0, %v306
  %v308 = vpop.f32.mrb[0].mxu0
  %309 = vdwg.mxu0
  %v310 = vmul.f32 %v304, 0.17677669
  %v311 = vmul.f32 %v307, 0.17677669
  %v312 = vsel %vm93, %v310, -inf
  %313 = vmax.xlane.f32.xlu0 %v312
  %v314 = vpop.xlane.xlu0 %313
  %v315 = vsel %vm93, %v311, -inf
  %316 = vmax.xlane.f32.xlu0 %v315
  %v317 = vpop.xlane.xlu0 %316
  %v318 = vsub.f32 %v310, %v314
  %v319 = vsub.f32 %v311, %v317
  %v320 = vmul.f32 %v318, 1.442695
  %v321 = vpow.pop %v320
  %v322 = vmul.f32 %v319, 1.442695
  %v323 = vpow.pop %v322
  %v324 = vsel %vm93, %v321, 0.0
  %325 = vadd.xlane.f32.xlu0 %v324
  %v326 = vpop.xlane.xlu0 %325
  %v327 = vsel %vm93, %v323, 0.0
  %328 = vadd.xlane.f32.xlu0 %v327
  %v329 = vpop.xlane.xlu0 %328
  %v330 = vrcp.pop %v326
  %v331 = vrcp.pop %v329
  %v332 = vmul.f32 %v321, %v330
  %v333 = vmul.f32 %v323, %v331
  %v334 = vadd.f32 %v116, %v332
  %v335 = vadd.f32 %v117, %v333
  %v336 = vpack.c.bf16 %v333, %v332
  %v339 = vunpack.c.l.b16 %v251
  %v340 = vunpack.c.l.b16 %v252
  %v341 = vpack.c.b16 %v340, %v339
  %v344 = vsel %vm93, %v336, 0
  %346 = vmatprep.subr.bf16.mxu0 0
  %347 = vmatpush1.bf16.msra.mxu0 %v341
  %348 = vmatprep.subr.bf16.mxu0 0
  %349 = vmatpush1.bf16.msra.mxu0 0
  %350 = vmatprep.subr.bf16.mxu0 0
  %351 = vmatpush1.bf16.msra.mxu0 0
  %352 = vmatprep.subr.bf16.mxu0 0
  %353 = vmatpush1.bf16.msra.mxu0 0
  %354 = vmatprep.subr.bf16.mxu0 0
  %355 = vmatpush1.bf16.msra.mxu0 0
  %356 = vmatprep.subr.bf16.mxu0 0
  %357 = vmatpush1.bf16.msra.mxu0 0
  %358 = vmatprep.subr.bf16.mxu0 0
  %359 = vmatpush1.bf16.msra.mxu0 0
  %360 = vmatprep.subr.bf16.mxu0 0
  %361 = vmatpush1.bf16.msra.mxu0 0
  %362 = vmatprep.subr.bf16.mxu0 0
  %363 = vmatpush1.bf16.msra.mxu0 0
  %364 = vmatprep.subr.bf16.mxu0 0
  %365 = vmatpush1.bf16.msra.mxu0 0
  %366 = vmatprep.subr.bf16.mxu0 0
  %367 = vmatpush1.bf16.msra.mxu0 0
  %368 = vmatprep.subr.bf16.mxu0 0
  %369 = vmatpush1.bf16.msra.mxu0 0
  %370 = vmatprep.subr.bf16.mxu0 0
  %371 = vmatpush1.bf16.msra.mxu0 0
  %372 = vmatprep.subr.bf16.mxu0 0
  %373 = vmatpush1.bf16.msra.mxu0 0
  %374 = vmatprep.subr.bf16.mxu0 0
  %375 = vmatpush1.bf16.msra.mxu0 0
  %376 = vmatprep.subr.bf16.mxu0 0
  %377 = vmatpush1.bf16.msra.mxu0 0
  %378 = vmatprep.mubr.bf16.mxu0 0
  %379 = vmatmul.mubr.bf16.gmra.mrb[0].mxu0 %v344
  %v380 = vpop.f32.mrb[0].mxu0
  %v381 = vadd.f32 0.0, %v380
  %v382 = vpop.f32.mrb[0].mxu0
  %v383 = vpop.f32.mrb[0].mxu0
  %v384 = vadd.f32 0.0, %v383
  %v385 = vpop.f32.mrb[0].mxu0
  %386 = vdwg.mxu0
  %v387 = vpack.c.bf16 %v384, %v381
  %v388 = vld [vmem:[%s4 + $0x20] sm:$0xff]
  %v389 = vld [vmem:[%s4 + $0x28] sm:$0xff]
  %v390 = vld [vmem:[%s4 + $0x30] sm:$0xff]
  %v391 = vld [vmem:[%s4 + $0x38] sm:$0xff]
  %v396 = vunpack.c.l.b16 %v388
  %v397 = vunpack.c.h.b16 %v388
  %v398 = vunpack.c.l.b16 %v389
  %v399 = vunpack.c.h.b16 %v389
  %v400 = vunpack.c.l.b16 %v390
  %v401 = vunpack.c.h.b16 %v390
  %v402 = vunpack.c.l.b16 %v391
  %v403 = vunpack.c.h.b16 %v391
  %v404 = vpack.c.b16 %v398, %v396
  %v405 = vpack.c.b16 %v399, %v397
  %v406 = vpack.c.b16 %v402, %v400
  %v407 = vpack.c.b16 %v403, %v401
  %v413 = vsel %vm43, %v387, 0
  %415 = vmatprep.subr.bf16.mxu0 %v405
  %416 = vmatpush1.bf16.msra.mxu0 %v404
  %417 = vmatprep.subr.bf16.mxu0 %v407
  %418 = vmatpush1.bf16.msra.mxu0 %v406
  %419 = vmatprep.subr.bf16.mxu0 0
  %420 = vmatpush1.bf16.msra.mxu0 0
  %421 = vmatprep.subr.bf16.mxu0 0
  %422 = vmatpush1.bf16.msra.mxu0 0
  %423 = vmatprep.subr.bf16.mxu0 0
  %424 = vmatpush1.bf16.msra.mxu0 0
  %425 = vmatprep.subr.bf16.mxu0 0
  %426 = vmatpush1.bf16.msra.mxu0 0
  %427 = vmatprep.subr.bf16.mxu0 0
  %428 = vmatpush1.bf16.msra.mxu0 0
  %429 = vmatprep.subr.bf16.mxu0 0
  %430 = vmatpush1.bf16.msra.mxu0 0
  %431 = vmatprep.subr.bf16.mxu0 0
  %432 = vmatpush1.bf16.msra.mxu0 0
  %433 = vmatprep.subr.bf16.mxu0 0
  %434 = vmatpush1.bf16.msra.mxu0 0
  %435 = vmatprep.subr.bf16.mxu0 0
  %436 = vmatpush1.bf16.msra.mxu0 0
  %437 = vmatprep.subr.bf16.mxu0 0
  %438 = vmatpush1.bf16.msra.mxu0 0
  %439 = vmatprep.subr.bf16.mxu0 0
  %440 = vmatpush1.bf16.msra.mxu0 0
  %441 = vmatprep.subr.bf16.mxu0 0
  %442 = vmatpush1.bf16.msra.mxu0 0
  %443 = vmatprep.subr.bf16.mxu0 0
  %444 = vmatpush1.bf16.msra.mxu0 0
  %445 = vmatprep.subr.bf16.mxu0 0
  %446 = vmatpush1.bf16.msra.mxu0 0
  %447 = vmatprep.mubr.bf16.mxu0 0
  %448 = vmatmul.mubr.bf16.gmra.mrb[0].mxu0 %v413
  %v449 = vpop.f32.mrb[0].mxu0
  %v450 = vadd.f32 0.0, %v449
  %v451 = vpop.f32.mrb[0].mxu0
  %v452 = vadd.f32 0.0, %v451
  %v453 = vpop.f32.mrb[0].mxu0
  %v454 = vadd.f32 0.0, %v453
  %v455 = vpop.f32.mrb[0].mxu0
  %v456 = vadd.f32 0.0, %v455
  %457 = vdwg.mxu0
  %v458 = vadd.f32 %v240, %v450
  %v459 = vadd.f32 %v241, %v452
  %v460 = vadd.f32 %v242, %v454
  %v461 = vadd.f32 %v243, %v456
  %s462 = scalar_lea.vmem %s0, 16
  %v463 = vld [vmem:[%s462] sm:$0xf]
  %v464 = vld [vmem:[%s462 + $0x4] sm:$0xf]
  %s465 = scalar_lea.vmem %s1, 16
  %v466 = vld [vmem:[%s465] sm:$0xf]
  %v467 = vld [vmem:[%s465 + $0x4] sm:$0xf]
  %s468 = scalar_lea.vmem %s2, 16
  %v469 = vld [vmem:[%s468] sm:$0xf]
  %v470 = vld [vmem:[%s468 + $0x4] sm:$0xf]
  %v473 = vunpack.c.l.b16 %v463
  %v474 = vunpack.c.l.b16 %v464
  %v475 = vpack.c.b16 %v474, %v473
  %v478 = vunpack.c.l.b16 %v466
  %v479 = vunpack.c.l.b16 %v467
  %v480 = vpack.c.b16 %v479, %v478
  %v482 = vsel %vm43, %v475, 0
  %v485 = vsel %vm43, %v480, 0
  %487 = vmatprep.subr.bf16.mxu0 0
  %488 = vmatpush1.bf16.xpose.msra.mxu0 %v485
  %489 = vmatprep.subr.bf16.mxu0 0
  %490 = vmatpush1.bf16.xpose.msra.mxu0 0
  %491 = vmatprep.subr.bf16.mxu0 0
  %492 = vmatpush1.bf16.xpose.msra.mxu0 0
  %493 = vmatprep.subr.bf16.mxu0 0
  %494 = vmatpush1.bf16.xpose.msra.mxu0 0
  %495 = vmatprep.subr.bf16.mxu0 0
  %496 = vmatpush1.bf16.xpose.msra.mxu0 0
  %497 = vmatprep.subr.bf16.mxu0 0
  %498 = vmatpush1.bf16.xpose.msra.mxu0 0
  %499 = vmatprep.subr.bf16.mxu0 0
  %500 = vmatpush1.bf16.xpose.msra.mxu0 0
  %501 = vmatprep.subr.bf16.mxu0 0
  %502 = vmatpush1.bf16.xpose.msra.mxu0 0
  %503 = vmatprep.subr.bf16.mxu0 0
  %504 = vmatpush1.bf16.xpose.msra.mxu0 0
  %505 = vmatprep.subr.bf16.mxu0 0
  %506 = vmatpush1.bf16.xpose.msra.mxu0 0
  %507 = vmatprep.subr.bf16.mxu0 0
  %508 = vmatpush1.bf16.xpose.msra.mxu0 0
  %509 = vmatprep.subr.bf16.mxu0 0
  %510 = vmatpush1.bf16.xpose.msra.mxu0 0
  %511 = vmatprep.subr.bf16.mxu0 0
  %512 = vmatpush1.bf16.xpose.msra.mxu0 0
  %513 = vmatprep.subr.bf16.mxu0 0
  %514 = vmatpush1.bf16.xpose.msra.mxu0 0
  %515 = vmatprep.subr.bf16.mxu0 0
  %516 = vmatpush1.bf16.xpose.msra.mxu0 0
  %517 = vmatprep.subr.bf16.mxu0 0
  %518 = vmatpush1.bf16.xpose.msra.mxu0 0
  %519 = vmatprep.mubr.bf16.mxu0 0
  %520 = vmatmul.mubr.bf16.gmra.mrb[0].mxu0 %v482
  %v521 = vpop.f32.mrb[0].mxu0
  %v522 = vadd.f32 0.0, %v521
  %v523 = vpop.f32.mrb[0].mxu0
  %v524 = vpop.f32.mrb[0].mxu0
  %v525 = vadd.f32 0.0, %v524
  %v526 = vpop.f32.mrb[0].mxu0
  %527 = vdwg.mxu0
  %v528 = vmul.f32 %v522, 0.17677669
  %v529 = vmul.f32 %v525, 0.17677669
  %v530 = vsel %vm93, %v528, -inf
  %531 = vmax.xlane.f32.xlu0 %v530
  %v532 = vpop.xlane.xlu0 %531
  %v533 = vsel %vm93, %v529, -inf
  %534 = vmax.xlane.f32.xlu0 %v533
  %v535 = vpop.xlane.xlu0 %534
  %v536 = vsub.f32 %v528, %v532
  %v537 = vsub.f32 %v529, %v535
  %v538 = vmul.f32 %v536, 1.442695
  %v539 = vpow.pop %v538
  %v540 = vmul.f32 %v537, 1.442695
  %v541 = vpow.pop %v540
  %v542 = vsel %vm93, %v539, 0.0
  %543 = vadd.xlane.f32.xlu0 %v542
  %v544 = vpop.xlane.xlu0 %543
  %v545 = vsel %vm93, %v541, 0.0
  %546 = vadd.xlane.f32.xlu0 %v545
  %v547 = vpop.xlane.xlu0 %546
  %v548 = vrcp.pop %v544
  %v549 = vrcp.pop %v547
  %v550 = vmul.f32 %v539, %v548
  %v551 = vmul.f32 %v541, %v549
  %v552 = vadd.f32 %v334, %v550
  %v553 = vadd.f32 %v335, %v551
  %v554 = vpack.c.bf16 %v551, %v550
  %v557 = vunpack.c.l.b16 %v469
  %v558 = vunpack.c.l.b16 %v470
  %v559 = vpack.c.b16 %v558, %v557
  %v562 = vsel %vm93, %v554, 0
  %564 = vmatprep.subr.bf16.mxu0 0
  %565 = vmatpush1.bf16.msra.mxu0 %v559
  %566 = vmatprep.subr.bf16.mxu0 0
  %567 = vmatpush1.bf16.msra.mxu0 0
  %568 = vmatprep.subr.bf16.mxu0 0
  %569 = vmatpush1.bf16.msra.mxu0 0
  %570 = vmatprep.subr.bf16.mxu0 0
  %571 = vmatpush1.bf16.msra.mxu0 0
  %572 = vmatprep.subr.bf16.mxu0 0
  %573 = vmatpush1.bf16.msra.mxu0 0
  %574 = vmatprep.subr.bf16.mxu0 0
  %575 = vmatpush1.bf16.msra.mxu0 0
  %576 = vmatprep.subr.bf16.mxu0 0
  %577 = vmatpush1.bf16.msra.mxu0 0
  %578 = vmatprep.subr.bf16.mxu0 0
  %579 = vmatpush1.bf16.msra.mxu0 0
  %580 = vmatprep.subr.bf16.mxu0 0
  %581 = vmatpush1.bf16.msra.mxu0 0
  %582 = vmatprep.subr.bf16.mxu0 0
  %583 = vmatpush1.bf16.msra.mxu0 0
  %584 = vmatprep.subr.bf16.mxu0 0
  %585 = vmatpush1.bf16.msra.mxu0 0
  %586 = vmatprep.subr.bf16.mxu0 0
  %587 = vmatpush1.bf16.msra.mxu0 0
  %588 = vmatprep.subr.bf16.mxu0 0
  %589 = vmatpush1.bf16.msra.mxu0 0
  %590 = vmatprep.subr.bf16.mxu0 0
  %591 = vmatpush1.bf16.msra.mxu0 0
  %592 = vmatprep.subr.bf16.mxu0 0
  %593 = vmatpush1.bf16.msra.mxu0 0
  %594 = vmatprep.subr.bf16.mxu0 0
  %595 = vmatpush1.bf16.msra.mxu0 0
  %596 = vmatprep.mubr.bf16.mxu0 0
  %597 = vmatmul.mubr.bf16.gmra.mrb[0].mxu0 %v562
  %v598 = vpop.f32.mrb[0].mxu0
  %v599 = vadd.f32 0.0, %v598
  %v600 = vpop.f32.mrb[0].mxu0
  %v601 = vpop.f32.mrb[0].mxu0
  %v602 = vadd.f32 0.0, %v601
  %v603 = vpop.f32.mrb[0].mxu0
  %604 = vdwg.mxu0
  %v605 = vpack.c.bf16 %v602, %v599
  %v606 = vld [vmem:[%s4 + $0x40] sm:$0xff]
  %v607 = vld [vmem:[%s4 + $0x48] sm:$0xff]
  %v608 = vld [vmem:[%s4 + $0x50] sm:$0xff]
  %v609 = vld [vmem:[%s4 + $0x58] sm:$0xff]
  %v614 = vunpack.c.l.b16 %v606
  %v615 = vunpack.c.h.b16 %v606
  %v616 = vunpack.c.l.b16 %v607
  %v617 = vunpack.c.h.b16 %v607
  %v618 = vunpack.c.l.b16 %v608
  %v619 = vunpack.c.h.b16 %v608
  %v620 = vunpack.c.l.b16 %v609
  %v621 = vunpack.c.h.b16 %v609
  %v622 = vpack.c.b16 %v616, %v614
  %v623 = vpack.c.b16 %v617, %v615
  %v624 = vpack.c.b16 %v620, %v618
  %v625 = vpack.c.b16 %v621, %v619
  %v631 = vsel %vm43, %v605, 0
  %633 = vmatprep.subr.bf16.mxu0 %v623
  %634 = vmatpush1.bf16.msra.mxu0 %v622
  %635 = vmatprep.subr.bf16.mxu0 %v625
  %636 = vmatpush1.bf16.msra.mxu0 %v624
  %637 = vmatprep.subr.bf16.mxu0 0
  %638 = vmatpush1.bf16.msra.mxu0 0
  %639 = vmatprep.subr.bf16.mxu0 0
  %640 = vmatpush1.bf16.msra.mxu0 0
  %641 = vmatprep.subr.bf16.mxu0 0
  %642 = vmatpush1.bf16.msra.mxu0 0
  %643 = vmatprep.subr.bf16.mxu0 0
  %644 = vmatpush1.bf16.msra.mxu0 0
  %645 = vmatprep.subr.bf16.mxu0 0
  %646 = vmatpush1.bf16.msra.mxu0 0
  %647 = vmatprep.subr.bf16.mxu0 0
  %648 = vmatpush1.bf16.msra.mxu0 0
  %649 = vmatprep.subr.bf16.mxu0 0
  %650 = vmatpush1.bf16.msra.mxu0 0
  %651 = vmatprep.subr.bf16.mxu0 0
  %652 = vmatpush1.bf16.msra.mxu0 0
  %653 = vmatprep.subr.bf16.mxu0 0
  %654 = vmatpush1.bf16.msra.mxu0 0
  %655 = vmatprep.subr.bf16.mxu0 0
  %656 = vmatpush1.bf16.msra.mxu0 0
  %657 = vmatprep.subr.bf16.mxu0 0
  %658 = vmatpush1.bf16.msra.mxu0 0
  %659 = vmatprep.subr.bf16.mxu0 0
  %660 = vmatpush1.bf16.msra.mxu0 0
  %661 = vmatprep.subr.bf16.mxu0 0
  %662 = vmatpush1.bf16.msra.mxu0 0
  %663 = vmatprep.subr.bf16.mxu0 0
  %664 = vmatpush1.bf16.msra.mxu0 0
  %665 = vmatprep.mubr.bf16.mxu0 0
  %666 = vmatmul.mubr.bf16.gmra.mrb[0].mxu0 %v631
  %v667 = vpop.f32.mrb[0].mxu0
  %v668 = vadd.f32 0.0, %v667
  %v669 = vpop.f32.mrb[0].mxu0
  %v670 = vadd.f32 0.0, %v669
  %v671 = vpop.f32.mrb[0].mxu0
  %v672 = vadd.f32 0.0, %v671
  %v673 = vpop.f32.mrb[0].mxu0
  %v674 = vadd.f32 0.0, %v673
  %675 = vdwg.mxu0
  %v676 = vadd.f32 %v458, %v668
  %v677 = vadd.f32 %v459, %v670
  %v678 = vadd.f32 %v460, %v672
  %v679 = vadd.f32 %v461, %v674
  %s680 = scalar_lea.vmem %s0, 24
  %v681 = vld [vmem:[%s680] sm:$0xf]
  %v682 = vld [vmem:[%s680 + $0x4] sm:$0xf]
  %s683 = scalar_lea.vmem %s1, 24
  %v684 = vld [vmem:[%s683] sm:$0xf]
  %v685 = vld [vmem:[%s683 + $0x4] sm:$0xf]
  %s686 = scalar_lea.vmem %s2, 24
  %v687 = vld [vmem:[%s686] sm:$0xf]
  %v688 = vld [vmem:[%s686 + $0x4] sm:$0xf]
  %v691 = vunpack.c.l.b16 %v681
  %v692 = vunpack.c.l.b16 %v682
  %v693 = vpack.c.b16 %v692, %v691
  %v696 = vunpack.c.l.b16 %v684
  %v697 = vunpack.c.l.b16 %v685
  %v698 = vpack.c.b16 %v697, %v696
  %v700 = vsel %vm43, %v693, 0
  %v703 = vsel %vm43, %v698, 0
  %705 = vmatprep.subr.bf16.mxu0 0
  %706 = vmatpush1.bf16.xpose.msra.mxu0 %v703
  %707 = vmatprep.subr.bf16.mxu0 0
  %708 = vmatpush1.bf16.xpose.msra.mxu0 0
  %709 = vmatprep.subr.bf16.mxu0 0
  %710 = vmatpush1.bf16.xpose.msra.mxu0 0
  %711 = vmatprep.subr.bf16.mxu0 0
  %712 = vmatpush1.bf16.xpose.msra.mxu0 0
  %713 = vmatprep.subr.bf16.mxu0 0
  %714 = vmatpush1.bf16.xpose.msra.mxu0 0
  %715 = vmatprep.subr.bf16.mxu0 0
  %716 = vmatpush1.bf16.xpose.msra.mxu0 0
  %717 = vmatprep.subr.bf16.mxu0 0
  %718 = vmatpush1.bf16.xpose.msra.mxu0 0
  %719 = vmatprep.subr.bf16.mxu0 0
  %720 = vmatpush1.bf16.xpose.msra.mxu0 0
  %721 = vmatprep.subr.bf16.mxu0 0
  %722 = vmatpush1.bf16.xpose.msra.mxu0 0
  %723 = vmatprep.subr.bf16.mxu0 0
  %724 = vmatpush1.bf16.xpose.msra.mxu0 0
  %725 = vmatprep.subr.bf16.mxu0 0
  %726 = vmatpush1.bf16.xpose.msra.mxu0 0
  %727 = vmatprep.subr.bf16.mxu0 0
  %728 = vmatpush1.bf16.xpose.msra.mxu0 0
  %729 = vmatprep.subr.bf16.mxu0 0
  %730 = vmatpush1.bf16.xpose.msra.mxu0 0
  %731 = vmatprep.subr.bf16.mxu0 0
  %732 = vmatpush1.bf16.xpose.msra.mxu0 0
  %733 = vmatprep.subr.bf16.mxu0 0
  %734 = vmatpush1.bf16.xpose.msra.mxu0 0
  %735 = vmatprep.subr.bf16.mxu0 0
  %736 = vmatpush1.bf16.xpose.msra.mxu0 0
  %737 = vmatprep.mubr.bf16.mxu0 0
  %738 = vmatmul.mubr.bf16.gmra.mrb[0].mxu0 %v700
  %v739 = vpop.f32.mrb[0].mxu0
  %v740 = vadd.f32 0.0, %v739
  %v741 = vpop.f32.mrb[0].mxu0
  %v742 = vpop.f32.mrb[0].mxu0
  %v743 = vadd.f32 0.0, %v742
  %v744 = vpop.f32.mrb[0].mxu0
  %745 = vdwg.mxu0
  %v746 = vmul.f32 %v740, 0.17677669
  %v747 = vmul.f32 %v743, 0.17677669
  %v748 = vsel %vm93, %v746, -inf
  %749 = vmax.xlane.f32.xlu0 %v748
  %v750 = vpop.xlane.xlu0 %749
  %v751 = vsel %vm93, %v747, -inf
  %752 = vmax.xlane.f32.xlu0 %v751
  %v753 = vpop.xlane.xlu0 %752
  %v754 = vsub.f32 %v746, %v750
  %v755 = vsub.f32 %v747, %v753
  %v756 = vmul.f32 %v754, 1.442695
  %v757 = vpow.pop %v756
  %v758 = vmul.f32 %v755, 1.442695
  %v759 = vpow.pop %v758
  %v760 = vsel %vm93, %v757, 0.0
  %761 = vadd.xlane.f32.xlu0 %v760
  %v762 = vpop.xlane.xlu0 %761
  %v763 = vsel %vm93, %v759, 0.0
  %764 = vadd.xlane.f32.xlu0 %v763
  %v765 = vpop.xlane.xlu0 %764
  %v766 = vrcp.pop %v762
  %v767 = vrcp.pop %v765
  %v768 = vmul.f32 %v757, %v766
  %v769 = vmul.f32 %v759, %v767
  %v770 = vadd.f32 %v552, %v768
  %v771 = vadd.f32 %v553, %v769
  %v772 = vpack.c.bf16 %v769, %v768
  %v775 = vunpack.c.l.b16 %v687
  %v776 = vunpack.c.l.b16 %v688
  %v777 = vpack.c.b16 %v776, %v775
  %v780 = vsel %vm93, %v772, 0
  %782 = vmatprep.subr.bf16.mxu0 0
  %783 = vmatpush1.bf16.msra.mxu0 %v777
  %784 = vmatprep.subr.bf16.mxu0 0
  %785 = vmatpush1.bf16.msra.mxu0 0
  %786 = vmatprep.subr.bf16.mxu0 0
  %787 = vmatpush1.bf16.msra.mxu0 0
  %788 = vmatprep.subr.bf16.mxu0 0
  %789 = vmatpush1.bf16.msra.mxu0 0
  %790 = vmatprep.subr.bf16.mxu0 0
  %791 = vmatpush1.bf16.msra.mxu0 0
  %792 = vmatprep.subr.bf16.mxu0 0
  %793 = vmatpush1.bf16.msra.mxu0 0
  %794 = vmatprep.subr.bf16.mxu0 0
  %795 = vmatpush1.bf16.msra.mxu0 0
  %796 = vmatprep.subr.bf16.mxu0 0
  %797 = vmatpush1.bf16.msra.mxu0 0
  %798 = vmatprep.subr.bf16.mxu0 0
  %799 = vmatpush1.bf16.msra.mxu0 0
  %800 = vmatprep.subr.bf16.mxu0 0
  %801 = vmatpush1.bf16.msra.mxu0 0
  %802 = vmatprep.subr.bf16.mxu0 0
  %803 = vmatpush1.bf16.msra.mxu0 0
  %804 = vmatprep.subr.bf16.mxu0 0
  %805 = vmatpush1.bf16.msra.mxu0 0
  %806 = vmatprep.subr.bf16.mxu0 0
  %807 = vmatpush1.bf16.msra.mxu0 0
  %808 = vmatprep.subr.bf16.mxu0 0
  %809 = vmatpush1.bf16.msra.mxu0 0
  %810 = vmatprep.subr.bf16.mxu0 0
  %811 = vmatpush1.bf16.msra.mxu0 0
  %812 = vmatprep.subr.bf16.mxu0 0
  %813 = vmatpush1.bf16.msra.mxu0 0
  %814 = vmatprep.mubr.bf16.mxu0 0
  %815 = vmatmul.mubr.bf16.gmra.mrb[0].mxu0 %v780
  %v816 = vpop.f32.mrb[0].mxu0
  %v817 = vadd.f32 0.0, %v816
  %v818 = vpop.f32.mrb[0].mxu0
  %v819 = vpop.f32.mrb[0].mxu0
  %v820 = vadd.f32 0.0, %v819
  %v821 = vpop.f32.mrb[0].mxu0
  %822 = vdwg.mxu0
  %v823 = vpack.c.bf16 %v820, %v817
  %v824 = vld [vmem:[%s4 + $0x60] sm:$0xff]
  %v825 = vld [vmem:[%s4 + $0x68] sm:$0xff]
  %v826 = vld [vmem:[%s4 + $0x70] sm:$0xff]
  %v827 = vld [vmem:[%s4 + $0x78] sm:$0xff]
  %v832 = vunpack.c.l.b16 %v824
  %v833 = vunpack.c.h.b16 %v824
  %v834 = vunpack.c.l.b16 %v825
  %v835 = vunpack.c.h.b16 %v825
  %v836 = vunpack.c.l.b16 %v826
  %v837 = vunpack.c.h.b16 %v826
  %v838 = vunpack.c.l.b16 %v827
  %v839 = vunpack.c.h.b16 %v827
  %v840 = vpack.c.b16 %v834, %v832
  %v841 = vpack.c.b16 %v835, %v833
  %v842 = vpack.c.b16 %v838, %v836
  %v843 = vpack.c.b16 %v839, %v837
  %v849 = vsel %vm43, %v823, 0
  %851 = vmatprep.subr.bf16.mxu0 %v841
  %852 = vmatpush1.bf16.msra.mxu0 %v840
  %853 = vmatprep.subr.bf16.mxu0 %v843
  %854 = vmatpush1.bf16.msra.mxu0 %v842
  %855 = vmatprep.subr.bf16.mxu0 0
  %856 = vmatpush1.bf16.msra.mxu0 0
  %857 = vmatprep.subr.bf16.mxu0 0
  %858 = vmatpush1.bf16.msra.mxu0 0
  %859 = vmatprep.subr.bf16.mxu0 0
  %860 = vmatpush1.bf16.msra.mxu0 0
  %861 = vmatprep.subr.bf16.mxu0 0
  %862 = vmatpush1.bf16.msra.mxu0 0
  %863 = vmatprep.subr.bf16.mxu0 0
  %864 = vmatpush1.bf16.msra.mxu0 0
  %865 = vmatprep.subr.bf16.mxu0 0
  %866 = vmatpush1.bf16.msra.mxu0 0
  %867 = vmatprep.subr.bf16.mxu0 0
  %868 = vmatpush1.bf16.msra.mxu0 0
  %869 = vmatprep.subr.bf16.mxu0 0
  %870 = vmatpush1.bf16.msra.mxu0 0
  %871 = vmatprep.subr.bf16.mxu0 0
  %872 = vmatpush1.bf16.msra.mxu0 0
  %873 = vmatprep.subr.bf16.mxu0 0
  %874 = vmatpush1.bf16.msra.mxu0 0
  %875 = vmatprep.subr.bf16.mxu0 0
  %876 = vmatpush1.bf16.msra.mxu0 0
  %877 = vmatprep.subr.bf16.mxu0 0
  %878 = vmatpush1.bf16.msra.mxu0 0
  %879 = vmatprep.subr.bf16.mxu0 0
  %880 = vmatpush1.bf16.msra.mxu0 0
  %881 = vmatprep.subr.bf16.mxu0 0
  %882 = vmatpush1.bf16.msra.mxu0 0
  %883 = vmatprep.mubr.bf16.mxu0 0
  %884 = vmatmul.mubr.bf16.gmra.mrb[0].mxu0 %v849
  %v885 = vpop.f32.mrb[0].mxu0
  %v886 = vadd.f32 0.0, %v885
  %v887 = vpop.f32.mrb[0].mxu0
  %v888 = vadd.f32 0.0, %v887
  %v889 = vpop.f32.mrb[0].mxu0
  %v890 = vadd.f32 0.0, %v889
  %v891 = vpop.f32.mrb[0].mxu0
  %v892 = vadd.f32 0.0, %v891
  %893 = vdwg.mxu0
  %v894 = vadd.f32 %v676, %v886
  %v895 = vadd.f32 %v677, %v888
  %v896 = vadd.f32 %v678, %v890
  %v897 = vadd.f32 %v679, %v892
  %s898 = scalar_lea.vmem %s0, 32
  %v899 = vld [vmem:[%s898] sm:$0xf]
  %v900 = vld [vmem:[%s898 + $0x4] sm:$0xf]
  %s901 = scalar_lea.vmem %s1, 32
  %v902 = vld [vmem:[%s901] sm:$0xf]
  %v903 = vld [vmem:[%s901 + $0x4] sm:$0xf]
  %s904 = scalar_lea.vmem %s2, 32
  %v905 = vld [vmem:[%s904] sm:$0xf]
  %v906 = vld [vmem:[%s904 + $0x4] sm:$0xf]
  %v909 = vunpack.c.l.b16 %v899
  %v910 = vunpack.c.l.b16 %v900
  %v911 = vpack.c.b16 %v910, %v909
  %v914 = vunpack.c.l.b16 %v902
  %v915 = vunpack.c.l.b16 %v903
  %v916 = vpack.c.b16 %v915, %v914
  %v918 = vsel %vm43, %v911, 0
  %v921 = vsel %vm43, %v916, 0
  %923 = vmatprep.subr.bf16.mxu0 0
  %924 = vmatpush1.bf16.xpose.msra.mxu0 %v921
  %925 = vmatprep.subr.bf16.mxu0 0
  %926 = vmatpush1.bf16.xpose.msra.mxu0 0
  %927 = vmatprep.subr.bf16.mxu0 0
  %928 = vmatpush1.bf16.xpose.msra.mxu0 0
  %929 = vmatprep.subr.bf16.mxu0 0
  %930 = vmatpush1.bf16.xpose.msra.mxu0 0
  %931 = vmatprep.subr.bf16.mxu0 0
  %932 = vmatpush1.bf16.xpose.msra.mxu0 0
  %933 = vmatprep.subr.bf16.mxu0 0
  %934 = vmatpush1.bf16.xpose.msra.mxu0 0
  %935 = vmatprep.subr.bf16.mxu0 0
  %936 = vmatpush1.bf16.xpose.msra.mxu0 0
  %937 = vmatprep.subr.bf16.mxu0 0
  %938 = vmatpush1.bf16.xpose.msra.mxu0 0
  %939 = vmatprep.subr.bf16.mxu0 0
  %940 = vmatpush1.bf16.xpose.msra.mxu0 0
  %941 = vmatprep.subr.bf16.mxu0 0
  %942 = vmatpush1.bf16.xpose.msra.mxu0 0
  %943 = vmatprep.subr.bf16.mxu0 0
  %944 = vmatpush1.bf16.xpose.msra.mxu0 0
  %945 = vmatprep.subr.bf16.mxu0 0
  %946 = vmatpush1.bf16.xpose.msra.mxu0 0
  %947 = vmatprep.subr.bf16.mxu0 0
  %948 = vmatpush1.bf16.xpose.msra.mxu0 0
  %949 = vmatprep.subr.bf16.mxu0 0
  %950 = vmatpush1.bf16.xpose.msra.mxu0 0
  %951 = vmatprep.subr.bf16.mxu0 0
  %952 = vmatpush1.bf16.xpose.msra.mxu0 0
  %953 = vmatprep.subr.bf16.mxu0 0
  %954 = vmatpush1.bf16.xpose.msra.mxu0 0
  %955 = vmatprep.mubr.bf16.mxu0 0
  %956 = vmatmul.mubr.bf16.gmra.mrb[0].mxu0 %v918
  %v957 = vpop.f32.mrb[0].mxu0
  %v958 = vadd.f32 0.0, %v957
  %v959 = vpop.f32.mrb[0].mxu0
  %v960 = vpop.f32.mrb[0].mxu0
  %v961 = vadd.f32 0.0, %v960
  %v962 = vpop.f32.mrb[0].mxu0
  %963 = vdwg.mxu0
  %v964 = vmul.f32 %v958, 0.17677669
  %v965 = vmul.f32 %v961, 0.17677669
  %v966 = vsel %vm93, %v964, -inf
  %967 = vmax.xlane.f32.xlu0 %v966
  %v968 = vpop.xlane.xlu0 %967
  %v969 = vsel %vm93, %v965, -inf
  %970 = vmax.xlane.f32.xlu0 %v969
  %v971 = vpop.xlane.xlu0 %970
  %v972 = vsub.f32 %v964, %v968
  %v973 = vsub.f32 %v965, %v971
  %v974 = vmul.f32 %v972, 1.442695
  %v975 = vpow.pop %v974
  %v976 = vmul.f32 %v973, 1.442695
  %v977 = vpow.pop %v976
  %v978 = vsel %vm93, %v975, 0.0
  %979 = vadd.xlane.f32.xlu0 %v978
  %v980 = vpop.xlane.xlu0 %979
  %v981 = vsel %vm93, %v977, 0.0
  %982 = vadd.xlane.f32.xlu0 %v981
  %v983 = vpop.xlane.xlu0 %982
  %v984 = vrcp.pop %v980
  %v985 = vrcp.pop %v983
  %v986 = vmul.f32 %v975, %v984
  %v987 = vmul.f32 %v977, %v985
  %v988 = vadd.f32 %v770, %v986
  %v989 = vadd.f32 %v771, %v987
  %v990 = vpack.c.bf16 %v987, %v986
  %v993 = vunpack.c.l.b16 %v905
  %v994 = vunpack.c.l.b16 %v906
  %v995 = vpack.c.b16 %v994, %v993
  %v998 = vsel %vm93, %v990, 0
  %1000 = vmatprep.subr.bf16.mxu0 0
  %1001 = vmatpush1.bf16.msra.mxu0 %v995
  %1002 = vmatprep.subr.bf16.mxu0 0
  %1003 = vmatpush1.bf16.msra.mxu0 0
  %1004 = vmatprep.subr.bf16.mxu0 0
  %1005 = vmatpush1.bf16.msra.mxu0 0
  %1006 = vmatprep.subr.bf16.mxu0 0
  %1007 = vmatpush1.bf16.msra.mxu0 0
  %1008 = vmatprep.subr.bf16.mxu0 0
  %1009 = vmatpush1.bf16.msra.mxu0 0
  %1010 = vmatprep.subr.bf16.mxu0 0
  %1011 = vmatpush1.bf16.msra.mxu0 0
  %1012 = vmatprep.subr.bf16.mxu0 0
  %1013 = vmatpush1.bf16.msra.mxu0 0
  %1014 = vmatprep.subr.bf16.mxu0 0
  %1015 = vmatpush1.bf16.msra.mxu0 0
  %1016 = vmatprep.subr.bf16.mxu0 0
  %1017 = vmatpush1.bf16.msra.mxu0 0
  %1018 = vmatprep.subr.bf16.mxu0 0
  %1019 = vmatpush1.bf16.msra.mxu0 0
  %1020 = vmatprep.subr.bf16.mxu0 0
  %1021 = vmatpush1.bf16.msra.mxu0 0
  %1022 = vmatprep.subr.bf16.mxu0 0
  %1023 = vmatpush1.bf16.msra.mxu0 0
  %1024 = vmatprep.subr.bf16.mxu0 0
  %1025 = vmatpush1.bf16.msra.mxu0 0
  %1026 = vmatprep.subr.bf16.mxu0 0
  %1027 = vmatpush1.bf16.msra.mxu0 0
  %1028 = vmatprep.subr.bf16.mxu0 0
  %1029 = vmatpush1.bf16.msra.mxu0 0
  %1030 = vmatprep.subr.bf16.mxu0 0
  %1031 = vmatpush1.bf16.msra.mxu0 0
  %1032 = vmatprep.mubr.bf16.mxu0 0
  %1033 = vmatmul.mubr.bf16.gmra.mrb[0].mxu0 %v998
  %v1034 = vpop.f32.mrb[0].mxu0
  %v1035 = vadd.f32 0.0, %v1034
  %v1036 = vpop.f32.mrb[0].mxu0
  %v1037 = vpop.f32.mrb[0].mxu0
  %v1038 = vadd.f32 0.0, %v1037
  %v1039 = vpop.f32.mrb[0].mxu0
  %1040 = vdwg.mxu0
  %v1041 = vpack.c.bf16 %v1038, %v1035
  %v1042 = vld [vmem:[%s4 + $0x80] sm:$0xff]
  %v1043 = vld [vmem:[%s4 + $0x88] sm:$0xff]
  %v1044 = vld [vmem:[%s4 + $0x90] sm:$0xff]
  %v1045 = vld [vmem:[%s4 + $0x98] sm:$0xff]
  %v1050 = vunpack.c.l.b16 %v1042
  %v1051 = vunpack.c.h.b16 %v1042
  %v1052 = vunpack.c.l.b16 %v1043
  %v1053 = vunpack.c.h.b16 %v1043
  %v1054 = vunpack.c.l.b16 %v1044
  %v1055 = vunpack.c.h.b16 %v1044
  %v1056 = vunpack.c.l.b16 %v1045
  %v1057 = vunpack.c.h.b16 %v1045
  %v1058 = vpack.c.b16 %v1052, %v1050
  %v1059 = vpack.c.b16 %v1053, %v1051
  %v1060 = vpack.c.b16 %v1056, %v1054
  %v1061 = vpack.c.b16 %v1057, %v1055
  %v1067 = vsel %vm43, %v1041, 0
  %1069 = vmatprep.subr.bf16.mxu0 %v1059
  %1070 = vmatpush1.bf16.msra.mxu0 %v1058
  %1071 = vmatprep.subr.bf16.mxu0 %v1061
  %1072 = vmatpush1.bf16.msra.mxu0 %v1060
  %1073 = vmatprep.subr.bf16.mxu0 0
  %1074 = vmatpush1.bf16.msra.mxu0 0
  %1075 = vmatprep.subr.bf16.mxu0 0
  %1076 = vmatpush1.bf16.msra.mxu0 0
  %1077 = vmatprep.subr.bf16.mxu0 0
  %1078 = vmatpush1.bf16.msra.mxu0 0
  %1079 = vmatprep.subr.bf16.mxu0 0
  %1080 = vmatpush1.bf16.msra.mxu0 0
  %1081 = vmatprep.subr.bf16.mxu0 0
  %1082 = vmatpush1.bf16.msra.mxu0 0
  %1083 = vmatprep.subr.bf16.mxu0 0
  %1084 = vmatpush1.bf16.msra.mxu0 0
  %1085 = vmatprep.subr.bf16.mxu0 0
  %1086 = vmatpush1.bf16.msra.mxu0 0
  %1087 = vmatprep.subr.bf16.mxu0 0
  %1088 = vmatpush1.bf16.msra.mxu0 0
  %1089 = vmatprep.subr.bf16.mxu0 0
  %1090 = vmatpush1.bf16.msra.mxu0 0
  %1091 = vmatprep.subr.bf16.mxu0 0
  %1092 = vmatpush1.bf16.msra.mxu0 0
  %1093 = vmatprep.subr.bf16.mxu0 0
  %1094 = vmatpush1.bf16.msra.mxu0 0
  %1095 = vmatprep.subr.bf16.mxu0 0
  %1096 = vmatpush1.bf16.msra.mxu0 0
  %1097 = vmatprep.subr.bf16.mxu0 0
  %1098 = vmatpush1.bf16.msra.mxu0 0
  %1099 = vmatprep.subr.bf16.mxu0 0
  %1100 = vmatpush1.bf16.msra.mxu0 0
  %1101 = vmatprep.mubr.bf16.mxu0 0
  %1102 = vmatmul.mubr.bf16.gmra.mrb[0].mxu0 %v1067
  %v1103 = vpop.f32.mrb[0].mxu0
  %v1104 = vadd.f32 0.0, %v1103
  %v1105 = vpop.f32.mrb[0].mxu0
  %v1106 = vadd.f32 0.0, %v1105
  %v1107 = vpop.f32.mrb[0].mxu0
  %v1108 = vadd.f32 0.0, %v1107
  %v1109 = vpop.f32.mrb[0].mxu0
  %v1110 = vadd.f32 0.0, %v1109
  %1111 = vdwg.mxu0
  %v1112 = vadd.f32 %v894, %v1104
  %v1113 = vadd.f32 %v895, %v1106
  %v1114 = vadd.f32 %v896, %v1108
  %v1115 = vadd.f32 %v897, %v1110
  %s1116 = scalar_lea.vmem %s0, 40
  %v1117 = vld [vmem:[%s1116] sm:$0xf]
  %v1118 = vld [vmem:[%s1116 + $0x4] sm:$0xf]
  %s1119 = scalar_lea.vmem %s1, 40
  %v1120 = vld [vmem:[%s1119] sm:$0xf]
  %v1121 = vld [vmem:[%s1119 + $0x4] sm:$0xf]
  %s1122 = scalar_lea.vmem %s2, 40
  %v1123 = vld [vmem:[%s1122] sm:$0xf]
  %v1124 = vld [vmem:[%s1122 + $0x4] sm:$0xf]
  %v1127 = vunpack.c.l.b16 %v1117
  %v1128 = vunpack.c.l.b16 %v1118
  %v1129 = vpack.c.b16 %v1128, %v1127
  %v1132 = vunpack.c.l.b16 %v1120
  %v1133 = vunpack.c.l.b16 %v1121
  %v1134 = vpack.c.b16 %v1133, %v1132
  %v1136 = vsel %vm43, %v1129, 0
  %v1139 = vsel %vm43, %v1134, 0
  %1141 = vmatprep.subr.bf16.mxu0 0
  %1142 = vmatpush1.bf16.xpose.msra.mxu0 %v1139
  %1143 = vmatprep.subr.bf16.mxu0 0
  %1144 = vmatpush1.bf16.xpose.msra.mxu0 0
  %1145 = vmatprep.subr.bf16.mxu0 0
  %1146 = vmatpush1.bf16.xpose.msra.mxu0 0
  %1147 = vmatprep.subr.bf16.mxu0 0
  %1148 = vmatpush1.bf16.xpose.msra.mxu0 0
  %1149 = vmatprep.subr.bf16.mxu0 0
  %1150 = vmatpush1.bf16.xpose.msra.mxu0 0
  %1151 = vmatprep.subr.bf16.mxu0 0
  %1152 = vmatpush1.bf16.xpose.msra.mxu0 0
  %1153 = vmatprep.subr.bf16.mxu0 0
  %1154 = vmatpush1.bf16.xpose.msra.mxu0 0
  %1155 = vmatprep.subr.bf16.mxu0 0
  %1156 = vmatpush1.bf16.xpose.msra.mxu0 0
  %1157 = vmatprep.subr.bf16.mxu0 0
  %1158 = vmatpush1.bf16.xpose.msra.mxu0 0
  %1159 = vmatprep.subr.bf16.mxu0 0
  %1160 = vmatpush1.bf16.xpose.msra.mxu0 0
  %1161 = vmatprep.subr.bf16.mxu0 0
  %1162 = vmatpush1.bf16.xpose.msra.mxu0 0
  %1163 = vmatprep.subr.bf16.mxu0 0
  %1164 = vmatpush1.bf16.xpose.msra.mxu0 0
  %1165 = vmatprep.subr.bf16.mxu0 0
  %1166 = vmatpush1.bf16.xpose.msra.mxu0 0
  %1167 = vmatprep.subr.bf16.mxu0 0
  %1168 = vmatpush1.bf16.xpose.msra.mxu0 0
  %1169 = vmatprep.subr.bf16.mxu0 0
  %1170 = vmatpush1.bf16.xpose.msra.mxu0 0
  %1171 = vmatprep.subr.bf16.mxu0 0
  %1172 = vmatpush1.bf16.xpose.msra.mxu0 0
  %1173 = vmatprep.mubr.bf16.mxu0 0
  %1174 = vmatmul.mubr.bf16.gmra.mrb[0].mxu0 %v1136
  %v1175 = vpop.f32.mrb[0].mxu0
  %v1176 = vadd.f32 0.0, %v1175
  %v1177 = vpop.f32.mrb[0].mxu0
  %v1178 = vpop.f32.mrb[0].mxu0
  %v1179 = vadd.f32 0.0, %v1178
  %v1180 = vpop.f32.mrb[0].mxu0
  %1181 = vdwg.mxu0
  %v1182 = vmul.f32 %v1176, 0.17677669
  %v1183 = vmul.f32 %v1179, 0.17677669
  %v1184 = vsel %vm93, %v1182, -inf
  %1185 = vmax.xlane.f32.xlu0 %v1184
  %v1186 = vpop.xlane.xlu0 %1185
  %v1187 = vsel %vm93, %v1183, -inf
  %1188 = vmax.xlane.f32.xlu0 %v1187
  %v1189 = vpop.xlane.xlu0 %1188
  %v1190 = vsub.f32 %v1182, %v1186
  %v1191 = vsub.f32 %v1183, %v1189
  %v1192 = vmul.f32 %v1190, 1.442695
  %v1193 = vpow.pop %v1192
  %v1194 = vmul.f32 %v1191, 1.442695
  %v1195 = vpow.pop %v1194
  %v1196 = vsel %vm93, %v1193, 0.0
  %1197 = vadd.xlane.f32.xlu0 %v1196
  %v1198 = vpop.xlane.xlu0 %1197
  %v1199 = vsel %vm93, %v1195, 0.0
  %1200 = vadd.xlane.f32.xlu0 %v1199
  %v1201 = vpop.xlane.xlu0 %1200
  %v1202 = vrcp.pop %v1198
  %v1203 = vrcp.pop %v1201
  %v1204 = vmul.f32 %v1193, %v1202
  %v1205 = vmul.f32 %v1195, %v1203
  %v1206 = vadd.f32 %v988, %v1204
  %v1207 = vadd.f32 %v989, %v1205
  %v1208 = vpack.c.bf16 %v1205, %v1204
  %v1211 = vunpack.c.l.b16 %v1123
  %v1212 = vunpack.c.l.b16 %v1124
  %v1213 = vpack.c.b16 %v1212, %v1211
  %v1216 = vsel %vm93, %v1208, 0
  %1218 = vmatprep.subr.bf16.mxu0 0
  %1219 = vmatpush1.bf16.msra.mxu0 %v1213
  %1220 = vmatprep.subr.bf16.mxu0 0
  %1221 = vmatpush1.bf16.msra.mxu0 0
  %1222 = vmatprep.subr.bf16.mxu0 0
  %1223 = vmatpush1.bf16.msra.mxu0 0
  %1224 = vmatprep.subr.bf16.mxu0 0
  %1225 = vmatpush1.bf16.msra.mxu0 0
  %1226 = vmatprep.subr.bf16.mxu0 0
  %1227 = vmatpush1.bf16.msra.mxu0 0
  %1228 = vmatprep.subr.bf16.mxu0 0
  %1229 = vmatpush1.bf16.msra.mxu0 0
  %1230 = vmatprep.subr.bf16.mxu0 0
  %1231 = vmatpush1.bf16.msra.mxu0 0
  %1232 = vmatprep.subr.bf16.mxu0 0
  %1233 = vmatpush1.bf16.msra.mxu0 0
  %1234 = vmatprep.subr.bf16.mxu0 0
  %1235 = vmatpush1.bf16.msra.mxu0 0
  %1236 = vmatprep.subr.bf16.mxu0 0
  %1237 = vmatpush1.bf16.msra.mxu0 0
  %1238 = vmatprep.subr.bf16.mxu0 0
  %1239 = vmatpush1.bf16.msra.mxu0 0
  %1240 = vmatprep.subr.bf16.mxu0 0
  %1241 = vmatpush1.bf16.msra.mxu0 0
  %1242 = vmatprep.subr.bf16.mxu0 0
  %1243 = vmatpush1.bf16.msra.mxu0 0
  %1244 = vmatprep.subr.bf16.mxu0 0
  %1245 = vmatpush1.bf16.msra.mxu0 0
  %1246 = vmatprep.subr.bf16.mxu0 0
  %1247 = vmatpush1.bf16.msra.mxu0 0
  %1248 = vmatprep.subr.bf16.mxu0 0
  %1249 = vmatpush1.bf16.msra.mxu0 0
  %1250 = vmatprep.mubr.bf16.mxu0 0
  %1251 = vmatmul.mubr.bf16.gmra.mrb[0].mxu0 %v1216
  %v1252 = vpop.f32.mrb[0].mxu0
  %v1253 = vadd.f32 0.0, %v1252
  %v1254 = vpop.f32.mrb[0].mxu0
  %v1255 = vpop.f32.mrb[0].mxu0
  %v1256 = vadd.f32 0.0, %v1255
  %v1257 = vpop.f32.mrb[0].mxu0
  %1258 = vdwg.mxu0
  %v1259 = vpack.c.bf16 %v1256, %v1253
  %v1260 = vld [vmem:[%s4 + $0xa0] sm:$0xff]
  %v1261 = vld [vmem:[%s4 + $0xa8] sm:$0xff]
  %v1262 = vld [vmem:[%s4 + $0xb0] sm:$0xff]
  %v1263 = vld [vmem:[%s4 + $0xb8] sm:$0xff]
  %v1268 = vunpack.c.l.b16 %v1260
  %v1269 = vunpack.c.h.b16 %v1260
  %v1270 = vunpack.c.l.b16 %v1261
  %v1271 = vunpack.c.h.b16 %v1261
  %v1272 = vunpack.c.l.b16 %v1262
  %v1273 = vunpack.c.h.b16 %v1262
  %v1274 = vunpack.c.l.b16 %v1263
  %v1275 = vunpack.c.h.b16 %v1263
  %v1276 = vpack.c.b16 %v1270, %v1268
  %v1277 = vpack.c.b16 %v1271, %v1269
  %v1278 = vpack.c.b16 %v1274, %v1272
  %v1279 = vpack.c.b16 %v1275, %v1273
  %v1285 = vsel %vm43, %v1259, 0
  %1287 = vmatprep.subr.bf16.mxu0 %v1277
  %1288 = vmatpush1.bf16.msra.mxu0 %v1276
  %1289 = vmatprep.subr.bf16.mxu0 %v1279
  %1290 = vmatpush1.bf16.msra.mxu0 %v1278
  %1291 = vmatprep.subr.bf16.mxu0 0
  %1292 = vmatpush1.bf16.msra.mxu0 0
  %1293 = vmatprep.subr.bf16.mxu0 0
  %1294 = vmatpush1.bf16.msra.mxu0 0
  %1295 = vmatprep.subr.bf16.mxu0 0
  %1296 = vmatpush1.bf16.msra.mxu0 0
  %1297 = vmatprep.subr.bf16.mxu0 0
  %1298 = vmatpush1.bf16.msra.mxu0 0
  %1299 = vmatprep.subr.bf16.mxu0 0
  %1300 = vmatpush1.bf16.msra.mxu0 0
  %1301 = vmatprep.subr.bf16.mxu0 0
  %1302 = vmatpush1.bf16.msra.mxu0 0
  %1303 = vmatprep.subr.bf16.mxu0 0
  %1304 = vmatpush1.bf16.msra.mxu0 0
  %1305 = vmatprep.subr.bf16.mxu0 0
  %1306 = vmatpush1.bf16.msra.mxu0 0
  %1307 = vmatprep.subr.bf16.mxu0 0
  %1308 = vmatpush1.bf16.msra.mxu0 0
  %1309 = vmatprep.subr.bf16.mxu0 0
  %1310 = vmatpush1.bf16.msra.mxu0 0
  %1311 = vmatprep.subr.bf16.mxu0 0
  %1312 = vmatpush1.bf16.msra.mxu0 0
  %1313 = vmatprep.subr.bf16.mxu0 0
  %1314 = vmatpush1.bf16.msra.mxu0 0
  %1315 = vmatprep.subr.bf16.mxu0 0
  %1316 = vmatpush1.bf16.msra.mxu0 0
  %1317 = vmatprep.subr.bf16.mxu0 0
  %1318 = vmatpush1.bf16.msra.mxu0 0
  %1319 = vmatprep.mubr.bf16.mxu0 0
  %1320 = vmatmul.mubr.bf16.gmra.mrb[0].mxu0 %v1285
  %v1321 = vpop.f32.mrb[0].mxu0
  %v1322 = vadd.f32 0.0, %v1321
  %v1323 = vpop.f32.mrb[0].mxu0
  %v1324 = vadd.f32 0.0, %v1323
  %v1325 = vpop.f32.mrb[0].mxu0
  %v1326 = vadd.f32 0.0, %v1325
  %v1327 = vpop.f32.mrb[0].mxu0
  %v1328 = vadd.f32 0.0, %v1327
  %1329 = vdwg.mxu0
  %v1330 = vadd.f32 %v1112, %v1322
  %v1331 = vadd.f32 %v1113, %v1324
  %v1332 = vadd.f32 %v1114, %v1326
  %v1333 = vadd.f32 %v1115, %v1328
  %s1334 = scalar_lea.vmem %s0, 48
  %v1335 = vld [vmem:[%s1334] sm:$0xf]
  %v1336 = vld [vmem:[%s1334 + $0x4] sm:$0xf]
  %s1337 = scalar_lea.vmem %s1, 48
  %v1338 = vld [vmem:[%s1337] sm:$0xf]
  %v1339 = vld [vmem:[%s1337 + $0x4] sm:$0xf]
  %s1340 = scalar_lea.vmem %s2, 48
  %v1341 = vld [vmem:[%s1340] sm:$0xf]
  %v1342 = vld [vmem:[%s1340 + $0x4] sm:$0xf]
  %v1345 = vunpack.c.l.b16 %v1335
  %v1346 = vunpack.c.l.b16 %v1336
  %v1347 = vpack.c.b16 %v1346, %v1345
  %v1350 = vunpack.c.l.b16 %v1338
  %v1351 = vunpack.c.l.b16 %v1339
  %v1352 = vpack.c.b16 %v1351, %v1350
  %v1354 = vsel %vm43, %v1347, 0
  %v1357 = vsel %vm43, %v1352, 0
  %1359 = vmatprep.subr.bf16.mxu0 0
  %1360 = vmatpush1.bf16.xpose.msra.mxu0 %v1357
  %1361 = vmatprep.subr.bf16.mxu0 0
  %1362 = vmatpush1.bf16.xpose.msra.mxu0 0
  %1363 = vmatprep.subr.bf16.mxu0 0
  %1364 = vmatpush1.bf16.xpose.msra.mxu0 0
  %1365 = vmatprep.subr.bf16.mxu0 0
  %1366 = vmatpush1.bf16.xpose.msra.mxu0 0
  %1367 = vmatprep.subr.bf16.mxu0 0
  %1368 = vmatpush1.bf16.xpose.msra.mxu0 0
  %1369 = vmatprep.subr.bf16.mxu0 0
  %1370 = vmatpush1.bf16.xpose.msra.mxu0 0
  %1371 = vmatprep.subr.bf16.mxu0 0
  %1372 = vmatpush1.bf16.xpose.msra.mxu0 0
  %1373 = vmatprep.subr.bf16.mxu0 0
  %1374 = vmatpush1.bf16.xpose.msra.mxu0 0
  %1375 = vmatprep.subr.bf16.mxu0 0
  %1376 = vmatpush1.bf16.xpose.msra.mxu0 0
  %1377 = vmatprep.subr.bf16.mxu0 0
  %1378 = vmatpush1.bf16.xpose.msra.mxu0 0
  %1379 = vmatprep.subr.bf16.mxu0 0
  %1380 = vmatpush1.bf16.xpose.msra.mxu0 0
  %1381 = vmatprep.subr.bf16.mxu0 0
  %1382 = vmatpush1.bf16.xpose.msra.mxu0 0
  %1383 = vmatprep.subr.bf16.mxu0 0
  %1384 = vmatpush1.bf16.xpose.msra.mxu0 0
  %1385 = vmatprep.subr.bf16.mxu0 0
  %1386 = vmatpush1.bf16.xpose.msra.mxu0 0
  %1387 = vmatprep.subr.bf16.mxu0 0
  %1388 = vmatpush1.bf16.xpose.msra.mxu0 0
  %1389 = vmatprep.subr.bf16.mxu0 0
  %1390 = vmatpush1.bf16.xpose.msra.mxu0 0
  %1391 = vmatprep.mubr.bf16.mxu0 0
  %1392 = vmatmul.mubr.bf16.gmra.mrb[0].mxu0 %v1354
  %v1393 = vpop.f32.mrb[0].mxu0
  %v1394 = vadd.f32 0.0, %v1393
  %v1395 = vpop.f32.mrb[0].mxu0
  %v1396 = vpop.f32.mrb[0].mxu0
  %v1397 = vadd.f32 0.0, %v1396
  %v1398 = vpop.f32.mrb[0].mxu0
  %1399 = vdwg.mxu0
  %v1400 = vmul.f32 %v1394, 0.17677669
  %v1401 = vmul.f32 %v1397, 0.17677669
  %v1402 = vsel %vm93, %v1400, -inf
  %1403 = vmax.xlane.f32.xlu0 %v1402
  %v1404 = vpop.xlane.xlu0 %1403
  %v1405 = vsel %vm93, %v1401, -inf
  %1406 = vmax.xlane.f32.xlu0 %v1405
  %v1407 = vpop.xlane.xlu0 %1406
  %v1408 = vsub.f32 %v1400, %v1404
  %v1409 = vsub.f32 %v1401, %v1407
  %v1410 = vmul.f32 %v1408, 1.442695
  %v1411 = vpow.pop %v1410
  %v1412 = vmul.f32 %v1409, 1.442695
  %v1413 = vpow.pop %v1412
  %v1414 = vsel %vm93, %v1411, 0.0
  %1415 = vadd.xlane.f32.xlu0 %v1414
  %v1416 = vpop.xlane.xlu0 %1415
  %v1417 = vsel %vm93, %v1413, 0.0
  %1418 = vadd.xlane.f32.xlu0 %v1417
  %v1419 = vpop.xlane.xlu0 %1418
  %v1420 = vrcp.pop %v1416
  %v1421 = vrcp.pop %v1419
  %v1422 = vmul.f32 %v1411, %v1420
  %v1423 = vmul.f32 %v1413, %v1421
  %v1424 = vadd.f32 %v1206, %v1422
  %v1425 = vadd.f32 %v1207, %v1423
  %v1426 = vpack.c.bf16 %v1423, %v1422
  %v1429 = vunpack.c.l.b16 %v1341
  %v1430 = vunpack.c.l.b16 %v1342
  %v1431 = vpack.c.b16 %v1430, %v1429
  %v1434 = vsel %vm93, %v1426, 0
  %1436 = vmatprep.subr.bf16.mxu0 0
  %1437 = vmatpush1.bf16.msra.mxu0 %v1431
  %1438 = vmatprep.subr.bf16.mxu0 0
  %1439 = vmatpush1.bf16.msra.mxu0 0
  %1440 = vmatprep.subr.bf16.mxu0 0
  %1441 = vmatpush1.bf16.msra.mxu0 0
  %1442 = vmatprep.subr.bf16.mxu0 0
  %1443 = vmatpush1.bf16.msra.mxu0 0
  %1444 = vmatprep.subr.bf16.mxu0 0
  %1445 = vmatpush1.bf16.msra.mxu0 0
  %1446 = vmatprep.subr.bf16.mxu0 0
  %1447 = vmatpush1.bf16.msra.mxu0 0
  %1448 = vmatprep.subr.bf16.mxu0 0
  %1449 = vmatpush1.bf16.msra.mxu0 0
  %1450 = vmatprep.subr.bf16.mxu0 0
  %1451 = vmatpush1.bf16.msra.mxu0 0
  %1452 = vmatprep.subr.bf16.mxu0 0
  %1453 = vmatpush1.bf16.msra.mxu0 0
  %1454 = vmatprep.subr.bf16.mxu0 0
  %1455 = vmatpush1.bf16.msra.mxu0 0
  %1456 = vmatprep.subr.bf16.mxu0 0
  %1457 = vmatpush1.bf16.msra.mxu0 0
  %1458 = vmatprep.subr.bf16.mxu0 0
  %1459 = vmatpush1.bf16.msra.mxu0 0
  %1460 = vmatprep.subr.bf16.mxu0 0
  %1461 = vmatpush1.bf16.msra.mxu0 0
  %1462 = vmatprep.subr.bf16.mxu0 0
  %1463 = vmatpush1.bf16.msra.mxu0 0
  %1464 = vmatprep.subr.bf16.mxu0 0
  %1465 = vmatpush1.bf16.msra.mxu0 0
  %1466 = vmatprep.subr.bf16.mxu0 0
  %1467 = vmatpush1.bf16.msra.mxu0 0
  %1468 = vmatprep.mubr.bf16.mxu0 0
  %1469 = vmatmul.mubr.bf16.gmra.mrb[0].mxu0 %v1434
  %v1470 = vpop.f32.mrb[0].mxu0
  %v1471 = vadd.f32 0.0, %v1470
  %v1472 = vpop.f32.mrb[0].mxu0
  %v1473 = vpop.f32.mrb[0].mxu0
  %v1474 = vadd.f32 0.0, %v1473
  %v1475 = vpop.f32.mrb[0].mxu0
  %1476 = vdwg.mxu0
  %v1477 = vpack.c.bf16 %v1474, %v1471
  %v1478 = vld [vmem:[%s4 + $0xc0] sm:$0xff]
  %v1479 = vld [vmem:[%s4 + $0xc8] sm:$0xff]
  %v1480 = vld [vmem:[%s4 + $0xd0] sm:$0xff]
  %v1481 = vld [vmem:[%s4 + $0xd8] sm:$0xff]
  %v1486 = vunpack.c.l.b16 %v1478
  %v1487 = vunpack.c.h.b16 %v1478
  %v1488 = vunpack.c.l.b16 %v1479
  %v1489 = vunpack.c.h.b16 %v1479
  %v1490 = vunpack.c.l.b16 %v1480
  %v1491 = vunpack.c.h.b16 %v1480
  %v1492 = vunpack.c.l.b16 %v1481
  %v1493 = vunpack.c.h.b16 %v1481
  %v1494 = vpack.c.b16 %v1488, %v1486
  %v1495 = vpack.c.b16 %v1489, %v1487
  %v1496 = vpack.c.b16 %v1492, %v1490
  %v1497 = vpack.c.b16 %v1493, %v1491
  %v1503 = vsel %vm43, %v1477, 0
  %1505 = vmatprep.subr.bf16.mxu0 %v1495
  %1506 = vmatpush1.bf16.msra.mxu0 %v1494
  %1507 = vmatprep.subr.bf16.mxu0 %v1497
  %1508 = vmatpush1.bf16.msra.mxu0 %v1496
  %1509 = vmatprep.subr.bf16.mxu0 0
  %1510 = vmatpush1.bf16.msra.mxu0 0
  %1511 = vmatprep.subr.bf16.mxu0 0
  %1512 = vmatpush1.bf16.msra.mxu0 0
  %1513 = vmatprep.subr.bf16.mxu0 0
  %1514 = vmatpush1.bf16.msra.mxu0 0
  %1515 = vmatprep.subr.bf16.mxu0 0
  %1516 = vmatpush1.bf16.msra.mxu0 0
  %1517 = vmatprep.subr.bf16.mxu0 0
  %1518 = vmatpush1.bf16.msra.mxu0 0
  %1519 = vmatprep.subr.bf16.mxu0 0
  %1520 = vmatpush1.bf16.msra.mxu0 0
  %1521 = vmatprep.subr.bf16.mxu0 0
  %1522 = vmatpush1.bf16.msra.mxu0 0
  %1523 = vmatprep.subr.bf16.mxu0 0
  %1524 = vmatpush1.bf16.msra.mxu0 0
  %1525 = vmatprep.subr.bf16.mxu0 0
  %1526 = vmatpush1.bf16.msra.mxu0 0
  %1527 = vmatprep.subr.bf16.mxu0 0
  %1528 = vmatpush1.bf16.msra.mxu0 0
  %1529 = vmatprep.subr.bf16.mxu0 0
  %1530 = vmatpush1.bf16.msra.mxu0 0
  %1531 = vmatprep.subr.bf16.mxu0 0
  %1532 = vmatpush1.bf16.msra.mxu0 0
  %1533 = vmatprep.subr.bf16.mxu0 0
  %1534 = vmatpush1.bf16.msra.mxu0 0
  %1535 = vmatprep.subr.bf16.mxu0 0
  %1536 = vmatpush1.bf16.msra.mxu0 0
  %1537 = vmatprep.mubr.bf16.mxu0 0
  %1538 = vmatmul.mubr.bf16.gmra.mrb[0].mxu0 %v1503
  %v1539 = vpop.f32.mrb[0].mxu0
  %v1540 = vadd.f32 0.0, %v1539
  %v1541 = vpop.f32.mrb[0].mxu0
  %v1542 = vadd.f32 0.0, %v1541
  %v1543 = vpop.f32.mrb[0].mxu0
  %v1544 = vadd.f32 0.0, %v1543
  %v1545 = vpop.f32.mrb[0].mxu0
  %v1546 = vadd.f32 0.0, %v1545
  %1547 = vdwg.mxu0
  %v1548 = vadd.f32 %v1330, %v1540
  %v1549 = vadd.f32 %v1331, %v1542
  %v1550 = vadd.f32 %v1332, %v1544
  %v1551 = vadd.f32 %v1333, %v1546
  %s1552 = scalar_lea.vmem %s0, 56
  %v1553 = vld [vmem:[%s1552] sm:$0xf]
  %v1554 = vld [vmem:[%s1552 + $0x4] sm:$0xf]
  %s1555 = scalar_lea.vmem %s1, 56
  %v1556 = vld [vmem:[%s1555] sm:$0xf]
  %v1557 = vld [vmem:[%s1555 + $0x4] sm:$0xf]
  %s1558 = scalar_lea.vmem %s2, 56
  %v1559 = vld [vmem:[%s1558] sm:$0xf]
  %v1560 = vld [vmem:[%s1558 + $0x4] sm:$0xf]
  %v1563 = vunpack.c.l.b16 %v1553
  %v1564 = vunpack.c.l.b16 %v1554
  %v1565 = vpack.c.b16 %v1564, %v1563
  %v1568 = vunpack.c.l.b16 %v1556
  %v1569 = vunpack.c.l.b16 %v1557
  %v1570 = vpack.c.b16 %v1569, %v1568
  %v1572 = vsel %vm43, %v1565, 0
  %v1575 = vsel %vm43, %v1570, 0
  %1577 = vmatprep.subr.bf16.mxu0 0
  %1578 = vmatpush1.bf16.xpose.msra.mxu0 %v1575
  %1579 = vmatprep.subr.bf16.mxu0 0
  %1580 = vmatpush1.bf16.xpose.msra.mxu0 0
  %1581 = vmatprep.subr.bf16.mxu0 0
  %1582 = vmatpush1.bf16.xpose.msra.mxu0 0
  %1583 = vmatprep.subr.bf16.mxu0 0
  %1584 = vmatpush1.bf16.xpose.msra.mxu0 0
  %1585 = vmatprep.subr.bf16.mxu0 0
  %1586 = vmatpush1.bf16.xpose.msra.mxu0 0
  %1587 = vmatprep.subr.bf16.mxu0 0
  %1588 = vmatpush1.bf16.xpose.msra.mxu0 0
  %1589 = vmatprep.subr.bf16.mxu0 0
  %1590 = vmatpush1.bf16.xpose.msra.mxu0 0
  %1591 = vmatprep.subr.bf16.mxu0 0
  %1592 = vmatpush1.bf16.xpose.msra.mxu0 0
  %1593 = vmatprep.subr.bf16.mxu0 0
  %1594 = vmatpush1.bf16.xpose.msra.mxu0 0
  %1595 = vmatprep.subr.bf16.mxu0 0
  %1596 = vmatpush1.bf16.xpose.msra.mxu0 0
  %1597 = vmatprep.subr.bf16.mxu0 0
  %1598 = vmatpush1.bf16.xpose.msra.mxu0 0
  %1599 = vmatprep.subr.bf16.mxu0 0
  %1600 = vmatpush1.bf16.xpose.msra.mxu0 0
  %1601 = vmatprep.subr.bf16.mxu0 0
  %1602 = vmatpush1.bf16.xpose.msra.mxu0 0
  %1603 = vmatprep.subr.bf16.mxu0 0
  %1604 = vmatpush1.bf16.xpose.msra.mxu0 0
  %1605 = vmatprep.subr.bf16.mxu0 0
  %1606 = vmatpush1.bf16.xpose.msra.mxu0 0
  %1607 = vmatprep.subr.bf16.mxu0 0
  %1608 = vmatpush1.bf16.xpose.msra.mxu0 0
  %1609 = vmatprep.mubr.bf16.mxu0 0
  %1610 = vmatmul.mubr.bf16.gmra.mrb[0].mxu0 %v1572
  %v1611 = vpop.f32.mrb[0].mxu0
  %v1612 = vadd.f32 0.0, %v1611
  %v1613 = vpop.f32.mrb[0].mxu0
  %v1614 = vpop.f32.mrb[0].mxu0
  %v1615 = vadd.f32 0.0, %v1614
  %v1616 = vpop.f32.mrb[0].mxu0
  %1617 = vdwg.mxu0
  %v1618 = vmul.f32 %v1612, 0.17677669
  %v1619 = vmul.f32 %v1615, 0.17677669
  %v1620 = vsel %vm93, %v1618, -inf
  %1621 = vmax.xlane.f32.xlu0 %v1620
  %v1622 = vpop.xlane.xlu0 %1621
  %v1623 = vsel %vm93, %v1619, -inf
  %1624 = vmax.xlane.f32.xlu0 %v1623
  %v1625 = vpop.xlane.xlu0 %1624
  %v1626 = vsub.f32 %v1618, %v1622
  %v1627 = vsub.f32 %v1619, %v1625
  %v1628 = vmul.f32 %v1626, 1.442695
  %v1629 = vpow.pop %v1628
  %v1630 = vmul.f32 %v1627, 1.442695
  %v1631 = vpow.pop %v1630
  %v1632 = vsel %vm93, %v1629, 0.0
  %1633 = vadd.xlane.f32.xlu0 %v1632
  %v1634 = vpop.xlane.xlu0 %1633
  %v1635 = vsel %vm93, %v1631, 0.0
  %1636 = vadd.xlane.f32.xlu0 %v1635
  %v1637 = vpop.xlane.xlu0 %1636
  %v1638 = vrcp.pop %v1634
  %v1639 = vrcp.pop %v1637
  %v1640 = vmul.f32 %v1629, %v1638
  %v1641 = vmul.f32 %v1631, %v1639
  %v1642 = vadd.f32 %v1424, %v1640
  %v1643 = vadd.f32 %v1425, %v1641
  %v1644 = vpack.c.bf16 %v1641, %v1640
  %v1647 = vunpack.c.l.b16 %v1559
  %v1648 = vunpack.c.l.b16 %v1560
  %v1649 = vpack.c.b16 %v1648, %v1647
  %v1652 = vsel %vm93, %v1644, 0
  %1654 = vmatprep.subr.bf16.mxu0 0
  %1655 = vmatpush1.bf16.msra.mxu0 %v1649
  %1656 = vmatprep.subr.bf16.mxu0 0
  %1657 = vmatpush1.bf16.msra.mxu0 0
  %1658 = vmatprep.subr.bf16.mxu0 0
  %1659 = vmatpush1.bf16.msra.mxu0 0
  %1660 = vmatprep.subr.bf16.mxu0 0
  %1661 = vmatpush1.bf16.msra.mxu0 0
  %1662 = vmatprep.subr.bf16.mxu0 0
  %1663 = vmatpush1.bf16.msra.mxu0 0
  %1664 = vmatprep.subr.bf16.mxu0 0
  %1665 = vmatpush1.bf16.msra.mxu0 0
  %1666 = vmatprep.subr.bf16.mxu0 0
  %1667 = vmatpush1.bf16.msra.mxu0 0
  %1668 = vmatprep.subr.bf16.mxu0 0
  %1669 = vmatpush1.bf16.msra.mxu0 0
  %1670 = vmatprep.subr.bf16.mxu0 0
  %1671 = vmatpush1.bf16.msra.mxu0 0
  %1672 = vmatprep.subr.bf16.mxu0 0
  %1673 = vmatpush1.bf16.msra.mxu0 0
  %1674 = vmatprep.subr.bf16.mxu0 0
  %1675 = vmatpush1.bf16.msra.mxu0 0
  %1676 = vmatprep.subr.bf16.mxu0 0
  %1677 = vmatpush1.bf16.msra.mxu0 0
  %1678 = vmatprep.subr.bf16.mxu0 0
  %1679 = vmatpush1.bf16.msra.mxu0 0
  %1680 = vmatprep.subr.bf16.mxu0 0
  %1681 = vmatpush1.bf16.msra.mxu0 0
  %1682 = vmatprep.subr.bf16.mxu0 0
  %1683 = vmatpush1.bf16.msra.mxu0 0
  %1684 = vmatprep.subr.bf16.mxu0 0
  %1685 = vmatpush1.bf16.msra.mxu0 0
  %1686 = vmatprep.mubr.bf16.mxu0 0
  %1687 = vmatmul.mubr.bf16.gmra.mrb[0].mxu0 %v1652
  %v1688 = vpop.f32.mrb[0].mxu0
  %v1689 = vadd.f32 0.0, %v1688
  %v1690 = vpop.f32.mrb[0].mxu0
  %v1691 = vpop.f32.mrb[0].mxu0
  %v1692 = vadd.f32 0.0, %v1691
  %v1693 = vpop.f32.mrb[0].mxu0
  %1694 = vdwg.mxu0
  %v1695 = vpack.c.bf16 %v1692, %v1689
  %v1696 = vld [vmem:[%s4 + $0xe0] sm:$0xff]
  %v1697 = vld [vmem:[%s4 + $0xe8] sm:$0xff]
  %v1698 = vld [vmem:[%s4 + $0xf0] sm:$0xff]
  %v1699 = vld [vmem:[%s4 + $0xf8] sm:$0xff]
  %v1704 = vunpack.c.l.b16 %v1696
  %v1705 = vunpack.c.h.b16 %v1696
  %v1706 = vunpack.c.l.b16 %v1697
  %v1707 = vunpack.c.h.b16 %v1697
  %v1708 = vunpack.c.l.b16 %v1698
  %v1709 = vunpack.c.h.b16 %v1698
  %v1710 = vunpack.c.l.b16 %v1699
  %v1711 = vunpack.c.h.b16 %v1699
  %v1712 = vpack.c.b16 %v1706, %v1704
  %v1713 = vpack.c.b16 %v1707, %v1705
  %v1714 = vpack.c.b16 %v1710, %v1708
  %v1715 = vpack.c.b16 %v1711, %v1709
  %v1721 = vsel %vm43, %v1695, 0
  %1723 = vmatprep.subr.bf16.mxu0 %v1713
  %1724 = vmatpush1.bf16.msra.mxu0 %v1712
  %1725 = vmatprep.subr.bf16.mxu0 %v1715
  %1726 = vmatpush1.bf16.msra.mxu0 %v1714
  %1727 = vmatprep.subr.bf16.mxu0 0
  %1728 = vmatpush1.bf16.msra.mxu0 0
  %1729 = vmatprep.subr.bf16.mxu0 0
  %1730 = vmatpush1.bf16.msra.mxu0 0
  %1731 = vmatprep.subr.bf16.mxu0 0
  %1732 = vmatpush1.bf16.msra.mxu0 0
  %1733 = vmatprep.subr.bf16.mxu0 0
  %1734 = vmatpush1.bf16.msra.mxu0 0
  %1735 = vmatprep.subr.bf16.mxu0 0
  %1736 = vmatpush1.bf16.msra.mxu0 0
  %1737 = vmatprep.subr.bf16.mxu0 0
  %1738 = vmatpush1.bf16.msra.mxu0 0
  %1739 = vmatprep.subr.bf16.mxu0 0
  %1740 = vmatpush1.bf16.msra.mxu0 0
  %1741 = vmatprep.subr.bf16.mxu0 0
  %1742 = vmatpush1.bf16.msra.mxu0 0
  %1743 = vmatprep.subr.bf16.mxu0 0
  %1744 = vmatpush1.bf16.msra.mxu0 0
  %1745 = vmatprep.subr.bf16.mxu0 0
  %1746 = vmatpush1.bf16.msra.mxu0 0
  %1747 = vmatprep.subr.bf16.mxu0 0
  %1748 = vmatpush1.bf16.msra.mxu0 0
  %1749 = vmatprep.subr.bf16.mxu0 0
  %1750 = vmatpush1.bf16.msra.mxu0 0
  %1751 = vmatprep.subr.bf16.mxu0 0
  %1752 = vmatpush1.bf16.msra.mxu0 0
  %1753 = vmatprep.subr.bf16.mxu0 0
  %1754 = vmatpush1.bf16.msra.mxu0 0
  %1755 = vmatprep.mubr.bf16.mxu0 0
  %1756 = vmatmul.mubr.bf16.gmra.mrb[0].mxu0 %v1721
  %v1757 = vpop.f32.mrb[0].mxu0
  %v1758 = vadd.f32 0.0, %v1757
  %v1759 = vpop.f32.mrb[0].mxu0
  %v1760 = vadd.f32 0.0, %v1759
  %v1761 = vpop.f32.mrb[0].mxu0
  %v1762 = vadd.f32 0.0, %v1761
  %v1763 = vpop.f32.mrb[0].mxu0
  %v1764 = vadd.f32 0.0, %v1763
  %1765 = vdwg.mxu0
  %v1766 = vadd.f32 %v1548, %v1758
  %v1767 = vadd.f32 %v1549, %v1760
  %v1768 = vadd.f32 %v1550, %v1762
  %v1769 = vadd.f32 %v1551, %v1764
  %1770 = vst [vmem:[%s5] sm:$0xff] %v1766
  %1771 = vst [vmem:[%s5 + $0x8] sm:$0xff] %v1767
  %1772 = vst [vmem:[%s5 + $0x10] sm:$0xff] %v1768
  %1773 = vst [vmem:[%s5 + $0x18] sm:$0xff] %v1769
  %v1774 = vmul.f32 %v1642, 0.125
  %v1775 = vmul.f32 %v1643, 0.125
  %1776 = vst.msk [vmem:[%s6] sm:$0xff] %vm93, %v1774
  %1777 = vst.msk [vmem:[%s6 + $0x8] sm:$0xff] %vm93, %v1775
  // Predicated region
  $region22: #{cam_forward.7} parent=0 // pred_check
    _
  $region23: #{cam_forward.7} parent=0 // pred_check_branch
    %1779 = sbr.rel (0) target = $region25
  $region24: #{cam_forward.7} parent=0 // pred_region
    _
  $region25: #{cam_forward.7} parent=0 // pred_fallthru
    _
  // Predicated region
  $region26: #{cam_forward.7} parent=0 // pred_check
    _
  $region27: #{cam_forward.7} parent=0 // pred_check_branch
    %1781 = sbr.rel (0) target = $region29
  $region28: #{cam_forward.7} parent=0 // pred_region
    _
  $region29: #{cam_forward.7} parent=0 // pred_fallthru
    _
  // Predicated region
  $region30: #{cam_forward.7} parent=0 // pred_check
    _
  $region31: #{cam_forward.7} parent=0 // pred_check_branch
    %1783 = sbr.rel (0) target = $region33
  $region32: #{cam_forward.7} parent=0 // pred_region
    _
  $region33: #{cam_forward.7} parent=0 // pred_fallthru
    _
  // Predicated region
  $region34: #{cam_forward.7} parent=0 // pred_check
    _
  $region35: #{cam_forward.7} parent=0 // pred_check_branch
    %1785 = sbr.rel (0) target = $region37
  $region36: #{cam_forward.7} parent=0 // pred_region
    _
  $region37: #{cam_forward.7} parent=0 // pred_fallthru
    _

</llo_original>
